<compile_context>
chip_gen: v7x
topology: tpu7x:2x2x1
jax: 0.10.0
libtpu: 0.0.40
codegen_flags: <defaults>
</compile_context>

<pallas_src>
import functools

import numpy as np
import jax
import jax.numpy as jnp
from jax.experimental import pallas as pl
from jax.experimental.pallas import tpu as pltpu

FEAT = 32            # feature_size of ResUNET34
LEAKY = 0.01         # MONAI UnetResBlock LeakyReLU slope
RELU = 0.0           # ResNet BasicBlock ReLU
MM_DTYPE = jnp.bfloat16          # MXU input / activation storage dtype


def _round_up(x, m):
    return (x + m - 1) // m * m


def _cdiv(a, b):
    return -(-a // b)


# ----------------------------------------------------------------------------
# Per-generation configuration (review items 6/7)
# ----------------------------------------------------------------------------
def _vmem_capacity():
    try:
        return int(pltpu.get_tpu_info().vmem_capacity_bytes)
    except Exception:
        return 64 * 1024 * 1024        # conservative default, safe everywhere


_VMEM_CAP = _vmem_capacity()
_BIG_VMEM = _VMEM_CAP >= 100 * 1024 * 1024          # v5e / v6e (128 MiB)
VMEM_LIMIT = max(40 * 1024 * 1024,
                 min(int(_VMEM_CAP * 0.72), 100 * 1024 * 1024))
_TILE_CAP = (16 if _BIG_VMEM else 8) * 1024 * 1024  # per-tile byte cap (bf16)
_TM_MAX = 4096 if _BIG_VMEM else 2048               # max row tile
_SPLIT_N = not _BIG_VMEM                            # feed 2nd TC on v7x-like


# ----------------------------------------------------------------------------
# Fused-epilogue matmul kernels  (act((A@B)*scale + shift [+ residual]))
# ----------------------------------------------------------------------------
def _mm_epilogue(acc, s, t, r, slope, out_dtype):
    v = acc * s + t
    if r is not None:
        v = v + r.astype(jnp.float32)
    if slope is not None:
        v = jnp.where(v >= 0, v, v * slope)
    return v.astype(out_dtype)


def _mm_kernel_single(slope, has_res, *refs):
    """Single-K-step variant: no scratch accumulator, no pl.when split."""
    if has_res:
        a_ref, b_ref, s_ref, t_ref, r_ref, o_ref = refs
    else:
        a_ref, b_ref, s_ref, t_ref, o_ref = refs
        r_ref = None
    acc = jnp.dot(a_ref[...], b_ref[...], preferred_element_type=jnp.float32)
    o_ref[...] = _mm_epilogue(acc, s_ref[...], t_ref[...],
                              None if r_ref is None else r_ref[...],
                              slope, o_ref.dtype)


def _mm_kernel_multi(slope, has_res, *refs):
    if has_res:
        a_ref, b_ref, s_ref, t_ref, r_ref, o_ref, acc_ref = refs
    else:
        a_ref, b_ref, s_ref, t_ref, o_ref, acc_ref = refs
        r_ref = None

    @pl.when(pl.program_id(2) == 0)
    def _():
        acc_ref[...] = jnp.zeros_like(acc_ref)

    acc_ref[...] += jnp.dot(a_ref[...], b_ref[...],
                            preferred_element_type=jnp.float32)

    @pl.when(pl.program_id(2) == pl.num_programs(2) - 1)
    def _():
        o_ref[...] = _mm_epilogue(acc_ref[...], s_ref[...], t_ref[...],
                                  None if r_ref is None else r_ref[...],
                                  slope, o_ref.dtype)


def _ln_kernel(eps, x_ref, g_ref, b_ref, o_ref):
    x = x_ref[...].astype(jnp.float32)
    mu = jnp.mean(x, axis=-1, keepdims=True)
    var = jnp.mean(jnp.square(x - mu), axis=-1, keepdims=True)
    y = (x - mu) * jax.lax.rsqrt(var + eps)
    o_ref[...] = (y * g_ref[...] + b_ref[...]).astype(o_ref.dtype)


# ----------------------------------------------------------------------------
# Shape-aware tiled matmul with fused affine / activation / residual epilogue
# ----------------------------------------------------------------------------
def _choose_tiles(M, K, N):
    tm = _round_up(M, 8) if M <= _TM_MAX else _TM_MAX
    nm = _cdiv(M, tm)
    tn = N if N <= 512 else 256
    if _SPLIT_N and nm == 1 and tn == N and N >= 256 and (N // 2) % 128 == 0:
        tn = N // 2                       # second TensorCore gets work (v7x)
    nn = _cdiv(N, tn)
    cap_a = max(128, _TILE_CAP // (2 * tm))
    cap_b = max(128, _TILE_CAP // (2 * tn))
    cap = min(cap_a, cap_b)
    if K <= cap:
        tk, nk = K, 1
    else:
        nk = _cdiv(K, cap)
        tk = _round_up(_cdiv(K, nk), 128)
        nk = _cdiv(K, tk)
    return tm, tn, tk, nm, nn, nk


def matmul_affine(a, b, scale, shift, residual, slope, out_dtype=MM_DTYPE):
    """a:(M,K), b:(K,N) -> (M,N) out_dtype with fused affine/residual/act."""
    M, K = a.shape
    _, N = b.shape
    a = a.astype(MM_DTYPE)
    b = b.astype(MM_DTYPE)
    tm, tn, tk, nm, nn, nk = _choose_tiles(M, K, N)
    Mp, Kp = nm * tm, nk * tk

    if (Mp, Kp) != (M, K):
        a = jnp.pad(a, ((0, Mp - M), (0, Kp - K)))
    if Kp != K:
        b = jnp.pad(b, ((0, Kp - K), (0, 0)))

    has_res = residual is not None
    r = None
    if has_res:
        r = residual.astype(MM_DTYPE)           # bf16 residual DMA (review #9)
        if Mp != M:
            r = jnp.pad(r, ((0, Mp - M), (0, 0)))

    inputs = [a, b, scale.reshape(1, N).astype(jnp.float32),
              shift.reshape(1, N).astype(jnp.float32)]

    if nk == 1:
        in_specs = [pl.BlockSpec((tm, tk), lambda i, j: (i, 0)),
                    pl.BlockSpec((tk, tn), lambda i, j: (0, j)),
                    pl.BlockSpec((1, tn), lambda i, j: (0, j)),
                    pl.BlockSpec((1, tn), lambda i, j: (0, j))]
        if has_res:
            inputs.append(r)
            in_specs.append(pl.BlockSpec((tm, tn), lambda i, j: (i, j)))
        out = pl.pallas_call(
            functools.partial(_mm_kernel_single, slope, has_res),
            out_shape=jax.ShapeDtypeStruct((Mp, N), out_dtype),
            grid_spec=pltpu.PrefetchScalarGridSpec(
                num_scalar_prefetch=0,
                grid=(nm, nn),
                in_specs=in_specs,
                out_specs=pl.BlockSpec((tm, tn), lambda i, j: (i, j))),
            compiler_params=pltpu.CompilerParams(
                dimension_semantics=("parallel", "parallel"),
                vmem_limit_bytes=VMEM_LIMIT),
        )(*inputs)
    else:
        in_specs = [pl.BlockSpec((tm, tk), lambda i, j, k: (i, k)),
                    pl.BlockSpec((tk, tn), lambda i, j, k: (k, j)),
                    pl.BlockSpec((1, tn), lambda i, j, k: (0, j)),
                    pl.BlockSpec((1, tn), lambda i, j, k: (0, j))]
        if has_res:
            inputs.append(r)
            in_specs.append(pl.BlockSpec((tm, tn), lambda i, j, k: (i, j)))
        out = pl.pallas_call(
            functools.partial(_mm_kernel_multi, slope, has_res),
            out_shape=jax.ShapeDtypeStruct((Mp, N), out_dtype),
            grid_spec=pltpu.PrefetchScalarGridSpec(
                num_scalar_prefetch=0,
                grid=(nm, nn, nk),
                in_specs=in_specs,
                out_specs=pl.BlockSpec((tm, tn), lambda i, j, k: (i, j)),
                scratch_shapes=[pltpu.VMEM((tm, tn), jnp.float32)]),
            compiler_params=pltpu.CompilerParams(
                dimension_semantics=("parallel", "parallel", "arbitrary"),
                vmem_limit_bytes=VMEM_LIMIT),
        )(*inputs)
    if Mp != M:
        out = out[:M]
    return out


# ----------------------------------------------------------------------------
# Direct 3x3x3 stride-1 conv kernel (no im2col materialization)
# ----------------------------------------------------------------------------
def _conv3_direct_kernel(bd, H, W, Cin, Cout, slope, has_res, *refs):
    if has_res:
        x_hbm, w_ref, s_ref, t_ref, r_ref, o_ref, xt, sem = refs
    else:
        x_hbm, w_ref, s_ref, t_ref, o_ref, xt, sem = refs
        r_ref = None

    b = pl.program_id(0)
    d0 = pl.program_id(1) * bd

    # One halo'd depth slab per grid step: (bd+2, H+2, W+2, Cin), DMA'd once.
    cp = pltpu.make_async_copy(x_hbm.at[b, pl.ds(d0, bd + 2)], xt, sem.at[0])
    cp.start()
    cp.wait()

    M = bd * H * W
    acc = jnp.zeros((M, Cout), jnp.float32)
    for dz in range(3):
        for dy in range(3):
            rows = xt[dz:dz + bd, dy:dy + H, :, :]          # (bd, H, W+2, Cin)
            a = jnp.concatenate(
                [rows[:, :, 0:W, :],
                 rows[:, :, 1:W + 1, :],
                 rows[:, :, 2:W + 2, :]], axis=-1)          # (bd, H, W, 3*Cin)
            a = a.reshape(M, 3 * Cin)
            g = dz * 3 + dy
            acc = acc + jnp.dot(a, w_ref[g],
                                preferred_element_type=jnp.float32)

    v = acc * s_ref[...] + t_ref[...]
    if r_ref is not None:
        v = v + r_ref[...].reshape(M, Cout).astype(jnp.float32)
    if slope is not None:
        v = jnp.where(v >= 0, v, v * slope)
    o_ref[...] = v.astype(o_ref.dtype).reshape(1, bd, H, W, Cout)


def _direct_vmem_estimate(bd, H, W, cin, cout):
    lane = lambda c: _round_up(c, 128)
    sub = lambda s: _round_up(s, 16)
    m = bd * H * W
    halo = (bd + 2) * (H + 2) * sub(W + 2) * lane(cin) * 2
    lhs = m * lane(3 * cin) * 2 * 2
    acc = m * lane(cout) * 4
    outb = 2 * bd * H * sub(W) * lane(cout) * 2
    resb = outb
    wgt = 2 * 9 * (3 * cin) * lane(cout) * 2
    return halo + lhs + acc + outb + resb + wgt


def _choose_bd(D, H, W, cin, cout):
    budget = int(VMEM_LIMIT * 0.6)
    for bd in range(D, 0, -1):
        if D % bd:
            continue
        if _direct_vmem_estimate(bd, H, W, cin, cout) <= budget:
            return bd
    return None


@functools.partial(jax.jit, static_argnames=("slope", "bd"))
def _conv3x3s1_direct_jit(x, w_mat, scale, shift, residual, *, slope, bd):
    B, D, H, W, Cin = x.shape
    Cout = w_mat.shape[1]
    nd = D // bd

    xp = jnp.pad(x.astype(MM_DTYPE),
                 ((0, 0), (1, 1), (1, 1), (1, 1), (0, 0)))
    # (27*Cin, Cout) rows are (kz, ky, kx, ci) -> reshape to (9, 3*Cin, Cout)
    w9 = w_mat.reshape(9, 3 * Cin, Cout).astype(MM_DTYPE)

    inputs = [xp, w9, scale.reshape(1, Cout), shift.reshape(1, Cout)]
    in_specs = [
        pl.BlockSpec(memory_space=pl.ANY),                   # raw HBM ref
        pl.BlockSpec((9, 3 * Cin, Cout), lambda b, i: (0, 0, 0)),
        pl.BlockSpec((1, Cout), lambda b, i: (0, 0)),
        pl.BlockSpec((1, Cout), lambda b, i: (0, 0)),
    ]
    has_res = residual is not None
    if has_res:
        inputs.append(residual.astype(MM_DTYPE))
        in_specs.append(pl.BlockSpec((1, bd, H, W, Cout),
                                     lambda b, i: (b, i, 0, 0, 0)))

    return pl.pallas_call(
        functools.partial(_conv3_direct_kernel, bd, H, W, Cin, Cout, slope,
                          has_res),
        out_shape=jax.ShapeDtypeStruct((B, D, H, W, Cout), MM_DTYPE),
        grid_spec=pltpu.PrefetchScalarGridSpec(
            num_scalar_prefetch=0,
            grid=(B, nd),
            in_specs=in_specs,
            out_specs=pl.BlockSpec((1, bd, H, W, Cout),
                                   lambda b, i: (b, i, 0, 0, 0)),
            scratch_shapes=[pltpu.VMEM((bd + 2, H + 2, W + 2, Cin), MM_DTYPE),
                            pltpu.SemaphoreType.DMA((1,))]),
        compiler_params=pltpu.CompilerParams(
            dimension_semantics=("parallel", "parallel"),
            vmem_limit_bytes=VMEM_LIMIT),
    )(*inputs)


# ----------------------------------------------------------------------------
# Fallback (im2col + matmul) conv, transposed conv, LayerNorm
# ----------------------------------------------------------------------------
@functools.partial(jax.jit, static_argnames=("ksize", "stride", "padding", "slope"))
def _conv3d_jit(x, w_mat, scale, shift, residual, *, ksize, stride, padding, slope):
    """x: (B,D,H,W,Cin) channels-last.  w_mat: (k^3*Cin, Cout)."""
    B, D, H, W, Cin = x.shape
    k = ksize
    xb = x.astype(MM_DTYPE)                      # cast BEFORE im2col
    if padding > 0:
        xb = jnp.pad(xb, ((0, 0), (padding, padding), (padding, padding),
                          (padding, padding), (0, 0)))
    Dp, Hp, Wp = xb.shape[1:4]
    Do = (Dp - k) // stride + 1
    Ho = (Hp - k) // stride + 1
    Wo = (Wp - k) // stride + 1

    cols = []
    for dz in range(k):
        for dy in range(k):
            for dx in range(k):
                cols.append(xb[:,
                               dz:dz + (Do - 1) * stride + 1:stride,
                               dy:dy + (Ho - 1) * stride + 1:stride,
                               dx:dx + (Wo - 1) * stride + 1:stride, :])
    patches = cols[0] if len(cols) == 1 else jnp.concatenate(cols, axis=-1)
    A = patches.reshape(B * Do * Ho * Wo, k * k * k * Cin)

    N = w_mat.shape[1]
    res2d = None if residual is None else residual.reshape(B * Do * Ho * Wo, N)
    out = matmul_affine(A, w_mat, scale, shift, res2d, slope)
    return out.reshape(B, Do, Ho, Wo, N)


def conv3d(x, w_mat, scale, shift, *, ksize, stride=1, padding=0, slope=None,
           residual=None):
    """Dispatch: direct halo'd Pallas kernel for 3x3x3/s1; im2col otherwise."""
    B, D, H, W, Cin = x.shape
    Cout = w_mat.shape[1]
    if (ksize == 3 and stride == 1 and padding == 1 and Cin >= 8
            and min(D, H, W) >= 8 and W % 8 == 0):
        bd = _choose_bd(D, H, W, Cin, Cout)
        if bd is not None:
            return _conv3x3s1_direct_jit(x, w_mat, scale, shift, residual,
                                         slope=slope, bd=bd)
    return _conv3d_jit(x, w_mat, scale, shift, residual,
                       ksize=ksize, stride=stride, padding=padding, slope=slope)


@jax.jit
def _transp2x_jit(x, w_mat):
    """ConvTranspose3d k=2 s=2.  w_mat: (Cin, 8*Cout)."""
    B, D, H, W, Cin = x.shape
    Cout8 = w_mat.shape[1]
    Cout = Cout8 // 8
    A = x.astype(MM_DTYPE).reshape(-1, Cin)
    ones = jnp.ones((Cout8,), jnp.float32)
    zeros = jnp.zeros((Cout8,), jnp.float32)
    z = matmul_affine(A, w_mat, ones, zeros, None, None)
    z = z.reshape(B, D, H, W, 2, 2, 2, Cout)
    z = z.transpose(0, 1, 4, 2, 5, 3, 6, 7)
    return z.reshape(B, 2 * D, 2 * H, 2 * W, Cout)


@jax.jit
def _layernorm_jit(x, gamma, beta):
    B, D, H, W, C = x.shape
    M = B * D * H * W
    flat = x.reshape(M, C)
    tm = min(_round_up(M, 8), 4096)
    Mp = _round_up(M, tm)
    if Mp != M:
        flat = jnp.pad(flat, ((0, Mp - M), (0, 0)))
    out = pl.pallas_call(
        functools.partial(_ln_kernel, 1e-5),
        out_shape=jax.ShapeDtypeStruct((Mp, C), MM_DTYPE),
        grid_spec=pltpu.PrefetchScalarGridSpec(
            num_scalar_prefetch=0,
            grid=(Mp // tm,),
            in_specs=[pl.BlockSpec((tm, C), lambda i: (i, 0)),
                      pl.BlockSpec((1, C), lambda i: (0, 0)),
                      pl.BlockSpec((1, C), lambda i: (0, 0))],
            out_specs=pl.BlockSpec((tm, C), lambda i: (i, 0))),
        compiler_params=pltpu.CompilerParams(
            dimension_semantics=("arbitrary",),
            vmem_limit_bytes=VMEM_LIMIT),
    )(flat, gamma.reshape(1, C), beta.reshape(1, C))
    if Mp != M:
        out = out[:M]
    return out.reshape(B, D, H, W, C)


# ----------------------------------------------------------------------------
# Blocks (ResNet BasicBlock and MONAI UnetResBlock share one structure)
# ----------------------------------------------------------------------------
def res_block(x, p, slope):
    out = conv3d(x, p['w1'], p['n1'][0], p['n1'][1], ksize=3,
                 stride=p['stride'], padding=1, slope=slope)
    if 'w3' in p:
        residual = conv3d(x, p['w3'], p['n3'][0], p['n3'][1], ksize=1,
                          stride=p['stride'], padding=0, slope=None)
    else:
        residual = x
    # second conv: BN affine + residual add + activation fused in the epilogue
    return conv3d(out, p['w2'], p['n2'][0], p['n2'][1], ksize=3,
                  stride=1, padding=1, slope=slope, residual=residual)


def up_block_fwd(x, skip, p):
    up = _transp2x_jit(x, p['transp'])
    cat = jnp.concatenate([up, skip], axis=-1)      # (transp out, skip) — MONAI order
    return res_block(cat, p['res'], LEAKY)


def resnet_forward(x, rn):
    # PatchEmbed: Conv3d(1, dim, k=2, s=2) + bias, then LayerNorm over channels
    x0 = conv3d(x, rn['patch_w'], rn['patch_s'], rn['patch_b'],
                ksize=2, stride=2, padding=0, slope=None)
    x0 = _layernorm_jit(x0, rn['ln_g'], rn['ln_b'])

    def run_layer(h, layer):
        for blk in layer:
            h = res_block(h, blk, RELU)
        return h

    x1 = run_layer(x0, rn['layer1'])
    x2 = run_layer(x1, rn['layer2'])
    x3 = run_layer(x2, rn['layer3'])
    x4 = run_layer(x3, rn['layer4'])
    return [x0, x1, x2, x3, x4]


# ----------------------------------------------------------------------------
# Trilinear interpolation (align_corners=True) — plain-JAX glue
# ----------------------------------------------------------------------------
def _resize_axis(x, axis, out_size):
    in_size = x.shape[axis]
    if in_size == out_size:
        return x
    if out_size == 1:
        return jnp.take(x, jnp.array([0]), axis=axis)
    if in_size == 1:
        return jnp.repeat(x, out_size, axis=axis)
    pos = jnp.arange(out_size, dtype=jnp.float32) * ((in_size - 1) / (out_size - 1))
    lo = jnp.clip(jnp.floor(pos).astype(jnp.int32), 0, in_size - 2)
    frac = pos - lo.astype(jnp.float32)
    a = jnp.take(x, lo, axis=axis)
    b = jnp.take(x, lo + 1, axis=axis)
    shape = [1] * x.ndim
    shape[axis] = out_size
    frac = frac.reshape(shape)
    return a * (1.0 - frac) + b * frac


def trilinear_resize(x, size):
    x = _resize_axis(x, 1, size[0])
    x = _resize_axis(x, 2, size[1])
    x = _resize_axis(x, 3, size[2])
    return x


# ----------------------------------------------------------------------------
# Deterministic parameter construction (weights pre-laid-out for the kernels)
# ----------------------------------------------------------------------------
class _PG:
    def __init__(self, seed=0):
        self.key = jax.random.PRNGKey(seed)
        self.n = 0

    def conv(self, shape):
        self.n += 1
        fan_in = int(np.prod(shape[1:]))
        w = jax.random.normal(jax.random.fold_in(self.key, self.n), shape,
                              jnp.float32)
        return w * np.float32(np.sqrt(2.0 / fan_in))


def _bn(c, eps=1e-5):
    gamma = jnp.ones((c,), jnp.float32)
    beta = jnp.zeros((c,), jnp.float32)
    mean = jnp.zeros((c,), jnp.float32)
    var = jnp.ones((c,), jnp.float32)
    s = gamma / jnp.sqrt(var + eps)
    return (s, beta - mean * s)


def _conv_mat(pg, cout, cin, k):
    w = pg.conv((cout, cin, k, k, k))            # torch Conv3d layout
    m = jnp.transpose(w, (2, 3, 4, 1, 0)).reshape(k * k * k * cin, cout)
    return m.astype(MM_DTYPE)


def _transp_mat(pg, cin, cout):
    w = pg.conv((cin, cout, 2, 2, 2))            # torch ConvTranspose3d layout
    m = jnp.transpose(w, (0, 2, 3, 4, 1)).reshape(cin, 8 * cout)
    return m.astype(MM_DTYPE)


def build_params():
    pg = _PG(0)
    P = {}

    def make_block(cin, cout, stride):
        blk = {'stride': stride,
               'w1': _conv_mat(pg, cout, cin, 3), 'n1': _bn(cout),
               'w2': _conv_mat(pg, cout, cout, 3), 'n2': _bn(cout)}
        if stride != 1 or cin != cout:
            blk['w3'] = _conv_mat(pg, cout, cin, 1)
            blk['n3'] = _bn(cout)
        return blk

    # --- ResNet-34 (3D) encoder ---
    rn = {'patch_w': _conv_mat(pg, FEAT, 1, 2),
          'patch_s': jnp.ones((FEAT,), jnp.float32),
          'patch_b': jnp.zeros((FEAT,), jnp.float32),
          'ln_g': jnp.ones((FEAT,), jnp.float32),
          'ln_b': jnp.zeros((FEAT,), jnp.float32)}

    def make_layer(cin, planes, blocks, stride):
        layer = [make_block(cin, planes, stride)]
        for _ in range(1, blocks):
            layer.append(make_block(planes, planes, 1))
        return layer

    rn['layer1'] = make_layer(FEAT, 64, 3, 2)
    rn['layer2'] = make_layer(64, 128, 4, 2)
    rn['layer3'] = make_layer(128, 256, 6, 2)
    rn['layer4'] = make_layer(256, 512, 3, 2)
    P['resnet'] = rn

    # --- UNETR blocks actually used in forward ---
    P['encoder1'] = make_block(1, FEAT, 1)

    def up_block(cin, cout):
        return {'transp': _transp_mat(pg, cin, cout),
                'res': make_block(2 * cout, cout, 1)}

    P['decoder5'] = up_block(16 * FEAT, 8 * FEAT)
    P['decoder4'] = up_block(8 * FEAT, 4 * FEAT)
    P['decoder3'] = up_block(4 * FEAT, 2 * FEAT)
    P['decoder2'] = up_block(2 * FEAT, FEAT)
    P['decoder1'] = up_block(FEAT, FEAT)

    P['out_w'] = _conv_mat(pg, 1, FEAT, 1)
    P['out_s'] = jnp.ones((1,), jnp.float32)
    P['out_b'] = jnp.zeros((1,), jnp.float32)
    return P


# ----------------------------------------------------------------------------
# Full forward
# ----------------------------------------------------------------------------
def resunet34_forward(params, x_in, logcube_shape):
    """x_in: (B, 1, D, H, W) NCDHW (PyTorch layout).  Returns NCDHW logits."""
    x = jnp.transpose(x_in, (0, 2, 3, 4, 1))           # channels-last

    hs = resnet_forward(x, params['resnet'])
    enc0 = res_block(x, params['encoder1'], LEAKY)

    dec3 = up_block_fwd(hs[4], hs[3], params['decoder5'])
    dec2 = up_block_fwd(dec3, hs[2], params['decoder4'])
    dec1 = up_block_fwd(dec2, hs[1], params['decoder3'])
    dec0 = up_block_fwd(dec1, hs[0], params['decoder2'])
    out = up_block_fwd(dec0, enc0, params['decoder1'])

    logits = conv3d(out, params['out_w'], params['out_s'], params['out_b'],
                    ksize=1, stride=1, padding=0, slope=None)
    logits = logits.astype(jnp.float32)

    T, Ho, Wo = logcube_shape[2], logcube_shape[3], logcube_shape[4]
    logits = trilinear_resize(logits, (T, Ho, Wo))
    return jnp.transpose(logits, (0, 4, 1, 2, 3))      # NCDHW


# ----------------------------------------------------------------------------
if __name__ == "__main__":
    key = jax.random.PRNGKey(0)
    k1, k2 = jax.random.split(key)
    # smallest spatial size compatible with the 5 stride-2 levels (2^5 = 32)
    x_in = jax.random.normal(k1, (1, 1, 32, 32, 32), jnp.float32)
    logCube = jax.random.normal(k2, (1, 1, 40, 40, 40), jnp.float32)

    params = build_params()
    logits = resunet34_forward(params, x_in, logCube.shape)
    logits = jax.block_until_ready(logits)

    assert logits.shape == (1, 1, 40, 40, 40), logits.shape
    assert bool(jnp.all(jnp.isfinite(logits)))
    print("KERNEL_OK")
</pallas_src>

<mosaic_0001>
module attributes {stable_mosaic.version = 11 : i64} {
  func.func @_mm_kernel_single(%arg0: i32, %arg1: i32, %arg2: memref<2048x8xbf16, #tpu.memory_space<vmem>>, %arg3: memref<8x32xbf16, #tpu.memory_space<vmem>>, %arg4: memref<1x32xf32, #tpu.memory_space<vmem>>, %arg5: memref<1x32xf32, #tpu.memory_space<vmem>>, %arg6: memref<2048x32xbf16, #tpu.memory_space<vmem>>) attributes {dimension_semantics = [#tpu.dimension_semantics<parallel>, #tpu.dimension_semantics<parallel>], iteration_bounds = array<i64: 2, 1>, scalar_prefetch = 0 : i64, scratch_operands = 0 : i64, tpu.core_type = #tpu.core_type<tc>, window_params = [{transform_indices = @transform_0, window_bounds = array<i64: 2048, 8>}, {transform_indices = @transform_1, window_bounds = array<i64: 8, 32>}, {transform_indices = @transform_2, window_bounds = array<i64: 1, 32>}, {transform_indices = @transform_3, window_bounds = array<i64: 1, 32>}, {transform_indices = @transform_4, window_bounds = array<i64: 2048, 32>}]} {
    %c0 = arith.constant 0 : index
    %c0_0 = arith.constant 0 : index
    %0 = vector.load %arg2[%c0, %c0_0] : memref<2048x8xbf16, #tpu.memory_space<vmem>>, vector<2048x8xbf16>
    %c0_1 = arith.constant 0 : index
    %c0_2 = arith.constant 0 : index
    %1 = vector.load %arg3[%c0_1, %c0_2] : memref<8x32xbf16, #tpu.memory_space<vmem>>, vector<8x32xbf16>
    %cst = arith.constant dense<0.000000e+00> : vector<2048x32xf32>
    %2 = tpu.matmul %0, %1, %cst {dimension_numbers = #tpu.dot_dimension_numbers<[1], [0], [0], [1], [0, 0, 1, 1], [], []>} : vector<2048x8xbf16>, vector<8x32xbf16>, vector<2048x32xf32> -> vector<2048x32xf32>
    %c0_3 = arith.constant 0 : index
    %c0_4 = arith.constant 0 : index
    %3 = vector.load %arg4[%c0_3, %c0_4] : memref<1x32xf32, #tpu.memory_space<vmem>>, vector<1x32xf32>
    %c0_5 = arith.constant 0 : index
    %c0_6 = arith.constant 0 : index
    %4 = vector.load %arg5[%c0_5, %c0_6] : memref<1x32xf32, #tpu.memory_space<vmem>>, vector<1x32xf32>
    %5 = vector.broadcast %3 : vector<1x32xf32> to vector<2048x32xf32>
    %6 = arith.mulf %2, %5 : vector<2048x32xf32>
    %7 = vector.broadcast %4 : vector<1x32xf32> to vector<2048x32xf32>
    %8 = arith.addf %6, %7 : vector<2048x32xf32>
    %9 = arith.truncf %8 : vector<2048x32xf32> to vector<2048x32xbf16>
    %c0_7 = arith.constant 0 : index
    %c0_8 = arith.constant 0 : index
    %10 = vector.load %arg6[%c0_7, %c0_8] : memref<2048x32xbf16, #tpu.memory_space<vmem>>, vector<2048x32xbf16>
    tpu.vector_store %arg6[%c0_7, %c0_8], %9 {strides = array<i32>} : memref<2048x32xbf16, #tpu.memory_space<vmem>>, vector<2048x32xbf16>,
    return
  }
  func.func @transform_0(%arg0: i32, %arg1: i32) -> (i32, i32) {
    %c0_i32 = arith.constant 0 : i32
    %c0_i32_0 = arith.constant 0 : i32
    return %arg0, %c0_i32 : i32, i32
  }
  func.func @transform_1(%arg0: i32, %arg1: i32) -> (i32, i32) {
    %c0_i32 = arith.constant 0 : i32
    %c0_i32_0 = arith.constant 0 : i32
    return %c0_i32, %arg1 : i32, i32
  }
  func.func @transform_2(%arg0: i32, %arg1: i32) -> (i32, i32) {
    %c0_i32 = arith.constant 0 : i32
    %c0_i32_0 = arith.constant 0 : i32
    return %c0_i32, %arg1 : i32, i32
  }
  func.func @transform_3(%arg0: i32, %arg1: i32) -> (i32, i32) {
    %c0_i32 = arith.constant 0 : i32
    %c0_i32_0 = arith.constant 0 : i32
    return %c0_i32, %arg1 : i32, i32
  }
  func.func @transform_4(%arg0: i32, %arg1: i32) -> (i32, i32) {
    %c0_i32 = arith.constant 0 : i32
    return %arg0, %arg1 : i32, i32
  }
}

</mosaic_0001>

<llo_original>
// kernel: _conv3d_jit.1
$region0: #{_conv3d_jit.1}
  #allocation0 [shape = 'u32[]', space=smem, size = 0x4, offset = 0x4, fixed_abs, tag = 'smem constant byte address 0x4 - core index']
  #allocation1 [shape = 'u32[144,128]{1,0:T(1,128)}', space=vmem, size = 0x12000, scoped, tag = 'internal scratch']
  %s0 = inlined_call_operand.vmem [shape: bf16[4096,8], index: 0, kind: input, shape index: {}]
  %s1 = inlined_call_operand.vmem [shape: bf16[8,32], index: 1, kind: input, shape index: {}]
  %s2 = inlined_call_operand.vmem [shape: f32[1,32], index: 2, kind: input, shape index: {}]
  %s3 = inlined_call_operand.vmem [shape: f32[1,32], index: 3, kind: input, shape index: {}]
  %s4 = inlined_call_operand.hbm [shape: bf16[4096,32], index: 4, kind: output, shape index: {}]
  %s5 = sld [smem:[#allocation0]]
  $region49: #{_conv3d_jit.1} parent=0
    _
  %s7 = ssub.s32 1, %s5
  %s8 = scalar_select 0, %s7, %s5
  $region1: #{_conv3d_jit.1} parent=0
    #allocation2 [shape = 'u8[1048576]{0}', space=vmem, size = 0x100000, scoped, tag = 'output window, operand 0']
    #allocation3 [shape = 's32[2]{0}', space=sflag, size = 0x8, scoped, tag = 'scoped memory for _conv3d_jit.1']
    %9 = vsyncpa [#allocation3], 0
    %s10 = scalar_lea.sflag [#allocation3], 1
    %11 = vsyncpa %s10, 0
    loop: start=0, step=1, limit=4
    $region2: #{_conv3d_jit.1} parent=1 // loop_pre_header
      _
    $region3: #{_conv3d_jit.1} parent=1 // loop_header
      %s13 = sphi 0, %s17
      %p14 = scmp.ge.s32.totalorder %s13, 4
      %s20 = sphi 0, %s32
      %s21 = sphi 0, %s28
      %s22 = sphi 0, %s20
      %s23 = sphi 0, %s21
      %s24 = sphi 0, %s22
      %s25 = sphi 0, %s23
      %s35 = sphi 0, %s37
      %s38 = sphi 0, %s35
      %s39 = sphi 0, %s38
      %s55 = sphi 0, %s39
      %s61 = sphi 0, %s63
      %s64 = sphi 0, %s61
      %s65 = sphi 0, %s64
      %s81 = sphi 0, %s65
      %s87 = sphi 0, %s89
      %s90 = sphi 0, %s87
      %s91 = sphi 0, %s90
      %s107 = sphi 0, %s91
      %s113 = sphi 0, %s115
      %s116 = sphi 0, %s113
      %s117 = sphi 0, %s116
      %s133 = sphi 0, %s117
      %s141 = sphi 0, %s143
      %s144 = sphi 0, %s141
      %s145 = sphi 0, %s144
      %s161 = sphi 0, %s145
    $region4: #{_conv3d_jit.1} parent=1 // loop_header_branch
      %16 = sbr.rel (%p14) target = $region8
    $region5: #{_conv3d_jit.1} parent=1 // loop_body
      %s18 = ssub.s32 %s13, 1
      %s19 = ssub.s32 %s13, 2
      %s26 = sadd.s32 1, %s21
      %p27 = scmp.ge.s32.totalorder %s26, 1
      %s28 = scalar_select %p27, 0, %s26
      %s29 = sadd.s32 1, %s20
      %s30 = scalar_select %p27, %s29, %s20
      %p31 = scmp.ge.s32.totalorder %s30, 2
      %s32 = scalar_select %p31, 0, %s30
      %s33 = ssub.s32 %s20, %s32
      %p34 = scmp.eq.s32.totalorder %s33, 0
      %s36 = sadd.s32 %s35, 1
      %s37 = scalar_select %p34, %s35, %s36
      %p40 = pneg %p34
      %p41 = scmp.eq.s32.totalorder %s13, 1
      %p42 = por %p40, %p41
      %p43 = scmp.ne.s32.totalorder %s35, %s38
      %p44 = scmp.eq.s32.totalorder %s13, 0
      %p45 = por %p43, %p44
      %p46 = scmp.ne.s32.totalorder %s35, %s38
      %p47 = scmp.eq.s32.totalorder %s18, 1
      %p48 = por %p46, %p47
      %p49 = scmp.ne.s32.totalorder %s38, %s39
      %p50 = scmp.eq.s32.totalorder %s18, 0
      %p51 = por %p49, %p50
      %p52 = scmp.ne.s32.totalorder %s38, %s39
      %p53 = scmp.eq.s32.totalorder %s19, 1
      %p54 = por %p52, %p53
      %p56 = scmp.ne.s32.totalorder %s39, %s55
      %p57 = scmp.eq.s32.totalorder %s19, 0
      %p58 = por %p56, %p57
      %s59 = ssub.s32 %s21, %s28
      %p60 = scmp.eq.s32.totalorder %s59, 0
      %s62 = sadd.s32 %s61, 1
      %s63 = scalar_select %p60, %s61, %s62
      %p66 = pneg %p60
      %p67 = scmp.eq.s32.totalorder %s13, 1
      %p68 = por %p66, %p67
      %p69 = scmp.ne.s32.totalorder %s61, %s64
      %p70 = scmp.eq.s32.totalorder %s13, 0
      %p71 = por %p69, %p70
      %p72 = scmp.ne.s32.totalorder %s61, %s64
      %p73 = scmp.eq.s32.totalorder %s18, 1
      %p74 = por %p72, %p73
      %p75 = scmp.ne.s32.totalorder %s64, %s65
      %p76 = scmp.eq.s32.totalorder %s18, 0
      %p77 = por %p75, %p76
      %p78 = scmp.ne.s32.totalorder %s64, %s65
      %p79 = scmp.eq.s32.totalorder %s19, 1
      %p80 = por %p78, %p79
      %p82 = scmp.ne.s32.totalorder %s65, %s81
      %p83 = scmp.eq.s32.totalorder %s19, 0
      %p84 = por %p82, %p83
      %s85 = ssub.s32 %s21, %s28
      %p86 = scmp.eq.s32.totalorder %s85, 0
      %s88 = sadd.s32 %s87, 1
      %s89 = scalar_select %p86, %s87, %s88
      %p92 = pneg %p86
      %p93 = scmp.eq.s32.totalorder %s13, 1
      %p94 = por %p92, %p93
      %p95 = scmp.ne.s32.totalorder %s87, %s90
      %p96 = scmp.eq.s32.totalorder %s13, 0
      %p97 = por %p95, %p96
      %p98 = scmp.ne.s32.totalorder %s87, %s90
      %p99 = scmp.eq.s32.totalorder %s18, 1
      %p100 = por %p98, %p99
      %p101 = scmp.ne.s32.totalorder %s90, %s91
      %p102 = scmp.eq.s32.totalorder %s18, 0
      %p103 = por %p101, %p102
      %p104 = scmp.ne.s32.totalorder %s90, %s91
      %p105 = scmp.eq.s32.totalorder %s19, 1
      %p106 = por %p104, %p105
      %p108 = scmp.ne.s32.totalorder %s91, %s107
      %p109 = scmp.eq.s32.totalorder %s19, 0
      %p110 = por %p108, %p109
      %s111 = ssub.s32 %s21, %s28
      %p112 = scmp.eq.s32.totalorder %s111, 0
      %s114 = sadd.s32 %s113, 1
      %s115 = scalar_select %p112, %s113, %s114
      %p118 = pneg %p112
      %p119 = scmp.eq.s32.totalorder %s13, 1
      %p120 = por %p118, %p119
      %p121 = scmp.ne.s32.totalorder %s113, %s116
      %p122 = scmp.eq.s32.totalorder %s13, 0
      %p123 = por %p121, %p122
      %p124 = scmp.ne.s32.totalorder %s113, %s116
      %p125 = scmp.eq.s32.totalorder %s18, 1
      %p126 = por %p124, %p125
      %p127 = scmp.ne.s32.totalorder %s116, %s117
      %p128 = scmp.eq.s32.totalorder %s18, 0
      %p129 = por %p127, %p128
      %p130 = scmp.ne.s32.totalorder %s116, %s117
      %p131 = scmp.eq.s32.totalorder %s19, 1
      %p132 = por %p130, %p131
      %p134 = scmp.ne.s32.totalorder %s117, %s133
      %p135 = scmp.eq.s32.totalorder %s19, 0
      %p136 = por %p134, %p135
      %s137 = ssub.s32 %s20, %s32
      %s138 = ssub.s32 %s21, %s28
      %s139 = sor.u32 %s137, %s138
      %p140 = scmp.eq.s32.totalorder %s139, 0
      %s142 = sadd.s32 %s141, 1
      %s143 = scalar_select %p140, %s141, %s142
      %p146 = pneg %p140
      %p147 = scmp.eq.s32.totalorder %s13, 1
      %p148 = por %p146, %p147
      %p149 = scmp.ne.s32.totalorder %s141, %s144
      %p150 = scmp.eq.s32.totalorder %s13, 0
      %p151 = por %p149, %p150
      %p152 = scmp.ne.s32.totalorder %s141, %s144
      %p153 = scmp.eq.s32.totalorder %s18, 1
      %p154 = por %p152, %p153
      %p155 = scmp.ne.s32.totalorder %s144, %s145
      %p156 = scmp.eq.s32.totalorder %s18, 0
      %p157 = por %p155, %p156
      %p158 = scmp.ne.s32.totalorder %s144, %s145
      %p159 = scmp.eq.s32.totalorder %s19, 1
      %p160 = por %p158, %p159
      %p162 = scmp.ne.s32.totalorder %s145, %s161
      %p163 = scmp.eq.s32.totalorder %s19, 0
      %p164 = por %p162, %p163
      %p165 = scmp.le.s32.totalorder 1, %s13
      %p166 = scmp.lt.s32.totalorder %s13, 3
      %p167 = pnand %p165, %p166
      %p168 = pneg %p167
      // Predicated region
      $region9: #{_conv3d_jit.1} parent=5 // pred_check
        _
      $region10: #{_conv3d_jit.1} parent=5 // pred_check_branch
        %170 = sbr.rel (%p167) target = $region12
      $region11: #{_conv3d_jit.1} parent=5 // pred_region
        %s171 = ssub.s32 %s13, 1
        // Predicated region
        $region13: #{_conv3d_jit.1} parent=11 // pred_check
          %p172 = pneg %p77
        $region14: #{_conv3d_jit.1} parent=11 // pred_check_branch
          %174 = sbr.rel (%p172) target = $region16
        $region15: #{_conv3d_jit.1} parent=11 // pred_region
          %p175 = scmp.lt.s32.totalorder %s23, 0
          %s176 = scalar_select %p175, %s23, 0
          %s177 = smul.addr %s176, 4
          %s178 = scalar_lea.vmem %s1, %s177
        $region16: #{_conv3d_jit.1} parent=11 // pred_fallthru
          _
        // Predicated region
        $region17: #{_conv3d_jit.1} parent=11 // pred_check
          %p179 = pneg %p103
        $region18: #{_conv3d_jit.1} parent=11 // pred_check_branch
          %181 = sbr.rel (%p179) target = $region20
        $region19: #{_conv3d_jit.1} parent=11 // pred_region
          %p182 = scmp.lt.s32.totalorder %s23, 0
          %s183 = scalar_select %p182, %s23, 0
          %s184 = scalar_lea.vmem %s2, %s183
        $region20: #{_conv3d_jit.1} parent=11 // pred_fallthru
          _
        // Predicated region
        $region21: #{_conv3d_jit.1} parent=11 // pred_check
          %p185 = pneg %p129
        $region22: #{_conv3d_jit.1} parent=11 // pred_check_branch
          %187 = sbr.rel (%p185) target = $region24
        $region23: #{_conv3d_jit.1} parent=11 // pred_region
          %p188 = scmp.lt.s32.totalorder %s23, 0
          %s189 = scalar_select %p188, %s23, 0
          %s190 = scalar_lea.vmem %s3, %s189
        $region24: #{_conv3d_jit.1} parent=11 // pred_fallthru
          _
      $region12: #{_conv3d_jit.1} parent=5 // pred_fallthru
        _
      %p191 = scmp.lt.s32.totalorder %s13, 2
      // Predicated region
      $region25: #{_conv3d_jit.1} parent=5 // pred_check
        %p192 = pneg %p191
      $region26: #{_conv3d_jit.1} parent=5 // pred_check_branch
        %194 = sbr.rel (%p192) target = $region28
      $region27: #{_conv3d_jit.1} parent=5 // pred_region
        // Predicated region
        $region29: #{_conv3d_jit.1} parent=27 // pred_check
          %p195 = pneg %p45
        $region30: #{_conv3d_jit.1} parent=27 // pred_check_branch
          %197 = sbr.rel (%p195) target = $region32
        $region31: #{_conv3d_jit.1} parent=27 // pred_region
          %s198 = smul.u32 256, %s20
          %p199 = scmp.lt.s32.totalorder %s198, 511
          %s200 = scalar_select %p199, %s198, 511
          %s201 = smul.addr %s200, 4
          %s202 = scalar_lea.vmem %s0, %s201
          %s203 = smul.u32 256, %s20
        $region32: #{_conv3d_jit.1} parent=27 // pred_fallthru
          _
      $region28: #{_conv3d_jit.1} parent=5 // pred_fallthru
        _
      %p204 = scmp.le.s32.totalorder 1, %s13
      %p205 = scmp.lt.s32.totalorder %s13, 3
      %p206 = pnand %p204, %p205
      %p207 = pneg %p206
      // Predicated region
      $region33: #{_conv3d_jit.1} parent=5 // pred_check
        _
      $region34: #{_conv3d_jit.1} parent=5 // pred_check_branch
        %209 = sbr.rel (%p206) target = $region36
      $region35: #{_conv3d_jit.1} parent=5 // pred_region
        %s210 = ssub.s32 %s13, 1
        %s211 = smul.u32 256, %s22
        %p212 = scmp.lt.s32.totalorder %s211, 511
        %s213 = scalar_select %p212, %s211, 511
        %s214 = smul.addr %s213, 4
        %s215 = scalar_lea.vmem %s0, %s214
        %p216 = pneg %p51
        %p217 = pneg %p48
        %p218 = scmp.lt.s32.totalorder %s23, 0
        %s219 = scalar_select %p218, %s23, 0
        %s220 = smul.addr %s219, 4
        %s221 = scalar_lea.vmem %s1, %s220
        %p222 = pneg %p77
        %p223 = pneg %p74
        %p224 = scmp.lt.s32.totalorder %s23, 0
        %s225 = scalar_select %p224, %s23, 0
        %s226 = scalar_lea.vmem %s2, %s225
        %p227 = pneg %p103
        %p228 = pneg %p100
        %p229 = scmp.lt.s32.totalorder %s23, 0
        %s230 = scalar_select %p229, %s23, 0
        %s231 = scalar_lea.vmem %s3, %s230
        %p232 = pneg %p129
        %p233 = pneg %p126
        %p234 = pneg %p157
        %p235 = pneg %p154
        %s236 = sand.u32 %s144, 1
        %s237 = scalar_lea.sflag [#allocation3], %s236
        %s238 = sand.u32 %s144, 1
        %s239 = smul.addr %s238, 1024
        %s240 = scalar_lea.vmem [#allocation2], %s239
        %s241 = smul.u32 256, %s22
        %p242 = scmp.lt.s32.totalorder %s241, 511
        %s243 = scalar_select %p242, %s241, 511
        %s244 = smul.addr %s243, 4
        %s245 = scalar_lea.vmem %s0, %s244
        %s246 = smul.u32 256, %s22
        %p247 = scmp.lt.s32.totalorder %s23, 0
        %s248 = scalar_select %p247, %s23, 0
        %s249 = smul.addr %s248, 4
        %s250 = scalar_lea.vmem %s1, %s249
        %p251 = scmp.lt.s32.totalorder %s23, 0
        %s252 = scalar_select %p251, %s23, 0
        %s253 = scalar_lea.vmem %s2, %s252
        %p254 = scmp.lt.s32.totalorder %s23, 0
        %s255 = scalar_select %p254, %s23, 0
        %s256 = scalar_lea.vmem %s3, %s255
        %s257 = smul.u32 256, %s22
        %v259 = vld [vmem:[%s245] sm:$0xf]
        %v260 = vld [vmem:[%s245 + $0x4] sm:$0xf]
        %v261 = vld [vmem:[%s245 + $0x8] sm:$0xf]
        %v262 = vld [vmem:[%s245 + $0xc] sm:$0xf]
        %v263 = vld [vmem:[%s245 + $0x10] sm:$0xf]
        %v264 = vld [vmem:[%s245 + $0x14] sm:$0xf]
        %v265 = vld [vmem:[%s245 + $0x18] sm:$0xf]
        %v266 = vld [vmem:[%s245 + $0x1c] sm:$0xf]
        %v267 = vld [vmem:[%s245 + $0x20] sm:$0xf]
        %v268 = vld [vmem:[%s245 + $0x24] sm:$0xf]
        %v269 = vld [vmem:[%s245 + $0x28] sm:$0xf]
        %v270 = vld [vmem:[%s245 + $0x2c] sm:$0xf]
        %v271 = vld [vmem:[%s245 + $0x30] sm:$0xf]
        %v272 = vld [vmem:[%s245 + $0x34] sm:$0xf]
        %v273 = vld [vmem:[%s245 + $0x38] sm:$0xf]
        %v274 = vld [vmem:[%s245 + $0x3c] sm:$0xf]
        %v275 = vld [vmem:[%s245 + $0x40] sm:$0xf]
        %v276 = vld [vmem:[%s245 + $0x44] sm:$0xf]
        %v277 = vld [vmem:[%s245 + $0x48] sm:$0xf]
        %v278 = vld [vmem:[%s245 + $0x4c] sm:$0xf]
        %v279 = vld [vmem:[%s245 + $0x50] sm:$0xf]
        %v280 = vld [vmem:[%s245 + $0x54] sm:$0xf]
        %v281 = vld [vmem:[%s245 + $0x58] sm:$0xf]
        %v282 = vld [vmem:[%s245 + $0x5c] sm:$0xf]
        %v283 = vld [vmem:[%s245 + $0x60] sm:$0xf]
        %v284 = vld [vmem:[%s245 + $0x64] sm:$0xf]
        %v285 = vld [vmem:[%s245 + $0x68] sm:$0xf]
        %v286 = vld [vmem:[%s245 + $0x6c] sm:$0xf]
        %v287 = vld [vmem:[%s245 + $0x70] sm:$0xf]
        %v288 = vld [vmem:[%s245 + $0x74] sm:$0xf]
        %v289 = vld [vmem:[%s245 + $0x78] sm:$0xf]
        %v290 = vld [vmem:[%s245 + $0x7c] sm:$0xf]
        %v291 = vld [vmem:[%s245 + $0x80] sm:$0xf]
        %v292 = vld [vmem:[%s245 + $0x84] sm:$0xf]
        %v293 = vld [vmem:[%s245 + $0x88] sm:$0xf]
        %v294 = vld [vmem:[%s245 + $0x8c] sm:$0xf]
        %v295 = vld [vmem:[%s245 + $0x90] sm:$0xf]
        %v296 = vld [vmem:[%s245 + $0x94] sm:$0xf]
        %v297 = vld [vmem:[%s245 + $0x98] sm:$0xf]
        %v298 = vld [vmem:[%s245 + $0x9c] sm:$0xf]
        %v299 = vld [vmem:[%s245 + $0xa0] sm:$0xf]
        %v300 = vld [vmem:[%s245 + $0xa4] sm:$0xf]
        %v301 = vld [vmem:[%s245 + $0xa8] sm:$0xf]
        %v302 = vld [vmem:[%s245 + $0xac] sm:$0xf]
        %v303 = vld [vmem:[%s245 + $0xb0] sm:$0xf]
        %v304 = vld [vmem:[%s245 + $0xb4] sm:$0xf]
        %v305 = vld [vmem:[%s245 + $0xb8] sm:$0xf]
        %v306 = vld [vmem:[%s245 + $0xbc] sm:$0xf]
        %v307 = vld [vmem:[%s245 + $0xc0] sm:$0xf]
        %v308 = vld [vmem:[%s245 + $0xc4] sm:$0xf]
        %v309 = vld [vmem:[%s245 + $0xc8] sm:$0xf]
        %v310 = vld [vmem:[%s245 + $0xcc] sm:$0xf]
        %v311 = vld [vmem:[%s245 + $0xd0] sm:$0xf]
        %v312 = vld [vmem:[%s245 + $0xd4] sm:$0xf]
        %v313 = vld [vmem:[%s245 + $0xd8] sm:$0xf]
        %v314 = vld [vmem:[%s245 + $0xdc] sm:$0xf]
        %v315 = vld [vmem:[%s245 + $0xe0] sm:$0xf]
        %v316 = vld [vmem:[%s245 + $0xe4] sm:$0xf]
        %v317 = vld [vmem:[%s245 + $0xe8] sm:$0xf]
        %v318 = vld [vmem:[%s245 + $0xec] sm:$0xf]
        %v319 = vld [vmem:[%s245 + $0xf0] sm:$0xf]
        %v320 = vld [vmem:[%s245 + $0xf4] sm:$0xf]
        %v321 = vld [vmem:[%s245 + $0xf8] sm:$0xf]
        %v322 = vld [vmem:[%s245 + $0xfc] sm:$0xf]
        %v323 = vld [vmem:[%s245 + $0x100] sm:$0xf]
        %v324 = vld [vmem:[%s245 + $0x104] sm:$0xf]
        %v325 = vld [vmem:[%s245 + $0x108] sm:$0xf]
        %v326 = vld [vmem:[%s245 + $0x10c] sm:$0xf]
        %v327 = vld [vmem:[%s245 + $0x110] sm:$0xf]
        %v328 = vld [vmem:[%s245 + $0x114] sm:$0xf]
        %v329 = vld [vmem:[%s245 + $0x118] sm:$0xf]
        %v330 = vld [vmem:[%s245 + $0x11c] sm:$0xf]
        %v331 = vld [vmem:[%s245 + $0x120] sm:$0xf]
        %v332 = vld [vmem:[%s245 + $0x124] sm:$0xf]
        %v333 = vld [vmem:[%s245 + $0x128] sm:$0xf]
        %v334 = vld [vmem:[%s245 + $0x12c] sm:$0xf]
        %v335 = vld [vmem:[%s245 + $0x130] sm:$0xf]
        %v336 = vld [vmem:[%s245 + $0x134] sm:$0xf]
        %v337 = vld [vmem:[%s245 + $0x138] sm:$0xf]
        %v338 = vld [vmem:[%s245 + $0x13c] sm:$0xf]
        %v339 = vld [vmem:[%s245 + $0x140] sm:$0xf]
        %v340 = vld [vmem:[%s245 + $0x144] sm:$0xf]
        %v341 = vld [vmem:[%s245 + $0x148] sm:$0xf]
        %v342 = vld [vmem:[%s245 + $0x14c] sm:$0xf]
        %v343 = vld [vmem:[%s245 + $0x150] sm:$0xf]
        %v344 = vld [vmem:[%s245 + $0x154] sm:$0xf]
        %v345 = vld [vmem:[%s245 + $0x158] sm:$0xf]
        %v346 = vld [vmem:[%s245 + $0x15c] sm:$0xf]
        %v347 = vld [vmem:[%s245 + $0x160] sm:$0xf]
        %v348 = vld [vmem:[%s245 + $0x164] sm:$0xf]
        %v349 = vld [vmem:[%s245 + $0x168] sm:$0xf]
        %v350 = vld [vmem:[%s245 + $0x16c] sm:$0xf]
        %v351 = vld [vmem:[%s245 + $0x170] sm:$0xf]
        %v352 = vld [vmem:[%s245 + $0x174] sm:$0xf]
        %v353 = vld [vmem:[%s245 + $0x178] sm:$0xf]
        %v354 = vld [vmem:[%s245 + $0x17c] sm:$0xf]
        %v355 = vld [vmem:[%s245 + $0x180] sm:$0xf]
        %v356 = vld [vmem:[%s245 + $0x184] sm:$0xf]
        %v357 = vld [vmem:[%s245 + $0x188] sm:$0xf]
        %v358 = vld [vmem:[%s245 + $0x18c] sm:$0xf]
        %v359 = vld [vmem:[%s245 + $0x190] sm:$0xf]
        %v360 = vld [vmem:[%s245 + $0x194] sm:$0xf]
        %v361 = vld [vmem:[%s245 + $0x198] sm:$0xf]
        %v362 = vld [vmem:[%s245 + $0x19c] sm:$0xf]
        %v363 = vld [vmem:[%s245 + $0x1a0] sm:$0xf]
        %v364 = vld [vmem:[%s245 + $0x1a4] sm:$0xf]
        %v365 = vld [vmem:[%s245 + $0x1a8] sm:$0xf]
        %v366 = vld [vmem:[%s245 + $0x1ac] sm:$0xf]
        %v367 = vld [vmem:[%s245 + $0x1b0] sm:$0xf]
        %v368 = vld [vmem:[%s245 + $0x1b4] sm:$0xf]
        %v369 = vld [vmem:[%s245 + $0x1b8] sm:$0xf]
        %v370 = vld [vmem:[%s245 + $0x1bc] sm:$0xf]
        %v371 = vld [vmem:[%s245 + $0x1c0] sm:$0xf]
        %v372 = vld [vmem:[%s245 + $0x1c4] sm:$0xf]
        %v373 = vld [vmem:[%s245 + $0x1c8] sm:$0xf]
        %v374 = vld [vmem:[%s245 + $0x1cc] sm:$0xf]
        %v375 = vld [vmem:[%s245 + $0x1d0] sm:$0xf]
        %v376 = vld [vmem:[%s245 + $0x1d4] sm:$0xf]
        %v377 = vld [vmem:[%s245 + $0x1d8] sm:$0xf]
        %v378 = vld [vmem:[%s245 + $0x1dc] sm:$0xf]
        %v379 = vld [vmem:[%s245 + $0x1e0] sm:$0xf]
        %v380 = vld [vmem:[%s245 + $0x1e4] sm:$0xf]
        %v381 = vld [vmem:[%s245 + $0x1e8] sm:$0xf]
        %v382 = vld [vmem:[%s245 + $0x1ec] sm:$0xf]
        %v383 = vld [vmem:[%s245 + $0x1f0] sm:$0xf]
        %v384 = vld [vmem:[%s245 + $0x1f4] sm:$0xf]
        %v385 = vld [vmem:[%s245 + $0x1f8] sm:$0xf]
        %v386 = vld [vmem:[%s245 + $0x1fc] sm:$0xf]
        %v387 = vld [vmem:[%s245 + $0x200] sm:$0xf]
        %v388 = vld [vmem:[%s245 + $0x204] sm:$0xf]
        %v389 = vld [vmem:[%s245 + $0x208] sm:$0xf]
        %v390 = vld [vmem:[%s245 + $0x20c] sm:$0xf]
        %v391 = vld [vmem:[%s245 + $0x210] sm:$0xf]
        %v392 = vld [vmem:[%s245 + $0x214] sm:$0xf]
        %v393 = vld [vmem:[%s245 + $0x218] sm:$0xf]
        %v394 = vld [vmem:[%s245 + $0x21c] sm:$0xf]
        %v395 = vld [vmem:[%s245 + $0x220] sm:$0xf]
        %v396 = vld [vmem:[%s245 + $0x224] sm:$0xf]
        %v397 = vld [vmem:[%s245 + $0x228] sm:$0xf]
        %v398 = vld [vmem:[%s245 + $0x22c] sm:$0xf]
        %v399 = vld [vmem:[%s245 + $0x230] sm:$0xf]
        %v400 = vld [vmem:[%s245 + $0x234] sm:$0xf]
        %v401 = vld [vmem:[%s245 + $0x238] sm:$0xf]
        %v402 = vld [vmem:[%s245 + $0x23c] sm:$0xf]
        %v403 = vld [vmem:[%s245 + $0x240] sm:$0xf]
        %v404 = vld [vmem:[%s245 + $0x244] sm:$0xf]
        %v405 = vld [vmem:[%s245 + $0x248] sm:$0xf]
        %v406 = vld [vmem:[%s245 + $0x24c] sm:$0xf]
        %v407 = vld [vmem:[%s245 + $0x250] sm:$0xf]
        %v408 = vld [vmem:[%s245 + $0x254] sm:$0xf]
        %v409 = vld [vmem:[%s245 + $0x258] sm:$0xf]
        %v410 = vld [vmem:[%s245 + $0x25c] sm:$0xf]
        %v411 = vld [vmem:[%s245 + $0x260] sm:$0xf]
        %v412 = vld [vmem:[%s245 + $0x264] sm:$0xf]
        %v413 = vld [vmem:[%s245 + $0x268] sm:$0xf]
        %v414 = vld [vmem:[%s245 + $0x26c] sm:$0xf]
        %v415 = vld [vmem:[%s245 + $0x270] sm:$0xf]
        %v416 = vld [vmem:[%s245 + $0x274] sm:$0xf]
        %v417 = vld [vmem:[%s245 + $0x278] sm:$0xf]
        %v418 = vld [vmem:[%s245 + $0x27c] sm:$0xf]
        %v419 = vld [vmem:[%s245 + $0x280] sm:$0xf]
        %v420 = vld [vmem:[%s245 + $0x284] sm:$0xf]
        %v421 = vld [vmem:[%s245 + $0x288] sm:$0xf]
        %v422 = vld [vmem:[%s245 + $0x28c] sm:$0xf]
        %v423 = vld [vmem:[%s245 + $0x290] sm:$0xf]
        %v424 = vld [vmem:[%s245 + $0x294] sm:$0xf]
        %v425 = vld [vmem:[%s245 + $0x298] sm:$0xf]
        %v426 = vld [vmem:[%s245 + $0x29c] sm:$0xf]
        %v427 = vld [vmem:[%s245 + $0x2a0] sm:$0xf]
        %v428 = vld [vmem:[%s245 + $0x2a4] sm:$0xf]
        %v429 = vld [vmem:[%s245 + $0x2a8] sm:$0xf]
        %v430 = vld [vmem:[%s245 + $0x2ac] sm:$0xf]
        %v431 = vld [vmem:[%s245 + $0x2b0] sm:$0xf]
        %v432 = vld [vmem:[%s245 + $0x2b4] sm:$0xf]
        %v433 = vld [vmem:[%s245 + $0x2b8] sm:$0xf]
        %v434 = vld [vmem:[%s245 + $0x2bc] sm:$0xf]
        %v435 = vld [vmem:[%s245 + $0x2c0] sm:$0xf]
        %v436 = vld [vmem:[%s245 + $0x2c4] sm:$0xf]
        %v437 = vld [vmem:[%s245 + $0x2c8] sm:$0xf]
        %v438 = vld [vmem:[%s245 + $0x2cc] sm:$0xf]
        %v439 = vld [vmem:[%s245 + $0x2d0] sm:$0xf]
        %v440 = vld [vmem:[%s245 + $0x2d4] sm:$0xf]
        %v441 = vld [vmem:[%s245 + $0x2d8] sm:$0xf]
        %v442 = vld [vmem:[%s245 + $0x2dc] sm:$0xf]
        %v443 = vld [vmem:[%s245 + $0x2e0] sm:$0xf]
        %v444 = vld [vmem:[%s245 + $0x2e4] sm:$0xf]
        %v445 = vld [vmem:[%s245 + $0x2e8] sm:$0xf]
        %v446 = vld [vmem:[%s245 + $0x2ec] sm:$0xf]
        %v447 = vld [vmem:[%s245 + $0x2f0] sm:$0xf]
        %v448 = vld [vmem:[%s245 + $0x2f4] sm:$0xf]
        %v449 = vld [vmem:[%s245 + $0x2f8] sm:$0xf]
        %v450 = vld [vmem:[%s245 + $0x2fc] sm:$0xf]
        %v451 = vld [vmem:[%s245 + $0x300] sm:$0xf]
        %v452 = vld [vmem:[%s245 + $0x304] sm:$0xf]
        %v453 = vld [vmem:[%s245 + $0x308] sm:$0xf]
        %v454 = vld [vmem:[%s245 + $0x30c] sm:$0xf]
        %v455 = vld [vmem:[%s245 + $0x310] sm:$0xf]
        %v456 = vld [vmem:[%s245 + $0x314] sm:$0xf]
        %v457 = vld [vmem:[%s245 + $0x318] sm:$0xf]
        %v458 = vld [vmem:[%s245 + $0x31c] sm:$0xf]
        %v459 = vld [vmem:[%s245 + $0x320] sm:$0xf]
        %v460 = vld [vmem:[%s245 + $0x324] sm:$0xf]
        %v461 = vld [vmem:[%s245 + $0x328] sm:$0xf]
        %v462 = vld [vmem:[%s245 + $0x32c] sm:$0xf]
        %v463 = vld [vmem:[%s245 + $0x330] sm:$0xf]
        %v464 = vld [vmem:[%s245 + $0x334] sm:$0xf]
        %v465 = vld [vmem:[%s245 + $0x338] sm:$0xf]
        %v466 = vld [vmem:[%s245 + $0x33c] sm:$0xf]
        %v467 = vld [vmem:[%s245 + $0x340] sm:$0xf]
        %v468 = vld [vmem:[%s245 + $0x344] sm:$0xf]
        %v469 = vld [vmem:[%s245 + $0x348] sm:$0xf]
        %v470 = vld [vmem:[%s245 + $0x34c] sm:$0xf]
        %v471 = vld [vmem:[%s245 + $0x350] sm:$0xf]
        %v472 = vld [vmem:[%s245 + $0x354] sm:$0xf]
        %v473 = vld [vmem:[%s245 + $0x358] sm:$0xf]
        %v474 = vld [vmem:[%s245 + $0x35c] sm:$0xf]
        %v475 = vld [vmem:[%s245 + $0x360] sm:$0xf]
        %v476 = vld [vmem:[%s245 + $0x364] sm:$0xf]
        %v477 = vld [vmem:[%s245 + $0x368] sm:$0xf]
        %v478 = vld [vmem:[%s245 + $0x36c] sm:$0xf]
        %v479 = vld [vmem:[%s245 + $0x370] sm:$0xf]
        %v480 = vld [vmem:[%s245 + $0x374] sm:$0xf]
        %v481 = vld [vmem:[%s245 + $0x378] sm:$0xf]
        %v482 = vld [vmem:[%s245 + $0x37c] sm:$0xf]
        %v483 = vld [vmem:[%s245 + $0x380] sm:$0xf]
        %v484 = vld [vmem:[%s245 + $0x384] sm:$0xf]
        %v485 = vld [vmem:[%s245 + $0x388] sm:$0xf]
        %v486 = vld [vmem:[%s245 + $0x38c] sm:$0xf]
        %v487 = vld [vmem:[%s245 + $0x390] sm:$0xf]
        %v488 = vld [vmem:[%s245 + $0x394] sm:$0xf]
        %v489 = vld [vmem:[%s245 + $0x398] sm:$0xf]
        %v490 = vld [vmem:[%s245 + $0x39c] sm:$0xf]
        %v491 = vld [vmem:[%s245 + $0x3a0] sm:$0xf]
        %v492 = vld [vmem:[%s245 + $0x3a4] sm:$0xf]
        %v493 = vld [vmem:[%s245 + $0x3a8] sm:$0xf]
        %v494 = vld [vmem:[%s245 + $0x3ac] sm:$0xf]
        %v495 = vld [vmem:[%s245 + $0x3b0] sm:$0xf]
        %v496 = vld [vmem:[%s245 + $0x3b4] sm:$0xf]
        %v497 = vld [vmem:[%s245 + $0x3b8] sm:$0xf]
        %v498 = vld [vmem:[%s245 + $0x3bc] sm:$0xf]
        %v499 = vld [vmem:[%s245 + $0x3c0] sm:$0xf]
        %v500 = vld [vmem:[%s245 + $0x3c4] sm:$0xf]
        %v501 = vld [vmem:[%s245 + $0x3c8] sm:$0xf]
        %v502 = vld [vmem:[%s245 + $0x3cc] sm:$0xf]
        %v503 = vld [vmem:[%s245 + $0x3d0] sm:$0xf]
        %v504 = vld [vmem:[%s245 + $0x3d4] sm:$0xf]
        %v505 = vld [vmem:[%s245 + $0x3d8] sm:$0xf]
        %v506 = vld [vmem:[%s245 + $0x3dc] sm:$0xf]
        %v507 = vld [vmem:[%s245 + $0x3e0] sm:$0xf]
        %v508 = vld [vmem:[%s245 + $0x3e4] sm:$0xf]
        %v509 = vld [vmem:[%s245 + $0x3e8] sm:$0xf]
        %v510 = vld [vmem:[%s245 + $0x3ec] sm:$0xf]
        %v511 = vld [vmem:[%s245 + $0x3f0] sm:$0xf]
        %v512 = vld [vmem:[%s245 + $0x3f4] sm:$0xf]
        %v513 = vld [vmem:[%s245 + $0x3f8] sm:$0xf]
        %v514 = vld [vmem:[%s245 + $0x3fc] sm:$0xf]
        %v515 = vld [vmem:[%s250] sm:$0xf]
        %v772 = vunpack.c.l.b16 %v259
        %v773 = vunpack.c.l.b16 %v260
        %v774 = vunpack.c.l.b16 %v261
        %v775 = vunpack.c.l.b16 %v262
        %v776 = vunpack.c.l.b16 %v263
        %v777 = vunpack.c.l.b16 %v264
        %v778 = vunpack.c.l.b16 %v265
        %v779 = vunpack.c.l.b16 %v266
        %v780 = vunpack.c.l.b16 %v267
        %v781 = vunpack.c.l.b16 %v268
        %v782 = vunpack.c.l.b16 %v269
        %v783 = vunpack.c.l.b16 %v270
        %v784 = vunpack.c.l.b16 %v271
        %v785 = vunpack.c.l.b16 %v272
        %v786 = vunpack.c.l.b16 %v273
        %v787 = vunpack.c.l.b16 %v274
        %v788 = vunpack.c.l.b16 %v275
        %v789 = vunpack.c.l.b16 %v276
        %v790 = vunpack.c.l.b16 %v277
        %v791 = vunpack.c.l.b16 %v278
        %v792 = vunpack.c.l.b16 %v279
        %v793 = vunpack.c.l.b16 %v280
        %v794 = vunpack.c.l.b16 %v281
        %v795 = vunpack.c.l.b16 %v282
        %v796 = vunpack.c.l.b16 %v283
        %v797 = vunpack.c.l.b16 %v284
        %v798 = vunpack.c.l.b16 %v285
        %v799 = vunpack.c.l.b16 %v286
        %v800 = vunpack.c.l.b16 %v287
        %v801 = vunpack.c.l.b16 %v288
        %v802 = vunpack.c.l.b16 %v289
        %v803 = vunpack.c.l.b16 %v290
        %v804 = vunpack.c.l.b16 %v291
        %v805 = vunpack.c.l.b16 %v292
        %v806 = vunpack.c.l.b16 %v293
        %v807 = vunpack.c.l.b16 %v294
        %v808 = vunpack.c.l.b16 %v295
        %v809 = vunpack.c.l.b16 %v296
        %v810 = vunpack.c.l.b16 %v297
        %v811 = vunpack.c.l.b16 %v298
        %v812 = vunpack.c.l.b16 %v299
        %v813 = vunpack.c.l.b16 %v300
        %v814 = vunpack.c.l.b16 %v301
        %v815 = vunpack.c.l.b16 %v302
        %v816 = vunpack.c.l.b16 %v303
        %v817 = vunpack.c.l.b16 %v304
        %v818 = vunpack.c.l.b16 %v305
        %v819 = vunpack.c.l.b16 %v306
        %v820 = vunpack.c.l.b16 %v307
        %v821 = vunpack.c.l.b16 %v308
        %v822 = vunpack.c.l.b16 %v309
        %v823 = vunpack.c.l.b16 %v310
        %v824 = vunpack.c.l.b16 %v311
        %v825 = vunpack.c.l.b16 %v312
        %v826 = vunpack.c.l.b16 %v313
        %v827 = vunpack.c.l.b16 %v314
        %v828 = vunpack.c.l.b16 %v315
        %v829 = vunpack.c.l.b16 %v316
        %v830 = vunpack.c.l.b16 %v317
        %v831 = vunpack.c.l.b16 %v318
        %v832 = vunpack.c.l.b16 %v319
        %v833 = vunpack.c.l.b16 %v320
        %v834 = vunpack.c.l.b16 %v321
        %v835 = vunpack.c.l.b16 %v322
        %v836 = vunpack.c.l.b16 %v323
        %v837 = vunpack.c.l.b16 %v324
        %v838 = vunpack.c.l.b16 %v325
        %v839 = vunpack.c.l.b16 %v326
        %v840 = vunpack.c.l.b16 %v327
        %v841 = vunpack.c.l.b16 %v328
        %v842 = vunpack.c.l.b16 %v329
        %v843 = vunpack.c.l.b16 %v330
        %v844 = vunpack.c.l.b16 %v331
        %v845 = vunpack.c.l.b16 %v332
        %v846 = vunpack.c.l.b16 %v333
        %v847 = vunpack.c.l.b16 %v334
        %v848 = vunpack.c.l.b16 %v335
        %v849 = vunpack.c.l.b16 %v336
        %v850 = vunpack.c.l.b16 %v337
        %v851 = vunpack.c.l.b16 %v338
        %v852 = vunpack.c.l.b16 %v339
        %v853 = vunpack.c.l.b16 %v340
        %v854 = vunpack.c.l.b16 %v341
        %v855 = vunpack.c.l.b16 %v342
        %v856 = vunpack.c.l.b16 %v343
        %v857 = vunpack.c.l.b16 %v344
        %v858 = vunpack.c.l.b16 %v345
        %v859 = vunpack.c.l.b16 %v346
        %v860 = vunpack.c.l.b16 %v347
        %v861 = vunpack.c.l.b16 %v348
        %v862 = vunpack.c.l.b16 %v349
        %v863 = vunpack.c.l.b16 %v350
        %v864 = vunpack.c.l.b16 %v351
        %v865 = vunpack.c.l.b16 %v352
        %v866 = vunpack.c.l.b16 %v353
        %v867 = vunpack.c.l.b16 %v354
        %v868 = vunpack.c.l.b16 %v355
        %v869 = vunpack.c.l.b16 %v356
        %v870 = vunpack.c.l.b16 %v357
        %v871 = vunpack.c.l.b16 %v358
        %v872 = vunpack.c.l.b16 %v359
        %v873 = vunpack.c.l.b16 %v360
        %v874 = vunpack.c.l.b16 %v361
        %v875 = vunpack.c.l.b16 %v362
        %v876 = vunpack.c.l.b16 %v363
        %v877 = vunpack.c.l.b16 %v364
        %v878 = vunpack.c.l.b16 %v365
        %v879 = vunpack.c.l.b16 %v366
        %v880 = vunpack.c.l.b16 %v367
        %v881 = vunpack.c.l.b16 %v368
        %v882 = vunpack.c.l.b16 %v369
        %v883 = vunpack.c.l.b16 %v370
        %v884 = vunpack.c.l.b16 %v371
        %v885 = vunpack.c.l.b16 %v372
        %v886 = vunpack.c.l.b16 %v373
        %v887 = vunpack.c.l.b16 %v374
        %v888 = vunpack.c.l.b16 %v375
        %v889 = vunpack.c.l.b16 %v376
        %v890 = vunpack.c.l.b16 %v377
        %v891 = vunpack.c.l.b16 %v378
        %v892 = vunpack.c.l.b16 %v379
        %v893 = vunpack.c.l.b16 %v380
        %v894 = vunpack.c.l.b16 %v381
        %v895 = vunpack.c.l.b16 %v382
        %v896 = vunpack.c.l.b16 %v383
        %v897 = vunpack.c.l.b16 %v384
        %v898 = vunpack.c.l.b16 %v385
        %v899 = vunpack.c.l.b16 %v386
        %v900 = vunpack.c.l.b16 %v387
        %v901 = vunpack.c.l.b16 %v388
        %v902 = vunpack.c.l.b16 %v389
        %v903 = vunpack.c.l.b16 %v390
        %v904 = vunpack.c.l.b16 %v391
        %v905 = vunpack.c.l.b16 %v392
        %v906 = vunpack.c.l.b16 %v393
        %v907 = vunpack.c.l.b16 %v394
        %v908 = vunpack.c.l.b16 %v395
        %v909 = vunpack.c.l.b16 %v396
        %v910 = vunpack.c.l.b16 %v397
        %v911 = vunpack.c.l.b16 %v398
        %v912 = vunpack.c.l.b16 %v399
        %v913 = vunpack.c.l.b16 %v400
        %v914 = vunpack.c.l.b16 %v401
        %v915 = vunpack.c.l.b16 %v402
        %v916 = vunpack.c.l.b16 %v403
        %v917 = vunpack.c.l.b16 %v404
        %v918 = vunpack.c.l.b16 %v405
        %v919 = vunpack.c.l.b16 %v406
        %v920 = vunpack.c.l.b16 %v407
        %v921 = vunpack.c.l.b16 %v408
        %v922 = vunpack.c.l.b16 %v409
        %v923 = vunpack.c.l.b16 %v410
        %v924 = vunpack.c.l.b16 %v411
        %v925 = vunpack.c.l.b16 %v412
        %v926 = vunpack.c.l.b16 %v413
        %v927 = vunpack.c.l.b16 %v414
        %v928 = vunpack.c.l.b16 %v415
        %v929 = vunpack.c.l.b16 %v416
        %v930 = vunpack.c.l.b16 %v417
        %v931 = vunpack.c.l.b16 %v418
        %v932 = vunpack.c.l.b16 %v419
        %v933 = vunpack.c.l.b16 %v420
        %v934 = vunpack.c.l.b16 %v421
        %v935 = vunpack.c.l.b16 %v422
        %v936 = vunpack.c.l.b16 %v423
        %v937 = vunpack.c.l.b16 %v424
        %v938 = vunpack.c.l.b16 %v425
        %v939 = vunpack.c.l.b16 %v426
        %v940 = vunpack.c.l.b16 %v427
        %v941 = vunpack.c.l.b16 %v428
        %v942 = vunpack.c.l.b16 %v429
        %v943 = vunpack.c.l.b16 %v430
        %v944 = vunpack.c.l.b16 %v431
        %v945 = vunpack.c.l.b16 %v432
        %v946 = vunpack.c.l.b16 %v433
        %v947 = vunpack.c.l.b16 %v434
        %v948 = vunpack.c.l.b16 %v435
        %v949 = vunpack.c.l.b16 %v436
        %v950 = vunpack.c.l.b16 %v437
        %v951 = vunpack.c.l.b16 %v438
        %v952 = vunpack.c.l.b16 %v439
        %v953 = vunpack.c.l.b16 %v440
        %v954 = vunpack.c.l.b16 %v441
        %v955 = vunpack.c.l.b16 %v442
        %v956 = vunpack.c.l.b16 %v443
        %v957 = vunpack.c.l.b16 %v444
        %v958 = vunpack.c.l.b16 %v445
        %v959 = vunpack.c.l.b16 %v446
        %v960 = vunpack.c.l.b16 %v447
        %v961 = vunpack.c.l.b16 %v448
        %v962 = vunpack.c.l.b16 %v449
        %v963 = vunpack.c.l.b16 %v450
        %v964 = vunpack.c.l.b16 %v451
        %v965 = vunpack.c.l.b16 %v452
        %v966 = vunpack.c.l.b16 %v453
        %v967 = vunpack.c.l.b16 %v454
        %v968 = vunpack.c.l.b16 %v455
        %v969 = vunpack.c.l.b16 %v456
        %v970 = vunpack.c.l.b16 %v457
        %v971 = vunpack.c.l.b16 %v458
        %v972 = vunpack.c.l.b16 %v459
        %v973 = vunpack.c.l.b16 %v460
        %v974 = vunpack.c.l.b16 %v461
        %v975 = vunpack.c.l.b16 %v462
        %v976 = vunpack.c.l.b16 %v463
        %v977 = vunpack.c.l.b16 %v464
        %v978 = vunpack.c.l.b16 %v465
        %v979 = vunpack.c.l.b16 %v466
        %v980 = vunpack.c.l.b16 %v467
        %v981 = vunpack.c.l.b16 %v468
        %v982 = vunpack.c.l.b16 %v469
        %v983 = vunpack.c.l.b16 %v470
        %v984 = vunpack.c.l.b16 %v471
        %v985 = vunpack.c.l.b16 %v472
        %v986 = vunpack.c.l.b16 %v473
        %v987 = vunpack.c.l.b16 %v474
        %v988 = vunpack.c.l.b16 %v475
        %v989 = vunpack.c.l.b16 %v476
        %v990 = vunpack.c.l.b16 %v477
        %v991 = vunpack.c.l.b16 %v478
        %v992 = vunpack.c.l.b16 %v479
        %v993 = vunpack.c.l.b16 %v480
        %v994 = vunpack.c.l.b16 %v481
        %v995 = vunpack.c.l.b16 %v482
        %v996 = vunpack.c.l.b16 %v483
        %v997 = vunpack.c.l.b16 %v484
        %v998 = vunpack.c.l.b16 %v485
        %v999 = vunpack.c.l.b16 %v486
        %v1000 = vunpack.c.l.b16 %v487
        %v1001 = vunpack.c.l.b16 %v488
        %v1002 = vunpack.c.l.b16 %v489
        %v1003 = vunpack.c.l.b16 %v490
        %v1004 = vunpack.c.l.b16 %v491
        %v1005 = vunpack.c.l.b16 %v492
        %v1006 = vunpack.c.l.b16 %v493
        %v1007 = vunpack.c.l.b16 %v494
        %v1008 = vunpack.c.l.b16 %v495
        %v1009 = vunpack.c.l.b16 %v496
        %v1010 = vunpack.c.l.b16 %v497
        %v1011 = vunpack.c.l.b16 %v498
        %v1012 = vunpack.c.l.b16 %v499
        %v1013 = vunpack.c.l.b16 %v500
        %v1014 = vunpack.c.l.b16 %v501
        %v1015 = vunpack.c.l.b16 %v502
        %v1016 = vunpack.c.l.b16 %v503
        %v1017 = vunpack.c.l.b16 %v504
        %v1018 = vunpack.c.l.b16 %v505
        %v1019 = vunpack.c.l.b16 %v506
        %v1020 = vunpack.c.l.b16 %v507
        %v1021 = vunpack.c.l.b16 %v508
        %v1022 = vunpack.c.l.b16 %v509
        %v1023 = vunpack.c.l.b16 %v510
        %v1024 = vunpack.c.l.b16 %v511
        %v1025 = vunpack.c.l.b16 %v512
        %v1026 = vunpack.c.l.b16 %v513
        %v1027 = vunpack.c.l.b16 %v514
        %v1028 = vpack.c.b16 %v773, %v772
        %v1029 = vpack.c.b16 %v775, %v774
        %v1030 = vpack.c.b16 %v777, %v776
        %v1031 = vpack.c.b16 %v779, %v778
        %v1032 = vpack.c.b16 %v781, %v780
        %v1033 = vpack.c.b16 %v783, %v782
        %v1034 = vpack.c.b16 %v785, %v784
        %v1035 = vpack.c.b16 %v787, %v786
        %v1036 = vpack.c.b16 %v789, %v788
        %v1037 = vpack.c.b16 %v791, %v790
        %v1038 = vpack.c.b16 %v793, %v792
        %v1039 = vpack.c.b16 %v795, %v794
        %v1040 = vpack.c.b16 %v797, %v796
        %v1041 = vpack.c.b16 %v799, %v798
        %v1042 = vpack.c.b16 %v801, %v800
        %v1043 = vpack.c.b16 %v803, %v802
        %v1044 = vpack.c.b16 %v805, %v804
        %v1045 = vpack.c.b16 %v807, %v806
        %v1046 = vpack.c.b16 %v809, %v808
        %v1047 = vpack.c.b16 %v811, %v810
        %v1048 = vpack.c.b16 %v813, %v812
        %v1049 = vpack.c.b16 %v815, %v814
        %v1050 = vpack.c.b16 %v817, %v816
        %v1051 = vpack.c.b16 %v819, %v818
        %v1052 = vpack.c.b16 %v821, %v820
        %v1053 = vpack.c.b16 %v823, %v822
        %v1054 = vpack.c.b16 %v825, %v824
        %v1055 = vpack.c.b16 %v827, %v826
        %v1056 = vpack.c.b16 %v829, %v828
        %v1057 = vpack.c.b16 %v831, %v830
        %v1058 = vpack.c.b16 %v833, %v832
        %v1059 = vpack.c.b16 %v835, %v834
        %v1060 = vpack.c.b16 %v837, %v836
        %v1061 = vpack.c.b16 %v839, %v838
        %v1062 = vpack.c.b16 %v841, %v840
        %v1063 = vpack.c.b16 %v843, %v842
        %v1064 = vpack.c.b16 %v845, %v844
        %v1065 = vpack.c.b16 %v847, %v846
        %v1066 = vpack.c.b16 %v849, %v848
        %v1067 = vpack.c.b16 %v851, %v850
        %v1068 = vpack.c.b16 %v853, %v852
        %v1069 = vpack.c.b16 %v855, %v854
        %v1070 = vpack.c.b16 %v857, %v856
        %v1071 = vpack.c.b16 %v859, %v858
        %v1072 = vpack.c.b16 %v861, %v860
        %v1073 = vpack.c.b16 %v863, %v862
        %v1074 = vpack.c.b16 %v865, %v864
        %v1075 = vpack.c.b16 %v867, %v866
        %v1076 = vpack.c.b16 %v869, %v868
        %v1077 = vpack.c.b16 %v871, %v870
        %v1078 = vpack.c.b16 %v873, %v872
        %v1079 = vpack.c.b16 %v875, %v874
        %v1080 = vpack.c.b16 %v877, %v876
        %v1081 = vpack.c.b16 %v879, %v878
        %v1082 = vpack.c.b16 %v881, %v880
        %v1083 = vpack.c.b16 %v883, %v882
        %v1084 = vpack.c.b16 %v885, %v884
        %v1085 = vpack.c.b16 %v887, %v886
        %v1086 = vpack.c.b16 %v889, %v888
        %v1087 = vpack.c.b16 %v891, %v890
        %v1088 = vpack.c.b16 %v893, %v892
        %v1089 = vpack.c.b16 %v895, %v894
        %v1090 = vpack.c.b16 %v897, %v896
        %v1091 = vpack.c.b16 %v899, %v898
        %v1092 = vpack.c.b16 %v901, %v900
        %v1093 = vpack.c.b16 %v903, %v902
        %v1094 = vpack.c.b16 %v905, %v904
        %v1095 = vpack.c.b16 %v907, %v906
        %v1096 = vpack.c.b16 %v909, %v908
        %v1097 = vpack.c.b16 %v911, %v910
        %v1098 = vpack.c.b16 %v913, %v912
        %v1099 = vpack.c.b16 %v915, %v914
        %v1100 = vpack.c.b16 %v917, %v916
        %v1101 = vpack.c.b16 %v919, %v918
        %v1102 = vpack.c.b16 %v921, %v920
        %v1103 = vpack.c.b16 %v923, %v922
        %v1104 = vpack.c.b16 %v925, %v924
        %v1105 = vpack.c.b16 %v927, %v926
        %v1106 = vpack.c.b16 %v929, %v928
        %v1107 = vpack.c.b16 %v931, %v930
        %v1108 = vpack.c.b16 %v933, %v932
        %v1109 = vpack.c.b16 %v935, %v934
        %v1110 = vpack.c.b16 %v937, %v936
        %v1111 = vpack.c.b16 %v939, %v938
        %v1112 = vpack.c.b16 %v941, %v940
        %v1113 = vpack.c.b16 %v943, %v942
        %v1114 = vpack.c.b16 %v945, %v944
        %v1115 = vpack.c.b16 %v947, %v946
        %v1116 = vpack.c.b16 %v949, %v948
        %v1117 = vpack.c.b16 %v951, %v950
        %v1118 = vpack.c.b16 %v953, %v952
        %v1119 = vpack.c.b16 %v955, %v954
        %v1120 = vpack.c.b16 %v957, %v956
        %v1121 = vpack.c.b16 %v959, %v958
        %v1122 = vpack.c.b16 %v961, %v960
        %v1123 = vpack.c.b16 %v963, %v962
        %v1124 = vpack.c.b16 %v965, %v964
        %v1125 = vpack.c.b16 %v967, %v966
        %v1126 = vpack.c.b16 %v969, %v968
        %v1127 = vpack.c.b16 %v971, %v970
        %v1128 = vpack.c.b16 %v973, %v972
        %v1129 = vpack.c.b16 %v975, %v974
        %v1130 = vpack.c.b16 %v977, %v976
        %v1131 = vpack.c.b16 %v979, %v978
        %v1132 = vpack.c.b16 %v981, %v980
        %v1133 = vpack.c.b16 %v983, %v982
        %v1134 = vpack.c.b16 %v985, %v984
        %v1135 = vpack.c.b16 %v987, %v986
        %v1136 = vpack.c.b16 %v989, %v988
        %v1137 = vpack.c.b16 %v991, %v990
        %v1138 = vpack.c.b16 %v993, %v992
        %v1139 = vpack.c.b16 %v995, %v994
        %v1140 = vpack.c.b16 %v997, %v996
        %v1141 = vpack.c.b16 %v999, %v998
        %v1142 = vpack.c.b16 %v1001, %v1000
        %v1143 = vpack.c.b16 %v1003, %v1002
        %v1144 = vpack.c.b16 %v1005, %v1004
        %v1145 = vpack.c.b16 %v1007, %v1006
        %v1146 = vpack.c.b16 %v1009, %v1008
        %v1147 = vpack.c.b16 %v1011, %v1010
        %v1148 = vpack.c.b16 %v1013, %v1012
        %v1149 = vpack.c.b16 %v1015, %v1014
        %v1150 = vpack.c.b16 %v1017, %v1016
        %v1151 = vpack.c.b16 %v1019, %v1018
        %v1152 = vpack.c.b16 %v1021, %v1020
        %v1153 = vpack.c.b16 %v1023, %v1022
        %v1154 = vpack.c.b16 %v1025, %v1024
        %v1155 = vpack.c.b16 %v1027, %v1026
        %vm1156 = vcmask 64512
        %v1158 = vsel %vm1156, %v1028, 0
        %v1161 = vsel %vm1156, %v1029, 0
        %v1164 = vsel %vm1156, %v1030, 0
        %v1167 = vsel %vm1156, %v1031, 0
        %v1170 = vsel %vm1156, %v1032, 0
        %v1173 = vsel %vm1156, %v1033, 0
        %v1176 = vsel %vm1156, %v1034, 0
        %v1179 = vsel %vm1156, %v1035, 0
        %v1182 = vsel %vm1156, %v1036, 0
        %v1185 = vsel %vm1156, %v1037, 0
        %v1188 = vsel %vm1156, %v1038, 0
        %v1191 = vsel %vm1156, %v1039, 0
        %v1194 = vsel %vm1156, %v1040, 0
        %v1197 = vsel %vm1156, %v1041, 0
        %v1200 = vsel %vm1156, %v1042, 0
        %v1203 = vsel %vm1156, %v1043, 0
        %v1206 = vsel %vm1156, %v1044, 0
        %v1209 = vsel %vm1156, %v1045, 0
        %v1212 = vsel %vm1156, %v1046, 0
        %v1215 = vsel %vm1156, %v1047, 0
        %v1218 = vsel %vm1156, %v1048, 0
        %v1221 = vsel %vm1156, %v1049, 0
        %v1224 = vsel %vm1156, %v1050, 0
        %v1227 = vsel %vm1156, %v1051, 0
        %v1230 = vsel %vm1156, %v1052, 0
        %v1233 = vsel %vm1156, %v1053, 0
        %v1236 = vsel %vm1156, %v1054, 0
        %v1239 = vsel %vm1156, %v1055, 0
        %v1242 = vsel %vm1156, %v1056, 0
        %v1245 = vsel %vm1156, %v1057, 0
        %v1248 = vsel %vm1156, %v1058, 0
        %v1251 = vsel %vm1156, %v1059, 0
        %v1254 = vsel %vm1156, %v1060, 0
        %v1257 = vsel %vm1156, %v1061, 0
        %v1260 = vsel %vm1156, %v1062, 0
        %v1263 = vsel %vm1156, %v1063, 0
        %v1266 = vsel %vm1156, %v1064, 0
        %v1269 = vsel %vm1156, %v1065, 0
        %v1272 = vsel %vm1156, %v1066, 0
        %v1275 = vsel %vm1156, %v1067, 0
        %v1278 = vsel %vm1156, %v1068, 0
        %v1281 = vsel %vm1156, %v1069, 0
        %v1284 = vsel %vm1156, %v1070, 0
        %v1287 = vsel %vm1156, %v1071, 0
        %v1290 = vsel %vm1156, %v1072, 0
        %v1293 = vsel %vm1156, %v1073, 0
        %v1296 = vsel %vm1156, %v1074, 0
        %v1299 = vsel %vm1156, %v1075, 0
        %v1302 = vsel %vm1156, %v1076, 0
        %v1305 = vsel %vm1156, %v1077, 0
        %v1308 = vsel %vm1156, %v1078, 0
        %v1311 = vsel %vm1156, %v1079, 0
        %v1314 = vsel %vm1156, %v1080, 0
        %v1317 = vsel %vm1156, %v1081, 0
        %v1320 = vsel %vm1156, %v1082, 0
        %v1323 = vsel %vm1156, %v1083, 0
        %v1326 = vsel %vm1156, %v1084, 0
        %v1329 = vsel %vm1156, %v1085, 0
        %v1332 = vsel %vm1156, %v1086, 0
        %v1335 = vsel %vm1156, %v1087, 0
        %v1338 = vsel %vm1156, %v1088, 0
        %v1341 = vsel %vm1156, %v1089, 0
        %v1344 = vsel %vm1156, %v1090, 0
        %v1347 = vsel %vm1156, %v1091, 0
        %v1350 = vsel %vm1156, %v1092, 0
        %v1353 = vsel %vm1156, %v1093, 0
        %v1356 = vsel %vm1156, %v1094, 0
        %v1359 = vsel %vm1156, %v1095, 0
        %v1362 = vsel %vm1156, %v1096, 0
        %v1365 = vsel %vm1156, %v1097, 0
        %v1368 = vsel %vm1156, %v1098, 0
        %v1371 = vsel %vm1156, %v1099, 0
        %v1374 = vsel %vm1156, %v1100, 0
        %v1377 = vsel %vm1156, %v1101, 0
        %v1380 = vsel %vm1156, %v1102, 0
        %v1383 = vsel %vm1156, %v1103, 0
        %v1386 = vsel %vm1156, %v1104, 0
        %v1389 = vsel %vm1156, %v1105, 0
        %v1392 = vsel %vm1156, %v1106, 0
        %v1395 = vsel %vm1156, %v1107, 0
        %v1398 = vsel %vm1156, %v1108, 0
        %v1401 = vsel %vm1156, %v1109, 0
        %v1404 = vsel %vm1156, %v1110, 0
        %v1407 = vsel %vm1156, %v1111, 0
        %v1410 = vsel %vm1156, %v1112, 0
        %v1413 = vsel %vm1156, %v1113, 0
        %v1416 = vsel %vm1156, %v1114, 0
        %v1419 = vsel %vm1156, %v1115, 0
        %v1422 = vsel %vm1156, %v1116, 0
        %v1425 = vsel %vm1156, %v1117, 0
        %v1428 = vsel %vm1156, %v1118, 0
        %v1431 = vsel %vm1156, %v1119, 0
        %v1434 = vsel %vm1156, %v1120, 0
        %v1437 = vsel %vm1156, %v1121, 0
        %v1440 = vsel %vm1156, %v1122, 0
        %v1443 = vsel %vm1156, %v1123, 0
        %v1446 = vsel %vm1156, %v1124, 0
        %v1449 = vsel %vm1156, %v1125, 0
        %v1452 = vsel %vm1156, %v1126, 0
        %v1455 = vsel %vm1156, %v1127, 0
        %v1458 = vsel %vm1156, %v1128, 0
        %v1461 = vsel %vm1156, %v1129, 0
        %v1464 = vsel %vm1156, %v1130, 0
        %v1467 = vsel %vm1156, %v1131, 0
        %v1470 = vsel %vm1156, %v1132, 0
        %v1473 = vsel %vm1156, %v1133, 0
        %v1476 = vsel %vm1156, %v1134, 0
        %v1479 = vsel %vm1156, %v1135, 0
        %v1482 = vsel %vm1156, %v1136, 0
        %v1485 = vsel %vm1156, %v1137, 0
        %v1488 = vsel %vm1156, %v1138, 0
        %v1491 = vsel %vm1156, %v1139, 0
        %v1494 = vsel %vm1156, %v1140, 0
        %v1497 = vsel %vm1156, %v1141, 0
        %v1500 = vsel %vm1156, %v1142, 0
        %v1503 = vsel %vm1156, %v1143, 0
        %v1506 = vsel %vm1156, %v1144, 0
        %v1509 = vsel %vm1156, %v1145, 0
        %v1512 = vsel %vm1156, %v1146, 0
        %v1515 = vsel %vm1156, %v1147, 0
        %v1518 = vsel %vm1156, %v1148, 0
        %v1521 = vsel %vm1156, %v1149, 0
        %v1524 = vsel %vm1156, %v1150, 0
        %v1527 = vsel %vm1156, %v1151, 0
        %v1530 = vsel %vm1156, %v1152, 0
        %v1533 = vsel %vm1156, %v1153, 0
        %v1536 = vsel %vm1156, %v1154, 0
        %v1539 = vsel %vm1156, %v1155, 0
        %vm1541 = vcmask 1043456
        %v1543 = vsel %vm1541, %v515, 0
        %1545 = vmatprep.subr.bf16.mxu0 0
        %1546 = vmatpush1.bf16.msra.mxu0 %v1543
        %1547 = vmatprep.subr.bf16.mxu0 0
        %1548 = vmatpush1.bf16.msra.mxu0 0
        %1549 = vmatprep.subr.bf16.mxu0 0
        %1550 = vmatpush1.bf16.msra.mxu0 0
        %1551 = vmatprep.subr.bf16.mxu0 0
        %1552 = vmatpush1.bf16.msra.mxu0 0
        %1553 = vmatprep.subr.bf16.mxu0 0
        %1554 = vmatpush1.bf16.msra.mxu0 0
        %1555 = vmatprep.subr.bf16.mxu0 0
        %1556 = vmatpush1.bf16.msra.mxu0 0
        %1557 = vmatprep.subr.bf16.mxu0 0
        %1558 = vmatpush1.bf16.msra.mxu0 0
        %1559 = vmatprep.subr.bf16.mxu0 0
        %1560 = vmatpush1.bf16.msra.mxu0 0
        %1561 = vmatprep.subr.bf16.mxu0 0
        %1562 = vmatpush1.bf16.msra.mxu0 0
        %1563 = vmatprep.subr.bf16.mxu0 0
        %1564 = vmatpush1.bf16.msra.mxu0 0
        %1565 = vmatprep.subr.bf16.mxu0 0
        %1566 = vmatpush1.bf16.msra.mxu0 0
        %1567 = vmatprep.subr.bf16.mxu0 0
        %1568 = vmatpush1.bf16.msra.mxu0 0
        %1569 = vmatprep.subr.bf16.mxu0 0
        %1570 = vmatpush1.bf16.msra.mxu0 0
        %1571 = vmatprep.subr.bf16.mxu0 0
        %1572 = vmatpush1.bf16.msra.mxu0 0
        %1573 = vmatprep.subr.bf16.mxu0 0
        %1574 = vmatpush1.bf16.msra.mxu0 0
        %1575 = vmatprep.subr.bf16.mxu0 0
        %1576 = vmatpush1.bf16.msra.mxu0 0
        %1577 = vmatprep.mubr.bf16.mxu0 0
        %1578 = vmatmul.mubr.bf16.gmra.mrb[0].mxu0 %v1158
        %v1579 = vpop.f32.mrb[0].mxu0
        %v1580 = vadd.f32 0.0, %v1579
        %v1581 = vpop.f32.mrb[0].mxu0
        %v1582 = vpop.f32.mrb[0].mxu0
        %v1583 = vadd.f32 0.0, %v1582
        %v1584 = vpop.f32.mrb[0].mxu0
        %1585 = vmatprep.mubr.bf16.mxu0 0
        %1586 = vmatmul.mubr.bf16.gmra.mrb[0].mxu0 %v1161
        %v1587 = vpop.f32.mrb[0].mxu0
        %v1588 = vadd.f32 0.0, %v1587
        %v1589 = vpop.f32.mrb[0].mxu0
        %v1590 = vpop.f32.mrb[0].mxu0
        %v1591 = vadd.f32 0.0, %v1590
        %v1592 = vpop.f32.mrb[0].mxu0
        %1593 = vmatprep.mubr.bf16.mxu0 0
        %1594 = vmatmul.mubr.bf16.gmra.mrb[0].mxu0 %v1164
        %v1595 = vpop.f32.mrb[0].mxu0
        %v1596 = vadd.f32 0.0, %v1595
        %v1597 = vpop.f32.mrb[0].mxu0
        %v1598 = vpop.f32.mrb[0].mxu0
        %v1599 = vadd.f32 0.0, %v1598
        %v1600 = vpop.f32.mrb[0].mxu0
        %1601 = vmatprep.mubr.bf16.mxu0 0
        %1602 = vmatmul.mubr.bf16.gmra.mrb[0].mxu0 %v1167
        %v1603 = vpop.f32.mrb[0].mxu0
        %v1604 = vadd.f32 0.0, %v1603
        %v1605 = vpop.f32.mrb[0].mxu0
        %v1606 = vpop.f32.mrb[0].mxu0
        %v1607 = vadd.f32 0.0, %v1606
        %v1608 = vpop.f32.mrb[0].mxu0
        %1609 = vmatprep.mubr.bf16.mxu0 0
        %1610 = vmatmul.mubr.bf16.gmra.mrb[0].mxu0 %v1170
        %v1611 = vpop.f32.mrb[0].mxu0
        %v1612 = vadd.f32 0.0, %v1611
        %v1613 = vpop.f32.mrb[0].mxu0
        %v1614 = vpop.f32.mrb[0].mxu0
        %v1615 = vadd.f32 0.0, %v1614
        %v1616 = vpop.f32.mrb[0].mxu0
        %1617 = vmatprep.mubr.bf16.mxu0 0
        %1618 = vmatmul.mubr.bf16.gmra.mrb[0].mxu0 %v1173
        %v1619 = vpop.f32.mrb[0].mxu0
        %v1620 = vadd.f32 0.0, %v1619
        %v1621 = vpop.f32.mrb[0].mxu0
        %v1622 = vpop.f32.mrb[0].mxu0
        %v1623 = vadd.f32 0.0, %v1622
        %v1624 = vpop.f32.mrb[0].mxu0
        %1625 = vmatprep.mubr.bf16.mxu0 0
        %1626 = vmatmul.mubr.bf16.gmra.mrb[0].mxu0 %v1176
        %v1627 = vpop.f32.mrb[0].mxu0
        %v1628 = vadd.f32 0.0, %v1627
        %v1629 = vpop.f32.mrb[0].mxu0
        %v1630 = vpop.f32.mrb[0].mxu0
        %v1631 = vadd.f32 0.0, %v1630
        %v1632 = vpop.f32.mrb[0].mxu0
        %1633 = vmatprep.mubr.bf16.mxu0 0
        %1634 = vmatmul.mubr.bf16.gmra.mrb[0].mxu0 %v1179
        %v1635 = vpop.f32.mrb[0].mxu0
        %v1636 = vadd.f32 0.0, %v1635
        %v1637 = vpop.f32.mrb[0].mxu0
        %v1638 = vpop.f32.mrb[0].mxu0
        %v1639 = vadd.f32 0.0, %v1638
        %v1640 = vpop.f32.mrb[0].mxu0
        %1641 = vmatprep.mubr.bf16.mxu0 0
        %1642 = vmatmul.mubr.bf16.gmra.mrb[0].mxu0 %v1182
        %v1643 = vpop.f32.mrb[0].mxu0
        %v1644 = vadd.f32 0.0, %v1643
        %v1645 = vpop.f32.mrb[0].mxu0
        %v1646 = vpop.f32.mrb[0].mxu0
        %v1647 = vadd.f32 0.0, %v1646
        %v1648 = vpop.f32.mrb[0].mxu0
        %1649 = vmatprep.mubr.bf16.mxu0 0
        %1650 = vmatmul.mubr.bf16.gmra.mrb[0].mxu0 %v1185
        %v1651 = vpop.f32.mrb[0].mxu0
        %v1652 = vadd.f32 0.0, %v1651
        %v1653 = vpop.f32.mrb[0].mxu0
        %v1654 = vpop.f32.mrb[0].mxu0
        %v1655 = vadd.f32 0.0, %v1654
        %v1656 = vpop.f32.mrb[0].mxu0
        %1657 = vmatprep.mubr.bf16.mxu0 0
        %1658 = vmatmul.mubr.bf16.gmra.mrb[0].mxu0 %v1188
        %v1659 = vpop.f32.mrb[0].mxu0
        %v1660 = vadd.f32 0.0, %v1659
        %v1661 = vpop.f32.mrb[0].mxu0
        %v1662 = vpop.f32.mrb[0].mxu0
        %v1663 = vadd.f32 0.0, %v1662
        %v1664 = vpop.f32.mrb[0].mxu0
        %1665 = vmatprep.mubr.bf16.mxu0 0
        %1666 = vmatmul.mubr.bf16.gmra.mrb[0].mxu0 %v1191
        %v1667 = vpop.f32.mrb[0].mxu0
        %v1668 = vadd.f32 0.0, %v1667
        %v1669 = vpop.f32.mrb[0].mxu0
        %v1670 = vpop.f32.mrb[0].mxu0
        %v1671 = vadd.f32 0.0, %v1670
        %v1672 = vpop.f32.mrb[0].mxu0
        %1673 = vmatprep.mubr.bf16.mxu0 0
        %1674 = vmatmul.mubr.bf16.gmra.mrb[0].mxu0 %v1194
        %v1675 = vpop.f32.mrb[0].mxu0
        %v1676 = vadd.f32 0.0, %v1675
        %v1677 = vpop.f32.mrb[0].mxu0
        %v1678 = vpop.f32.mrb[0].mxu0
        %v1679 = vadd.f32 0.0, %v1678
        %v1680 = vpop.f32.mrb[0].mxu0
        %1681 = vmatprep.mubr.bf16.mxu0 0
        %1682 = vmatmul.mubr.bf16.gmra.mrb[0].mxu0 %v1197
        %v1683 = vpop.f32.mrb[0].mxu0
        %v1684 = vadd.f32 0.0, %v1683
        %v1685 = vpop.f32.mrb[0].mxu0
        %v1686 = vpop.f32.mrb[0].mxu0
        %v1687 = vadd.f32 0.0, %v1686
        %v1688 = vpop.f32.mrb[0].mxu0
        %1689 = vmatprep.mubr.bf16.mxu0 0
        %1690 = vmatmul.mubr.bf16.gmra.mrb[0].mxu0 %v1200
        %v1691 = vpop.f32.mrb[0].mxu0
        %v1692 = vadd.f32 0.0, %v1691
        %v1693 = vpop.f32.mrb[0].mxu0
        %v1694 = vpop.f32.mrb[0].mxu0
        %v1695 = vadd.f32 0.0, %v1694
        %v1696 = vpop.f32.mrb[0].mxu0
        %1697 = vmatprep.mubr.bf16.mxu0 0
        %1698 = vmatmul.mubr.bf16.gmra.mrb[0].mxu0 %v1203
        %v1699 = vpop.f32.mrb[0].mxu0
        %v1700 = vadd.f32 0.0, %v1699
        %v1701 = vpop.f32.mrb[0].mxu0
        %v1702 = vpop.f32.mrb[0].mxu0
        %v1703 = vadd.f32 0.0, %v1702
        %v1704 = vpop.f32.mrb[0].mxu0
        %1705 = vmatprep.mubr.bf16.mxu0 0
        %1706 = vmatmul.mubr.bf16.gmra.mrb[0].mxu0 %v1206
        %v1707 = vpop.f32.mrb[0].mxu0
        %v1708 = vadd.f32 0.0, %v1707
        %v1709 = vpop.f32.mrb[0].mxu0
        %v1710 = vpop.f32.mrb[0].mxu0
        %v1711 = vadd.f32 0.0, %v1710
        %v1712 = vpop.f32.mrb[0].mxu0
        %1713 = vmatprep.mubr.bf16.mxu0 0
        %1714 = vmatmul.mubr.bf16.gmra.mrb[0].mxu0 %v1209
        %v1715 = vpop.f32.mrb[0].mxu0
        %v1716 = vadd.f32 0.0, %v1715
        %v1717 = vpop.f32.mrb[0].mxu0
        %v1718 = vpop.f32.mrb[0].mxu0
        %v1719 = vadd.f32 0.0, %v1718
        %v1720 = vpop.f32.mrb[0].mxu0
        %1721 = vmatprep.mubr.bf16.mxu0 0
        %1722 = vmatmul.mubr.bf16.gmra.mrb[0].mxu0 %v1212
        %v1723 = vpop.f32.mrb[0].mxu0
        %v1724 = vadd.f32 0.0, %v1723
        %v1725 = vpop.f32.mrb[0].mxu0
        %v1726 = vpop.f32.mrb[0].mxu0
        %v1727 = vadd.f32 0.0, %v1726
        %v1728 = vpop.f32.mrb[0].mxu0
        %1729 = vmatprep.mubr.bf16.mxu0 0
        %1730 = vmatmul.mubr.bf16.gmra.mrb[0].mxu0 %v1215
        %v1731 = vpop.f32.mrb[0].mxu0
        %v1732 = vadd.f32 0.0, %v1731
        %v1733 = vpop.f32.mrb[0].mxu0
        %v1734 = vpop.f32.mrb[0].mxu0
        %v1735 = vadd.f32 0.0, %v1734
        %v1736 = vpop.f32.mrb[0].mxu0
        %1737 = vmatprep.mubr.bf16.mxu0 0
        %1738 = vmatmul.mubr.bf16.gmra.mrb[0].mxu0 %v1218
        %v1739 = vpop.f32.mrb[0].mxu0
        %v1740 = vadd.f32 0.0, %v1739
        %v1741 = vpop.f32.mrb[0].mxu0
        %v1742 = vpop.f32.mrb[0].mxu0
        %v1743 = vadd.f32 0.0, %v1742
        %v1744 = vpop.f32.mrb[0].mxu0
        %1745 = vmatprep.mubr.bf16.mxu0 0
        %1746 = vmatmul.mubr.bf16.gmra.mrb[0].mxu0 %v1221
        %v1747 = vpop.f32.mrb[0].mxu0
        %v1748 = vadd.f32 0.0, %v1747
        %v1749 = vpop.f32.mrb[0].mxu0
        %v1750 = vpop.f32.mrb[0].mxu0
        %v1751 = vadd.f32 0.0, %v1750
        %v1752 = vpop.f32.mrb[0].mxu0
        %1753 = vmatprep.mubr.bf16.mxu0 0
        %1754 = vmatmul.mubr.bf16.gmra.mrb[0].mxu0 %v1224
        %v1755 = vpop.f32.mrb[0].mxu0
        %v1756 = vadd.f32 0.0, %v1755
        %v1757 = vpop.f32.mrb[0].mxu0
        %v1758 = vpop.f32.mrb[0].mxu0
        %v1759 = vadd.f32 0.0, %v1758
        %v1760 = vpop.f32.mrb[0].mxu0
        %1761 = vmatprep.mubr.bf16.mxu0 0
        %1762 = vmatmul.mubr.bf16.gmra.mrb[0].mxu0 %v1227
        %v1763 = vpop.f32.mrb[0].mxu0
        %v1764 = vadd.f32 0.0, %v1763
        %v1765 = vpop.f32.mrb[0].mxu0
        %v1766 = vpop.f32.mrb[0].mxu0
        %v1767 = vadd.f32 0.0, %v1766
        %v1768 = vpop.f32.mrb[0].mxu0
        %1769 = vmatprep.mubr.bf16.mxu0 0
        %1770 = vmatmul.mubr.bf16.gmra.mrb[0].mxu0 %v1230
        %v1771 = vpop.f32.mrb[0].mxu0
        %v1772 = vadd.f32 0.0, %v1771
        %v1773 = vpop.f32.mrb[0].mxu0
        %v1774 = vpop.f32.mrb[0].mxu0
        %v1775 = vadd.f32 0.0, %v1774
        %v1776 = vpop.f32.mrb[0].mxu0
        %1777 = vmatprep.mubr.bf16.mxu0 0
        %1778 = vmatmul.mubr.bf16.gmra.mrb[0].mxu0 %v1233
        %v1779 = vpop.f32.mrb[0].mxu0
        %v1780 = vadd.f32 0.0, %v1779
        %v1781 = vpop.f32.mrb[0].mxu0
        %v1782 = vpop.f32.mrb[0].mxu0
        %v1783 = vadd.f32 0.0, %v1782
        %v1784 = vpop.f32.mrb[0].mxu0
        %1785 = vmatprep.mubr.bf16.mxu0 0
        %1786 = vmatmul.mubr.bf16.gmra.mrb[0].mxu0 %v1236
        %v1787 = vpop.f32.mrb[0].mxu0
        %v1788 = vadd.f32 0.0, %v1787
        %v1789 = vpop.f32.mrb[0].mxu0
        %v1790 = vpop.f32.mrb[0].mxu0
        %v1791 = vadd.f32 0.0, %v1790
        %v1792 = vpop.f32.mrb[0].mxu0
        %1793 = vmatprep.mubr.bf16.mxu0 0
        %1794 = vmatmul.mubr.bf16.gmra.mrb[0].mxu0 %v1239
        %v1795 = vpop.f32.mrb[0].mxu0
        %v1796 = vadd.f32 0.0, %v1795
        %v1797 = vpop.f32.mrb[0].mxu0
        %v1798 = vpop.f32.mrb[0].mxu0
        %v1799 = vadd.f32 0.0, %v1798
        %v1800 = vpop.f32.mrb[0].mxu0
        %1801 = vmatprep.mubr.bf16.mxu0 0
        %1802 = vmatmul.mubr.bf16.gmra.mrb[0].mxu0 %v1242
        %v1803 = vpop.f32.mrb[0].mxu0
        %v1804 = vadd.f32 0.0, %v1803
        %v1805 = vpop.f32.mrb[0].mxu0
        %v1806 = vpop.f32.mrb[0].mxu0
        %v1807 = vadd.f32 0.0, %v1806
        %v1808 = vpop.f32.mrb[0].mxu0
        %1809 = vmatprep.mubr.bf16.mxu0 0
        %1810 = vmatmul.mubr.bf16.gmra.mrb[0].mxu0 %v1245
        %v1811 = vpop.f32.mrb[0].mxu0
        %v1812 = vadd.f32 0.0, %v1811
        %v1813 = vpop.f32.mrb[0].mxu0
        %v1814 = vpop.f32.mrb[0].mxu0
        %v1815 = vadd.f32 0.0, %v1814
        %v1816 = vpop.f32.mrb[0].mxu0
        %1817 = vmatprep.mubr.bf16.mxu0 0
        %1818 = vmatmul.mubr.bf16.gmra.mrb[0].mxu0 %v1248
        %v1819 = vpop.f32.mrb[0].mxu0
        %v1820 = vadd.f32 0.0, %v1819
        %v1821 = vpop.f32.mrb[0].mxu0
        %v1822 = vpop.f32.mrb[0].mxu0
        %v1823 = vadd.f32 0.0, %v1822
        %v1824 = vpop.f32.mrb[0].mxu0
        %1825 = vmatprep.mubr.bf16.mxu0 0
        %1826 = vmatmul.mubr.bf16.gmra.mrb[0].mxu0 %v1251
        %v1827 = vpop.f32.mrb[0].mxu0
        %v1828 = vadd.f32 0.0, %v1827
        %v1829 = vpop.f32.mrb[0].mxu0
        %v1830 = vpop.f32.mrb[0].mxu0
        %v1831 = vadd.f32 0.0, %v1830
        %v1832 = vpop.f32.mrb[0].mxu0
        %1833 = vmatprep.mubr.bf16.mxu0 0
        %1834 = vmatmul.mubr.bf16.gmra.mrb[0].mxu0 %v1254
        %v1835 = vpop.f32.mrb[0].mxu0
        %v1836 = vadd.f32 0.0, %v1835
        %v1837 = vpop.f32.mrb[0].mxu0
        %v1838 = vpop.f32.mrb[0].mxu0
        %v1839 = vadd.f32 0.0, %v1838
        %v1840 = vpop.f32.mrb[0].mxu0
        %1841 = vmatprep.mubr.bf16.mxu0 0
        %1842 = vmatmul.mubr.bf16.gmra.mrb[0].mxu0 %v1257
        %v1843 = vpop.f32.mrb[0].mxu0
        %v1844 = vadd.f32 0.0, %v1843
        %v1845 = vpop.f32.mrb[0].mxu0
        %v1846 = vpop.f32.mrb[0].mxu0
        %v1847 = vadd.f32 0.0, %v1846
        %v1848 = vpop.f32.mrb[0].mxu0
        %1849 = vmatprep.mubr.bf16.mxu0 0
        %1850 = vmatmul.mubr.bf16.gmra.mrb[0].mxu0 %v1260
        %v1851 = vpop.f32.mrb[0].mxu0
        %v1852 = vadd.f32 0.0, %v1851
        %v1853 = vpop.f32.mrb[0].mxu0
        %v1854 = vpop.f32.mrb[0].mxu0
        %v1855 = vadd.f32 0.0, %v1854
        %v1856 = vpop.f32.mrb[0].mxu0
        %1857 = vmatprep.mubr.bf16.mxu0 0
        %1858 = vmatmul.mubr.bf16.gmra.mrb[0].mxu0 %v1263
        %v1859 = vpop.f32.mrb[0].mxu0
        %v1860 = vadd.f32 0.0, %v1859
        %v1861 = vpop.f32.mrb[0].mxu0
        %v1862 = vpop.f32.mrb[0].mxu0
        %v1863 = vadd.f32 0.0, %v1862
        %v1864 = vpop.f32.mrb[0].mxu0
        %1865 = vmatprep.mubr.bf16.mxu0 0
        %1866 = vmatmul.mubr.bf16.gmra.mrb[0].mxu0 %v1266
        %v1867 = vpop.f32.mrb[0].mxu0
        %v1868 = vadd.f32 0.0, %v1867
        %v1869 = vpop.f32.mrb[0].mxu0
        %v1870 = vpop.f32.mrb[0].mxu0
        %v1871 = vadd.f32 0.0, %v1870
        %v1872 = vpop.f32.mrb[0].mxu0
        %1873 = vmatprep.mubr.bf16.mxu0 0
        %1874 = vmatmul.mubr.bf16.gmra.mrb[0].mxu0 %v1269
        %v1875 = vpop.f32.mrb[0].mxu0
        %v1876 = vadd.f32 0.0, %v1875
        %v1877 = vpop.f32.mrb[0].mxu0
        %v1878 = vpop.f32.mrb[0].mxu0
        %v1879 = vadd.f32 0.0, %v1878
        %v1880 = vpop.f32.mrb[0].mxu0
        %1881 = vmatprep.mubr.bf16.mxu0 0
        %1882 = vmatmul.mubr.bf16.gmra.mrb[0].mxu0 %v1272
        %v1883 = vpop.f32.mrb[0].mxu0
        %v1884 = vadd.f32 0.0, %v1883
        %v1885 = vpop.f32.mrb[0].mxu0
        %v1886 = vpop.f32.mrb[0].mxu0
        %v1887 = vadd.f32 0.0, %v1886
        %v1888 = vpop.f32.mrb[0].mxu0
        %1889 = vmatprep.mubr.bf16.mxu0 0
        %1890 = vmatmul.mubr.bf16.gmra.mrb[0].mxu0 %v1275
        %v1891 = vpop.f32.mrb[0].mxu0
        %v1892 = vadd.f32 0.0, %v1891
        %v1893 = vpop.f32.mrb[0].mxu0
        %v1894 = vpop.f32.mrb[0].mxu0
        %v1895 = vadd.f32 0.0, %v1894
        %v1896 = vpop.f32.mrb[0].mxu0
        %1897 = vmatprep.mubr.bf16.mxu0 0
        %1898 = vmatmul.mubr.bf16.gmra.mrb[0].mxu0 %v1278
        %v1899 = vpop.f32.mrb[0].mxu0
        %v1900 = vadd.f32 0.0, %v1899
        %v1901 = vpop.f32.mrb[0].mxu0
        %v1902 = vpop.f32.mrb[0].mxu0
        %v1903 = vadd.f32 0.0, %v1902
        %v1904 = vpop.f32.mrb[0].mxu0
        %1905 = vmatprep.mubr.bf16.mxu0 0
        %1906 = vmatmul.mubr.bf16.gmra.mrb[0].mxu0 %v1281
        %v1907 = vpop.f32.mrb[0].mxu0
        %v1908 = vadd.f32 0.0, %v1907
        %v1909 = vpop.f32.mrb[0].mxu0
        %v1910 = vpop.f32.mrb[0].mxu0
        %v1911 = vadd.f32 0.0, %v1910
        %v1912 = vpop.f32.mrb[0].mxu0
        %1913 = vmatprep.mubr.bf16.mxu0 0
        %1914 = vmatmul.mubr.bf16.gmra.mrb[0].mxu0 %v1284
        %v1915 = vpop.f32.mrb[0].mxu0
        %v1916 = vadd.f32 0.0, %v1915
        %v1917 = vpop.f32.mrb[0].mxu0
        %v1918 = vpop.f32.mrb[0].mxu0
        %v1919 = vadd.f32 0.0, %v1918
        %v1920 = vpop.f32.mrb[0].mxu0
        %1921 = vmatprep.mubr.bf16.mxu0 0
        %1922 = vmatmul.mubr.bf16.gmra.mrb[0].mxu0 %v1287
        %v1923 = vpop.f32.mrb[0].mxu0
        %v1924 = vadd.f32 0.0, %v1923
        %v1925 = vpop.f32.mrb[0].mxu0
        %v1926 = vpop.f32.mrb[0].mxu0
        %v1927 = vadd.f32 0.0, %v1926
        %v1928 = vpop.f32.mrb[0].mxu0
        %1929 = vmatprep.mubr.bf16.mxu0 0
        %1930 = vmatmul.mubr.bf16.gmra.mrb[0].mxu0 %v1290
        %v1931 = vpop.f32.mrb[0].mxu0
        %v1932 = vadd.f32 0.0, %v1931
        %v1933 = vpop.f32.mrb[0].mxu0
        %v1934 = vpop.f32.mrb[0].mxu0
        %v1935 = vadd.f32 0.0, %v1934
        %v1936 = vpop.f32.mrb[0].mxu0
        %1937 = vmatprep.mubr.bf16.mxu0 0
        %1938 = vmatmul.mubr.bf16.gmra.mrb[0].mxu0 %v1293
        %v1939 = vpop.f32.mrb[0].mxu0
        %v1940 = vadd.f32 0.0, %v1939
        %v1941 = vpop.f32.mrb[0].mxu0
        %v1942 = vpop.f32.mrb[0].mxu0
        %v1943 = vadd.f32 0.0, %v1942
        %v1944 = vpop.f32.mrb[0].mxu0
        %1945 = vmatprep.mubr.bf16.mxu0 0
        %1946 = vmatmul.mubr.bf16.gmra.mrb[0].mxu0 %v1296
        %v1947 = vpop.f32.mrb[0].mxu0
        %v1948 = vadd.f32 0.0, %v1947
        %v1949 = vpop.f32.mrb[0].mxu0
        %v1950 = vpop.f32.mrb[0].mxu0
        %v1951 = vadd.f32 0.0, %v1950
        %v1952 = vpop.f32.mrb[0].mxu0
        %1953 = vmatprep.mubr.bf16.mxu0 0
        %1954 = vmatmul.mubr.bf16.gmra.mrb[0].mxu0 %v1299
        %v1955 = vpop.f32.mrb[0].mxu0
        %v1956 = vadd.f32 0.0, %v1955
        %v1957 = vpop.f32.mrb[0].mxu0
        %v1958 = vpop.f32.mrb[0].mxu0
        %v1959 = vadd.f32 0.0, %v1958
        %v1960 = vpop.f32.mrb[0].mxu0
        %1961 = vmatprep.mubr.bf16.mxu0 0
        %1962 = vmatmul.mubr.bf16.gmra.mrb[0].mxu0 %v1302
        %v1963 = vpop.f32.mrb[0].mxu0
        %v1964 = vadd.f32 0.0, %v1963
        %v1965 = vpop.f32.mrb[0].mxu0
        %v1966 = vpop.f32.mrb[0].mxu0
        %v1967 = vadd.f32 0.0, %v1966
        %v1968 = vpop.f32.mrb[0].mxu0
        %1969 = vmatprep.mubr.bf16.mxu0 0
        %1970 = vmatmul.mubr.bf16.gmra.mrb[0].mxu0 %v1305
        %v1971 = vpop.f32.mrb[0].mxu0
        %v1972 = vadd.f32 0.0, %v1971
        %v1973 = vpop.f32.mrb[0].mxu0
        %v1974 = vpop.f32.mrb[0].mxu0
        %v1975 = vadd.f32 0.0, %v1974
        %v1976 = vpop.f32.mrb[0].mxu0
        %1977 = vmatprep.mubr.bf16.mxu0 0
        %1978 = vmatmul.mubr.bf16.gmra.mrb[0].mxu0 %v1308
        %v1979 = vpop.f32.mrb[0].mxu0
        %v1980 = vadd.f32 0.0, %v1979
        %v1981 = vpop.f32.mrb[0].mxu0
        %v1982 = vpop.f32.mrb[0].mxu0
        %v1983 = vadd.f32 0.0, %v1982
        %v1984 = vpop.f32.mrb[0].mxu0
        %1985 = vmatprep.mubr.bf16.mxu0 0
        %1986 = vmatmul.mubr.bf16.gmra.mrb[0].mxu0 %v1311
        %v1987 = vpop.f32.mrb[0].mxu0
        %v1988 = vadd.f32 0.0, %v1987
        %v1989 = vpop.f32.mrb[0].mxu0
        %v1990 = vpop.f32.mrb[0].mxu0
        %v1991 = vadd.f32 0.0, %v1990
        %v1992 = vpop.f32.mrb[0].mxu0
        %1993 = vmatprep.mubr.bf16.mxu0 0
        %1994 = vmatmul.mubr.bf16.gmra.mrb[0].mxu0 %v1314
        %v1995 = vpop.f32.mrb[0].mxu0
        %v1996 = vadd.f32 0.0, %v1995
        %v1997 = vpop.f32.mrb[0].mxu0
        %v1998 = vpop.f32.mrb[0].mxu0
        %v1999 = vadd.f32 0.0, %v1998
        %v2000 = vpop.f32.mrb[0].mxu0
        %2001 = vmatprep.mubr.bf16.mxu0 0
        %2002 = vmatmul.mubr.bf16.gmra.mrb[0].mxu0 %v1317
        %v2003 = vpop.f32.mrb[0].mxu0
        %v2004 = vadd.f32 0.0, %v2003
        %v2005 = vpop.f32.mrb[0].mxu0
        %v2006 = vpop.f32.mrb[0].mxu0
        %v2007 = vadd.f32 0.0, %v2006
        %v2008 = vpop.f32.mrb[0].mxu0
        %2009 = vmatprep.mubr.bf16.mxu0 0
        %2010 = vmatmul.mubr.bf16.gmra.mrb[0].mxu0 %v1320
        %v2011 = vpop.f32.mrb[0].mxu0
        %v2012 = vadd.f32 0.0, %v2011
        %v2013 = vpop.f32.mrb[0].mxu0
        %v2014 = vpop.f32.mrb[0].mxu0
        %v2015 = vadd.f32 0.0, %v2014
        %v2016 = vpop.f32.mrb[0].mxu0
        %2017 = vmatprep.mubr.bf16.mxu0 0
        %2018 = vmatmul.mubr.bf16.gmra.mrb[0].mxu0 %v1323
        %v2019 = vpop.f32.mrb[0].mxu0
        %v2020 = vadd.f32 0.0, %v2019
        %v2021 = vpop.f32.mrb[0].mxu0
        %v2022 = vpop.f32.mrb[0].mxu0
        %v2023 = vadd.f32 0.0, %v2022
        %v2024 = vpop.f32.mrb[0].mxu0
        %2025 = vmatprep.mubr.bf16.mxu0 0
        %2026 = vmatmul.mubr.bf16.gmra.mrb[0].mxu0 %v1326
        %v2027 = vpop.f32.mrb[0].mxu0
        %v2028 = vadd.f32 0.0, %v2027
        %v2029 = vpop.f32.mrb[0].mxu0
        %v2030 = vpop.f32.mrb[0].mxu0
        %v2031 = vadd.f32 0.0, %v2030
        %v2032 = vpop.f32.mrb[0].mxu0
        %2033 = vmatprep.mubr.bf16.mxu0 0
        %2034 = vmatmul.mubr.bf16.gmra.mrb[0].mxu0 %v1329
        %v2035 = vpop.f32.mrb[0].mxu0
        %v2036 = vadd.f32 0.0, %v2035
        %v2037 = vpop.f32.mrb[0].mxu0
        %v2038 = vpop.f32.mrb[0].mxu0
        %v2039 = vadd.f32 0.0, %v2038
        %v2040 = vpop.f32.mrb[0].mxu0
        %2041 = vmatprep.mubr.bf16.mxu0 0
        %2042 = vmatmul.mubr.bf16.gmra.mrb[0].mxu0 %v1332
        %v2043 = vpop.f32.mrb[0].mxu0
        %v2044 = vadd.f32 0.0, %v2043
        %v2045 = vpop.f32.mrb[0].mxu0
        %v2046 = vpop.f32.mrb[0].mxu0
        %v2047 = vadd.f32 0.0, %v2046
        %v2048 = vpop.f32.mrb[0].mxu0
        %2049 = vmatprep.mubr.bf16.mxu0 0
        %2050 = vmatmul.mubr.bf16.gmra.mrb[0].mxu0 %v1335
        %v2051 = vpop.f32.mrb[0].mxu0
        %v2052 = vadd.f32 0.0, %v2051
        %v2053 = vpop.f32.mrb[0].mxu0
        %v2054 = vpop.f32.mrb[0].mxu0
        %v2055 = vadd.f32 0.0, %v2054
        %v2056 = vpop.f32.mrb[0].mxu0
        %2057 = vmatprep.mubr.bf16.mxu0 0
        %2058 = vmatmul.mubr.bf16.gmra.mrb[0].mxu0 %v1338
        %v2059 = vpop.f32.mrb[0].mxu0
        %v2060 = vadd.f32 0.0, %v2059
        %v2061 = vpop.f32.mrb[0].mxu0
        %v2062 = vpop.f32.mrb[0].mxu0
        %v2063 = vadd.f32 0.0, %v2062
        %v2064 = vpop.f32.mrb[0].mxu0
        %2065 = vmatprep.mubr.bf16.mxu0 0
        %2066 = vmatmul.mubr.bf16.gmra.mrb[0].mxu0 %v1341
        %v2067 = vpop.f32.mrb[0].mxu0
        %v2068 = vadd.f32 0.0, %v2067
        %v2069 = vpop.f32.mrb[0].mxu0
        %v2070 = vpop.f32.mrb[0].mxu0
        %v2071 = vadd.f32 0.0, %v2070
        %v2072 = vpop.f32.mrb[0].mxu0
        %2073 = vmatprep.mubr.bf16.mxu0 0
        %2074 = vmatmul.mubr.bf16.gmra.mrb[0].mxu0 %v1344
        %v2075 = vpop.f32.mrb[0].mxu0
        %v2076 = vadd.f32 0.0, %v2075
        %v2077 = vpop.f32.mrb[0].mxu0
        %v2078 = vpop.f32.mrb[0].mxu0
        %v2079 = vadd.f32 0.0, %v2078
        %v2080 = vpop.f32.mrb[0].mxu0
        %2081 = vmatprep.mubr.bf16.mxu0 0
        %2082 = vmatmul.mubr.bf16.gmra.mrb[0].mxu0 %v1347
        %v2083 = vpop.f32.mrb[0].mxu0
        %v2084 = vadd.f32 0.0, %v2083
        %v2085 = vpop.f32.mrb[0].mxu0
        %v2086 = vpop.f32.mrb[0].mxu0
        %v2087 = vadd.f32 0.0, %v2086
        %v2088 = vpop.f32.mrb[0].mxu0
        %2089 = vmatprep.mubr.bf16.mxu0 0
        %2090 = vmatmul.mubr.bf16.gmra.mrb[0].mxu0 %v1350
        %v2091 = vpop.f32.mrb[0].mxu0
        %v2092 = vadd.f32 0.0, %v2091
        %v2093 = vpop.f32.mrb[0].mxu0
        %v2094 = vpop.f32.mrb[0].mxu0
        %v2095 = vadd.f32 0.0, %v2094
        %v2096 = vpop.f32.mrb[0].mxu0
        %2097 = vmatprep.mubr.bf16.mxu0 0
        %2098 = vmatmul.mubr.bf16.gmra.mrb[0].mxu0 %v1353
        %v2099 = vpop.f32.mrb[0].mxu0
        %v2100 = vadd.f32 0.0, %v2099
        %v2101 = vpop.f32.mrb[0].mxu0
        %v2102 = vpop.f32.mrb[0].mxu0
        %v2103 = vadd.f32 0.0, %v2102
        %v2104 = vpop.f32.mrb[0].mxu0
        %2105 = vmatprep.mubr.bf16.mxu0 0
        %2106 = vmatmul.mubr.bf16.gmra.mrb[0].mxu0 %v1356
        %v2107 = vpop.f32.mrb[0].mxu0
        %v2108 = vadd.f32 0.0, %v2107
        %v2109 = vpop.f32.mrb[0].mxu0
        %v2110 = vpop.f32.mrb[0].mxu0
        %v2111 = vadd.f32 0.0, %v2110
        %v2112 = vpop.f32.mrb[0].mxu0
        %2113 = vmatprep.mubr.bf16.mxu0 0
        %2114 = vmatmul.mubr.bf16.gmra.mrb[0].mxu0 %v1359
        %v2115 = vpop.f32.mrb[0].mxu0
        %v2116 = vadd.f32 0.0, %v2115
        %v2117 = vpop.f32.mrb[0].mxu0
        %v2118 = vpop.f32.mrb[0].mxu0
        %v2119 = vadd.f32 0.0, %v2118
        %v2120 = vpop.f32.mrb[0].mxu0
        %2121 = vmatprep.mubr.bf16.mxu0 0
        %2122 = vmatmul.mubr.bf16.gmra.mrb[0].mxu0 %v1362
        %v2123 = vpop.f32.mrb[0].mxu0
        %v2124 = vadd.f32 0.0, %v2123
        %v2125 = vpop.f32.mrb[0].mxu0
        %v2126 = vpop.f32.mrb[0].mxu0
        %v2127 = vadd.f32 0.0, %v2126
        %v2128 = vpop.f32.mrb[0].mxu0
        %2129 = vmatprep.mubr.bf16.mxu0 0
        %2130 = vmatmul.mubr.bf16.gmra.mrb[0].mxu0 %v1365
        %v2131 = vpop.f32.mrb[0].mxu0
        %v2132 = vadd.f32 0.0, %v2131
        %v2133 = vpop.f32.mrb[0].mxu0
        %v2134 = vpop.f32.mrb[0].mxu0
        %v2135 = vadd.f32 0.0, %v2134
        %v2136 = vpop.f32.mrb[0].mxu0
        %2137 = vmatprep.mubr.bf16.mxu0 0
        %2138 = vmatmul.mubr.bf16.gmra.mrb[0].mxu0 %v1368
        %v2139 = vpop.f32.mrb[0].mxu0
        %v2140 = vadd.f32 0.0, %v2139
        %v2141 = vpop.f32.mrb[0].mxu0
        %v2142 = vpop.f32.mrb[0].mxu0
        %v2143 = vadd.f32 0.0, %v2142
        %v2144 = vpop.f32.mrb[0].mxu0
        %2145 = vmatprep.mubr.bf16.mxu0 0
        %2146 = vmatmul.mubr.bf16.gmra.mrb[0].mxu0 %v1371
        %v2147 = vpop.f32.mrb[0].mxu0
        %v2148 = vadd.f32 0.0, %v2147
        %v2149 = vpop.f32.mrb[0].mxu0
        %v2150 = vpop.f32.mrb[0].mxu0
        %v2151 = vadd.f32 0.0, %v2150
        %v2152 = vpop.f32.mrb[0].mxu0
        %2153 = vmatprep.mubr.bf16.mxu0 0
        %2154 = vmatmul.mubr.bf16.gmra.mrb[0].mxu0 %v1374
        %v2155 = vpop.f32.mrb[0].mxu0
        %v2156 = vadd.f32 0.0, %v2155
        %v2157 = vpop.f32.mrb[0].mxu0
        %v2158 = vpop.f32.mrb[0].mxu0
        %v2159 = vadd.f32 0.0, %v2158
        %v2160 = vpop.f32.mrb[0].mxu0
        %2161 = vmatprep.mubr.bf16.mxu0 0
        %2162 = vmatmul.mubr.bf16.gmra.mrb[0].mxu0 %v1377
        %v2163 = vpop.f32.mrb[0].mxu0
        %v2164 = vadd.f32 0.0, %v2163
        %v2165 = vpop.f32.mrb[0].mxu0
        %v2166 = vpop.f32.mrb[0].mxu0
        %v2167 = vadd.f32 0.0, %v2166
        %v2168 = vpop.f32.mrb[0].mxu0
        %2169 = vmatprep.mubr.bf16.mxu0 0
        %2170 = vmatmul.mubr.bf16.gmra.mrb[0].mxu0 %v1380
        %v2171 = vpop.f32.mrb[0].mxu0
        %v2172 = vadd.f32 0.0, %v2171
        %v2173 = vpop.f32.mrb[0].mxu0
        %v2174 = vpop.f32.mrb[0].mxu0
        %v2175 = vadd.f32 0.0, %v2174
        %v2176 = vpop.f32.mrb[0].mxu0
        %2177 = vmatprep.mubr.bf16.mxu0 0
        %2178 = vmatmul.mubr.bf16.gmra.mrb[0].mxu0 %v1383
        %v2179 = vpop.f32.mrb[0].mxu0
        %v2180 = vadd.f32 0.0, %v2179
        %v2181 = vpop.f32.mrb[0].mxu0
        %v2182 = vpop.f32.mrb[0].mxu0
        %v2183 = vadd.f32 0.0, %v2182
        %v2184 = vpop.f32.mrb[0].mxu0
        %2185 = vmatprep.mubr.bf16.mxu0 0
        %2186 = vmatmul.mubr.bf16.gmra.mrb[0].mxu0 %v1386
        %v2187 = vpop.f32.mrb[0].mxu0
        %v2188 = vadd.f32 0.0, %v2187
        %v2189 = vpop.f32.mrb[0].mxu0
        %v2190 = vpop.f32.mrb[0].mxu0
        %v2191 = vadd.f32 0.0, %v2190
        %v2192 = vpop.f32.mrb[0].mxu0
        %2193 = vmatprep.mubr.bf16.mxu0 0
        %2194 = vmatmul.mubr.bf16.gmra.mrb[0].mxu0 %v1389
        %v2195 = vpop.f32.mrb[0].mxu0
        %v2196 = vadd.f32 0.0, %v2195
        %v2197 = vpop.f32.mrb[0].mxu0
        %v2198 = vpop.f32.mrb[0].mxu0
        %v2199 = vadd.f32 0.0, %v2198
        %v2200 = vpop.f32.mrb[0].mxu0
        %2201 = vmatprep.mubr.bf16.mxu0 0
        %2202 = vmatmul.mubr.bf16.gmra.mrb[0].mxu0 %v1392
        %v2203 = vpop.f32.mrb[0].mxu0
        %v2204 = vadd.f32 0.0, %v2203
        %v2205 = vpop.f32.mrb[0].mxu0
        %v2206 = vpop.f32.mrb[0].mxu0
        %v2207 = vadd.f32 0.0, %v2206
        %v2208 = vpop.f32.mrb[0].mxu0
        %2209 = vmatprep.mubr.bf16.mxu0 0
        %2210 = vmatmul.mubr.bf16.gmra.mrb[0].mxu0 %v1395
        %v2211 = vpop.f32.mrb[0].mxu0
        %v2212 = vadd.f32 0.0, %v2211
        %v2213 = vpop.f32.mrb[0].mxu0
        %v2214 = vpop.f32.mrb[0].mxu0
        %v2215 = vadd.f32 0.0, %v2214
        %v2216 = vpop.f32.mrb[0].mxu0
        %2217 = vmatprep.mubr.bf16.mxu0 0
        %2218 = vmatmul.mubr.bf16.gmra.mrb[0].mxu0 %v1398
        %v2219 = vpop.f32.mrb[0].mxu0
        %v2220 = vadd.f32 0.0, %v2219
        %v2221 = vpop.f32.mrb[0].mxu0
        %v2222 = vpop.f32.mrb[0].mxu0
        %v2223 = vadd.f32 0.0, %v2222
        %v2224 = vpop.f32.mrb[0].mxu0
        %2225 = vmatprep.mubr.bf16.mxu0 0
        %2226 = vmatmul.mubr.bf16.gmra.mrb[0].mxu0 %v1401
        %v2227 = vpop.f32.mrb[0].mxu0
        %v2228 = vadd.f32 0.0, %v2227
        %v2229 = vpop.f32.mrb[0].mxu0
        %v2230 = vpop.f32.mrb[0].mxu0
        %v2231 = vadd.f32 0.0, %v2230
        %v2232 = vpop.f32.mrb[0].mxu0
        %2233 = vmatprep.mubr.bf16.mxu0 0
        %2234 = vmatmul.mubr.bf16.gmra.mrb[0].mxu0 %v1404
        %v2235 = vpop.f32.mrb[0].mxu0
        %v2236 = vadd.f32 0.0, %v2235
        %v2237 = vpop.f32.mrb[0].mxu0
        %v2238 = vpop.f32.mrb[0].mxu0
        %v2239 = vadd.f32 0.0, %v2238
        %v2240 = vpop.f32.mrb[0].mxu0
        %2241 = vmatprep.mubr.bf16.mxu0 0
        %2242 = vmatmul.mubr.bf16.gmra.mrb[0].mxu0 %v1407
        %v2243 = vpop.f32.mrb[0].mxu0
        %v2244 = vadd.f32 0.0, %v2243
        %v2245 = vpop.f32.mrb[0].mxu0
        %v2246 = vpop.f32.mrb[0].mxu0
        %v2247 = vadd.f32 0.0, %v2246
        %v2248 = vpop.f32.mrb[0].mxu0
        %2249 = vmatprep.mubr.bf16.mxu0 0
        %2250 = vmatmul.mubr.bf16.gmra.mrb[0].mxu0 %v1410
        %v2251 = vpop.f32.mrb[0].mxu0
        %v2252 = vadd.f32 0.0, %v2251
        %v2253 = vpop.f32.mrb[0].mxu0
        %v2254 = vpop.f32.mrb[0].mxu0
        %v2255 = vadd.f32 0.0, %v2254
        %v2256 = vpop.f32.mrb[0].mxu0
        %2257 = vmatprep.mubr.bf16.mxu0 0
        %2258 = vmatmul.mubr.bf16.gmra.mrb[0].mxu0 %v1413
        %v2259 = vpop.f32.mrb[0].mxu0
        %v2260 = vadd.f32 0.0, %v2259
        %v2261 = vpop.f32.mrb[0].mxu0
        %v2262 = vpop.f32.mrb[0].mxu0
        %v2263 = vadd.f32 0.0, %v2262
        %v2264 = vpop.f32.mrb[0].mxu0
        %2265 = vmatprep.mubr.bf16.mxu0 0
        %2266 = vmatmul.mubr.bf16.gmra.mrb[0].mxu0 %v1416
        %v2267 = vpop.f32.mrb[0].mxu0
        %v2268 = vadd.f32 0.0, %v2267
        %v2269 = vpop.f32.mrb[0].mxu0
        %v2270 = vpop.f32.mrb[0].mxu0
        %v2271 = vadd.f32 0.0, %v2270
        %v2272 = vpop.f32.mrb[0].mxu0
        %2273 = vmatprep.mubr.bf16.mxu0 0
        %2274 = vmatmul.mubr.bf16.gmra.mrb[0].mxu0 %v1419
        %v2275 = vpop.f32.mrb[0].mxu0
        %v2276 = vadd.f32 0.0, %v2275
        %v2277 = vpop.f32.mrb[0].mxu0
        %v2278 = vpop.f32.mrb[0].mxu0
        %v2279 = vadd.f32 0.0, %v2278
        %v2280 = vpop.f32.mrb[0].mxu0
        %2281 = vmatprep.mubr.bf16.mxu0 0
        %2282 = vmatmul.mubr.bf16.gmra.mrb[0].mxu0 %v1422
        %v2283 = vpop.f32.mrb[0].mxu0
        %v2284 = vadd.f32 0.0, %v2283
        %v2285 = vpop.f32.mrb[0].mxu0
        %v2286 = vpop.f32.mrb[0].mxu0
        %v2287 = vadd.f32 0.0, %v2286
        %v2288 = vpop.f32.mrb[0].mxu0
        %2289 = vmatprep.mubr.bf16.mxu0 0
        %2290 = vmatmul.mubr.bf16.gmra.mrb[0].mxu0 %v1425
        %v2291 = vpop.f32.mrb[0].mxu0
        %v2292 = vadd.f32 0.0, %v2291
        %v2293 = vpop.f32.mrb[0].mxu0
        %v2294 = vpop.f32.mrb[0].mxu0
        %v2295 = vadd.f32 0.0, %v2294
        %v2296 = vpop.f32.mrb[0].mxu0
        %2297 = vmatprep.mubr.bf16.mxu0 0
        %2298 = vmatmul.mubr.bf16.gmra.mrb[0].mxu0 %v1428
        %v2299 = vpop.f32.mrb[0].mxu0
        %v2300 = vadd.f32 0.0, %v2299
        %v2301 = vpop.f32.mrb[0].mxu0
        %v2302 = vpop.f32.mrb[0].mxu0
        %v2303 = vadd.f32 0.0, %v2302
        %v2304 = vpop.f32.mrb[0].mxu0
        %2305 = vmatprep.mubr.bf16.mxu0 0
        %2306 = vmatmul.mubr.bf16.gmra.mrb[0].mxu0 %v1431
        %v2307 = vpop.f32.mrb[0].mxu0
        %v2308 = vadd.f32 0.0, %v2307
        %v2309 = vpop.f32.mrb[0].mxu0
        %v2310 = vpop.f32.mrb[0].mxu0
        %v2311 = vadd.f32 0.0, %v2310
        %v2312 = vpop.f32.mrb[0].mxu0
        %2313 = vmatprep.mubr.bf16.mxu0 0
        %2314 = vmatmul.mubr.bf16.gmra.mrb[0].mxu0 %v1434
        %v2315 = vpop.f32.mrb[0].mxu0
        %v2316 = vadd.f32 0.0, %v2315
        %v2317 = vpop.f32.mrb[0].mxu0
        %v2318 = vpop.f32.mrb[0].mxu0
        %v2319 = vadd.f32 0.0, %v2318
        %v2320 = vpop.f32.mrb[0].mxu0
        %2321 = vmatprep.mubr.bf16.mxu0 0
        %2322 = vmatmul.mubr.bf16.gmra.mrb[0].mxu0 %v1437
        %v2323 = vpop.f32.mrb[0].mxu0
        %v2324 = vadd.f32 0.0, %v2323
        %v2325 = vpop.f32.mrb[0].mxu0
        %v2326 = vpop.f32.mrb[0].mxu0
        %v2327 = vadd.f32 0.0, %v2326
        %v2328 = vpop.f32.mrb[0].mxu0
        %2329 = vmatprep.mubr.bf16.mxu0 0
        %2330 = vmatmul.mubr.bf16.gmra.mrb[0].mxu0 %v1440
        %v2331 = vpop.f32.mrb[0].mxu0
        %v2332 = vadd.f32 0.0, %v2331
        %v2333 = vpop.f32.mrb[0].mxu0
        %v2334 = vpop.f32.mrb[0].mxu0
        %v2335 = vadd.f32 0.0, %v2334
        %v2336 = vpop.f32.mrb[0].mxu0
        %2337 = vmatprep.mubr.bf16.mxu0 0
        %2338 = vmatmul.mubr.bf16.gmra.mrb[0].mxu0 %v1443
        %v2339 = vpop.f32.mrb[0].mxu0
        %v2340 = vadd.f32 0.0, %v2339
        %v2341 = vpop.f32.mrb[0].mxu0
        %v2342 = vpop.f32.mrb[0].mxu0
        %v2343 = vadd.f32 0.0, %v2342
        %v2344 = vpop.f32.mrb[0].mxu0
        %2345 = vmatprep.mubr.bf16.mxu0 0
        %2346 = vmatmul.mubr.bf16.gmra.mrb[0].mxu0 %v1446
        %v2347 = vpop.f32.mrb[0].mxu0
        %v2348 = vadd.f32 0.0, %v2347
        %v2349 = vpop.f32.mrb[0].mxu0
        %v2350 = vpop.f32.mrb[0].mxu0
        %v2351 = vadd.f32 0.0, %v2350
        %v2352 = vpop.f32.mrb[0].mxu0
        %2353 = vmatprep.mubr.bf16.mxu0 0
        %2354 = vmatmul.mubr.bf16.gmra.mrb[0].mxu0 %v1449
        %v2355 = vpop.f32.mrb[0].mxu0
        %v2356 = vadd.f32 0.0, %v2355
        %v2357 = vpop.f32.mrb[0].mxu0
        %v2358 = vpop.f32.mrb[0].mxu0
        %v2359 = vadd.f32 0.0, %v2358
        %v2360 = vpop.f32.mrb[0].mxu0
        %2361 = vmatprep.mubr.bf16.mxu0 0
        %2362 = vmatmul.mubr.bf16.gmra.mrb[0].mxu0 %v1452
        %v2363 = vpop.f32.mrb[0].mxu0
        %v2364 = vadd.f32 0.0, %v2363
        %v2365 = vpop.f32.mrb[0].mxu0
        %v2366 = vpop.f32.mrb[0].mxu0
        %v2367 = vadd.f32 0.0, %v2366
        %v2368 = vpop.f32.mrb[0].mxu0
        %2369 = vmatprep.mubr.bf16.mxu0 0
        %2370 = vmatmul.mubr.bf16.gmra.mrb[0].mxu0 %v1455
        %v2371 = vpop.f32.mrb[0].mxu0
        %v2372 = vadd.f32 0.0, %v2371
        %v2373 = vpop.f32.mrb[0].mxu0
        %v2374 = vpop.f32.mrb[0].mxu0
        %v2375 = vadd.f32 0.0, %v2374
        %v2376 = vpop.f32.mrb[0].mxu0
        %2377 = vmatprep.mubr.bf16.mxu0 0
        %2378 = vmatmul.mubr.bf16.gmra.mrb[0].mxu0 %v1458
        %v2379 = vpop.f32.mrb[0].mxu0
        %v2380 = vadd.f32 0.0, %v2379
        %v2381 = vpop.f32.mrb[0].mxu0
        %v2382 = vpop.f32.mrb[0].mxu0
        %v2383 = vadd.f32 0.0, %v2382
        %v2384 = vpop.f32.mrb[0].mxu0
        %2385 = vmatprep.mubr.bf16.mxu0 0
        %2386 = vmatmul.mubr.bf16.gmra.mrb[0].mxu0 %v1461
        %v2387 = vpop.f32.mrb[0].mxu0
        %v2388 = vadd.f32 0.0, %v2387
        %v2389 = vpop.f32.mrb[0].mxu0
        %v2390 = vpop.f32.mrb[0].mxu0
        %v2391 = vadd.f32 0.0, %v2390
        %v2392 = vpop.f32.mrb[0].mxu0
        %2393 = vmatprep.mubr.bf16.mxu0 0
        %2394 = vmatmul.mubr.bf16.gmra.mrb[0].mxu0 %v1464
        %v2395 = vpop.f32.mrb[0].mxu0
        %v2396 = vadd.f32 0.0, %v2395
        %v2397 = vpop.f32.mrb[0].mxu0
        %v2398 = vpop.f32.mrb[0].mxu0
        %v2399 = vadd.f32 0.0, %v2398
        %v2400 = vpop.f32.mrb[0].mxu0
        %2401 = vmatprep.mubr.bf16.mxu0 0
        %2402 = vmatmul.mubr.bf16.gmra.mrb[0].mxu0 %v1467
        %v2403 = vpop.f32.mrb[0].mxu0
        %v2404 = vadd.f32 0.0, %v2403
        %v2405 = vpop.f32.mrb[0].mxu0
        %v2406 = vpop.f32.mrb[0].mxu0
        %v2407 = vadd.f32 0.0, %v2406
        %v2408 = vpop.f32.mrb[0].mxu0
        %2409 = vmatprep.mubr.bf16.mxu0 0
        %2410 = vmatmul.mubr.bf16.gmra.mrb[0].mxu0 %v1470
        %v2411 = vpop.f32.mrb[0].mxu0
        %v2412 = vadd.f32 0.0, %v2411
        %v2413 = vpop.f32.mrb[0].mxu0
        %v2414 = vpop.f32.mrb[0].mxu0
        %v2415 = vadd.f32 0.0, %v2414
        %v2416 = vpop.f32.mrb[0].mxu0
        %2417 = vmatprep.mubr.bf16.mxu0 0
        %2418 = vmatmul.mubr.bf16.gmra.mrb[0].mxu0 %v1473
        %v2419 = vpop.f32.mrb[0].mxu0
        %v2420 = vadd.f32 0.0, %v2419
        %v2421 = vpop.f32.mrb[0].mxu0
        %v2422 = vpop.f32.mrb[0].mxu0
        %v2423 = vadd.f32 0.0, %v2422
        %v2424 = vpop.f32.mrb[0].mxu0
        %2425 = vmatprep.mubr.bf16.mxu0 0
        %2426 = vmatmul.mubr.bf16.gmra.mrb[0].mxu0 %v1476
        %v2427 = vpop.f32.mrb[0].mxu0
        %v2428 = vadd.f32 0.0, %v2427
        %v2429 = vpop.f32.mrb[0].mxu0
        %v2430 = vpop.f32.mrb[0].mxu0
        %v2431 = vadd.f32 0.0, %v2430
        %v2432 = vpop.f32.mrb[0].mxu0
        %2433 = vmatprep.mubr.bf16.mxu0 0
        %2434 = vmatmul.mubr.bf16.gmra.mrb[0].mxu0 %v1479
        %v2435 = vpop.f32.mrb[0].mxu0
        %v2436 = vadd.f32 0.0, %v2435
        %v2437 = vpop.f32.mrb[0].mxu0
        %v2438 = vpop.f32.mrb[0].mxu0
        %v2439 = vadd.f32 0.0, %v2438
        %v2440 = vpop.f32.mrb[0].mxu0
        %2441 = vmatprep.mubr.bf16.mxu0 0
        %2442 = vmatmul.mubr.bf16.gmra.mrb[0].mxu0 %v1482
        %v2443 = vpop.f32.mrb[0].mxu0
        %v2444 = vadd.f32 0.0, %v2443
        %v2445 = vpop.f32.mrb[0].mxu0
        %v2446 = vpop.f32.mrb[0].mxu0
        %v2447 = vadd.f32 0.0, %v2446
        %v2448 = vpop.f32.mrb[0].mxu0
        %2449 = vmatprep.mubr.bf16.mxu0 0
        %2450 = vmatmul.mubr.bf16.gmra.mrb[0].mxu0 %v1485
        %v2451 = vpop.f32.mrb[0].mxu0
        %v2452 = vadd.f32 0.0, %v2451
        %v2453 = vpop.f32.mrb[0].mxu0
        %v2454 = vpop.f32.mrb[0].mxu0
        %v2455 = vadd.f32 0.0, %v2454
        %v2456 = vpop.f32.mrb[0].mxu0
        %2457 = vmatprep.mubr.bf16.mxu0 0
        %2458 = vmatmul.mubr.bf16.gmra.mrb[0].mxu0 %v1488
        %v2459 = vpop.f32.mrb[0].mxu0
        %v2460 = vadd.f32 0.0, %v2459
        %v2461 = vpop.f32.mrb[0].mxu0
        %v2462 = vpop.f32.mrb[0].mxu0
        %v2463 = vadd.f32 0.0, %v2462
        %v2464 = vpop.f32.mrb[0].mxu0
        %2465 = vmatprep.mubr.bf16.mxu0 0
        %2466 = vmatmul.mubr.bf16.gmra.mrb[0].mxu0 %v1491
        %v2467 = vpop.f32.mrb[0].mxu0
        %v2468 = vadd.f32 0.0, %v2467
        %v2469 = vpop.f32.mrb[0].mxu0
        %v2470 = vpop.f32.mrb[0].mxu0
        %v2471 = vadd.f32 0.0, %v2470
        %v2472 = vpop.f32.mrb[0].mxu0
        %2473 = vmatprep.mubr.bf16.mxu0 0
        %2474 = vmatmul.mubr.bf16.gmra.mrb[0].mxu0 %v1494
        %v2475 = vpop.f32.mrb[0].mxu0
        %v2476 = vadd.f32 0.0, %v2475
        %v2477 = vpop.f32.mrb[0].mxu0
        %v2478 = vpop.f32.mrb[0].mxu0
        %v2479 = vadd.f32 0.0, %v2478
        %v2480 = vpop.f32.mrb[0].mxu0
        %2481 = vmatprep.mubr.bf16.mxu0 0
        %2482 = vmatmul.mubr.bf16.gmra.mrb[0].mxu0 %v1497
        %v2483 = vpop.f32.mrb[0].mxu0
        %v2484 = vadd.f32 0.0, %v2483
        %v2485 = vpop.f32.mrb[0].mxu0
        %v2486 = vpop.f32.mrb[0].mxu0
        %v2487 = vadd.f32 0.0, %v2486
        %v2488 = vpop.f32.mrb[0].mxu0
        %2489 = vmatprep.mubr.bf16.mxu0 0
        %2490 = vmatmul.mubr.bf16.gmra.mrb[0].mxu0 %v1500
        %v2491 = vpop.f32.mrb[0].mxu0
        %v2492 = vadd.f32 0.0, %v2491
        %v2493 = vpop.f32.mrb[0].mxu0
        %v2494 = vpop.f32.mrb[0].mxu0
        %v2495 = vadd.f32 0.0, %v2494
        %v2496 = vpop.f32.mrb[0].mxu0
        %2497 = vmatprep.mubr.bf16.mxu0 0
        %2498 = vmatmul.mubr.bf16.gmra.mrb[0].mxu0 %v1503
        %v2499 = vpop.f32.mrb[0].mxu0
        %v2500 = vadd.f32 0.0, %v2499
        %v2501 = vpop.f32.mrb[0].mxu0
        %v2502 = vpop.f32.mrb[0].mxu0
        %v2503 = vadd.f32 0.0, %v2502
        %v2504 = vpop.f32.mrb[0].mxu0
        %2505 = vmatprep.mubr.bf16.mxu0 0
        %2506 = vmatmul.mubr.bf16.gmra.mrb[0].mxu0 %v1506
        %v2507 = vpop.f32.mrb[0].mxu0
        %v2508 = vadd.f32 0.0, %v2507
        %v2509 = vpop.f32.mrb[0].mxu0
        %v2510 = vpop.f32.mrb[0].mxu0
        %v2511 = vadd.f32 0.0, %v2510
        %v2512 = vpop.f32.mrb[0].mxu0
        %2513 = vmatprep.mubr.bf16.mxu0 0
        %2514 = vmatmul.mubr.bf16.gmra.mrb[0].mxu0 %v1509
        %v2515 = vpop.f32.mrb[0].mxu0
        %v2516 = vadd.f32 0.0, %v2515
        %v2517 = vpop.f32.mrb[0].mxu0
        %v2518 = vpop.f32.mrb[0].mxu0
        %v2519 = vadd.f32 0.0, %v2518
        %v2520 = vpop.f32.mrb[0].mxu0
        %2521 = vmatprep.mubr.bf16.mxu0 0
        %2522 = vmatmul.mubr.bf16.gmra.mrb[0].mxu0 %v1512
        %v2523 = vpop.f32.mrb[0].mxu0
        %v2524 = vadd.f32 0.0, %v2523
        %v2525 = vpop.f32.mrb[0].mxu0
        %v2526 = vpop.f32.mrb[0].mxu0
        %v2527 = vadd.f32 0.0, %v2526
        %v2528 = vpop.f32.mrb[0].mxu0
        %2529 = vmatprep.mubr.bf16.mxu0 0
        %2530 = vmatmul.mubr.bf16.gmra.mrb[0].mxu0 %v1515
        %v2531 = vpop.f32.mrb[0].mxu0
        %v2532 = vadd.f32 0.0, %v2531
        %v2533 = vpop.f32.mrb[0].mxu0
        %v2534 = vpop.f32.mrb[0].mxu0
        %v2535 = vadd.f32 0.0, %v2534
        %v2536 = vpop.f32.mrb[0].mxu0
        %2537 = vmatprep.mubr.bf16.mxu0 0
        %2538 = vmatmul.mubr.bf16.gmra.mrb[0].mxu0 %v1518
        %v2539 = vpop.f32.mrb[0].mxu0
        %v2540 = vadd.f32 0.0, %v2539
        %v2541 = vpop.f32.mrb[0].mxu0
        %v2542 = vpop.f32.mrb[0].mxu0
        %v2543 = vadd.f32 0.0, %v2542
        %v2544 = vpop.f32.mrb[0].mxu0
        %2545 = vmatprep.mubr.bf16.mxu0 0
        %2546 = vmatmul.mubr.bf16.gmra.mrb[0].mxu0 %v1521
        %v2547 = vpop.f32.mrb[0].mxu0
        %v2548 = vadd.f32 0.0, %v2547
        %v2549 = vpop.f32.mrb[0].mxu0
        %v2550 = vpop.f32.mrb[0].mxu0
        %v2551 = vadd.f32 0.0, %v2550
        %v2552 = vpop.f32.mrb[0].mxu0
        %2553 = vmatprep.mubr.bf16.mxu0 0
        %2554 = vmatmul.mubr.bf16.gmra.mrb[0].mxu0 %v1524
        %v2555 = vpop.f32.mrb[0].mxu0
        %v2556 = vadd.f32 0.0, %v2555
        %v2557 = vpop.f32.mrb[0].mxu0
        %v2558 = vpop.f32.mrb[0].mxu0
        %v2559 = vadd.f32 0.0, %v2558
        %v2560 = vpop.f32.mrb[0].mxu0
        %2561 = vmatprep.mubr.bf16.mxu0 0
        %2562 = vmatmul.mubr.bf16.gmra.mrb[0].mxu0 %v1527
        %v2563 = vpop.f32.mrb[0].mxu0
        %v2564 = vadd.f32 0.0, %v2563
        %v2565 = vpop.f32.mrb[0].mxu0
        %v2566 = vpop.f32.mrb[0].mxu0
        %v2567 = vadd.f32 0.0, %v2566
        %v2568 = vpop.f32.mrb[0].mxu0
        %2569 = vmatprep.mubr.bf16.mxu0 0
        %2570 = vmatmul.mubr.bf16.gmra.mrb[0].mxu0 %v1530
        %v2571 = vpop.f32.mrb[0].mxu0
        %v2572 = vadd.f32 0.0, %v2571
        %v2573 = vpop.f32.mrb[0].mxu0
        %v2574 = vpop.f32.mrb[0].mxu0
        %v2575 = vadd.f32 0.0, %v2574
        %v2576 = vpop.f32.mrb[0].mxu0
        %2577 = vmatprep.mubr.bf16.mxu0 0
        %2578 = vmatmul.mubr.bf16.gmra.mrb[0].mxu0 %v1533
        %v2579 = vpop.f32.mrb[0].mxu0
        %v2580 = vadd.f32 0.0, %v2579
        %v2581 = vpop.f32.mrb[0].mxu0
        %v2582 = vpop.f32.mrb[0].mxu0
        %v2583 = vadd.f32 0.0, %v2582
        %v2584 = vpop.f32.mrb[0].mxu0
        %2585 = vmatprep.mubr.bf16.mxu0 0
        %2586 = vmatmul.mubr.bf16.gmra.mrb[0].mxu0 %v1536
        %v2587 = vpop.f32.mrb[0].mxu0
        %v2588 = vadd.f32 0.0, %v2587
        %v2589 = vpop.f32.mrb[0].mxu0
        %v2590 = vpop.f32.mrb[0].mxu0
        %v2591 = vadd.f32 0.0, %v2590
        %v2592 = vpop.f32.mrb[0].mxu0
        %2593 = vmatprep.mubr.bf16.mxu0 0
        %2594 = vmatmul.mubr.bf16.gmra.mrb[0].mxu0 %v1539
        %v2595 = vpop.f32.mrb[0].mxu0
        %v2596 = vadd.f32 0.0, %v2595
        %v2597 = vpop.f32.mrb[0].mxu0
        %v2598 = vpop.f32.mrb[0].mxu0
        %v2599 = vadd.f32 0.0, %v2598
        %v2600 = vpop.f32.mrb[0].mxu0
        %2601 = vdwg.mxu0
        %v2602 = vld [vmem:[%s253] sm:$0x1]
        %v2603 = vld [vmem:[%s256] sm:$0x1]
        %v2605 = vlaneseq
        %v2606 = vshrl.u32 %v2605, 7
        %v2607 = vsub.s32 0, %v2606
        %v2608 = vrot.slane %v2602, %v2607
        %v2610 = vmul.f32 %v1580, %v2608
        %v2611 = vmul.f32 %v1583, %v2608
        %v2612 = vmul.f32 %v1588, %v2608
        %v2613 = vmul.f32 %v1591, %v2608
        %v2614 = vmul.f32 %v1596, %v2608
        %v2615 = vmul.f32 %v1599, %v2608
        %v2616 = vmul.f32 %v1604, %v2608
        %v2617 = vmul.f32 %v1607, %v2608
        %v2618 = vmul.f32 %v1612, %v2608
        %v2619 = vmul.f32 %v1615, %v2608
        %v2620 = vmul.f32 %v1620, %v2608
        %v2621 = vmul.f32 %v1623, %v2608
        %v2622 = vmul.f32 %v1628, %v2608
        %v2623 = vmul.f32 %v1631, %v2608
        %v2624 = vmul.f32 %v1636, %v2608
        %v2625 = vmul.f32 %v1639, %v2608
        %v2626 = vmul.f32 %v1644, %v2608
        %v2627 = vmul.f32 %v1647, %v2608
        %v2628 = vmul.f32 %v1652, %v2608
        %v2629 = vmul.f32 %v1655, %v2608
        %v2630 = vmul.f32 %v1660, %v2608
        %v2631 = vmul.f32 %v1663, %v2608
        %v2632 = vmul.f32 %v1668, %v2608
        %v2633 = vmul.f32 %v1671, %v2608
        %v2634 = vmul.f32 %v1676, %v2608
        %v2635 = vmul.f32 %v1679, %v2608
        %v2636 = vmul.f32 %v1684, %v2608
        %v2637 = vmul.f32 %v1687, %v2608
        %v2638 = vmul.f32 %v1692, %v2608
        %v2639 = vmul.f32 %v1695, %v2608
        %v2640 = vmul.f32 %v1700, %v2608
        %v2641 = vmul.f32 %v1703, %v2608
        %v2642 = vmul.f32 %v1708, %v2608
        %v2643 = vmul.f32 %v1711, %v2608
        %v2644 = vmul.f32 %v1716, %v2608
        %v2645 = vmul.f32 %v1719, %v2608
        %v2646 = vmul.f32 %v1724, %v2608
        %v2647 = vmul.f32 %v1727, %v2608
        %v2648 = vmul.f32 %v1732, %v2608
        %v2649 = vmul.f32 %v1735, %v2608
        %v2650 = vmul.f32 %v1740, %v2608
        %v2651 = vmul.f32 %v1743, %v2608
        %v2652 = vmul.f32 %v1748, %v2608
        %v2653 = vmul.f32 %v1751, %v2608
        %v2654 = vmul.f32 %v1756, %v2608
        %v2655 = vmul.f32 %v1759, %v2608
        %v2656 = vmul.f32 %v1764, %v2608
        %v2657 = vmul.f32 %v1767, %v2608
        %v2658 = vmul.f32 %v1772, %v2608
        %v2659 = vmul.f32 %v1775, %v2608
        %v2660 = vmul.f32 %v1780, %v2608
        %v2661 = vmul.f32 %v1783, %v2608
        %v2662 = vmul.f32 %v1788, %v2608
        %v2663 = vmul.f32 %v1791, %v2608
        %v2664 = vmul.f32 %v1796, %v2608
        %v2665 = vmul.f32 %v1799, %v2608
        %v2666 = vmul.f32 %v1804, %v2608
        %v2667 = vmul.f32 %v1807, %v2608
        %v2668 = vmul.f32 %v1812, %v2608
        %v2669 = vmul.f32 %v1815, %v2608
        %v2670 = vmul.f32 %v1820, %v2608
        %v2671 = vmul.f32 %v1823, %v2608
        %v2672 = vmul.f32 %v1828, %v2608
        %v2673 = vmul.f32 %v1831, %v2608
        %v2674 = vmul.f32 %v1836, %v2608
        %v2675 = vmul.f32 %v1839, %v2608
        %v2676 = vmul.f32 %v1844, %v2608
        %v2677 = vmul.f32 %v1847, %v2608
        %v2678 = vmul.f32 %v1852, %v2608
        %v2679 = vmul.f32 %v1855, %v2608
        %v2680 = vmul.f32 %v1860, %v2608
        %v2681 = vmul.f32 %v1863, %v2608
        %v2682 = vmul.f32 %v1868, %v2608
        %v2683 = vmul.f32 %v1871, %v2608
        %v2684 = vmul.f32 %v1876, %v2608
        %v2685 = vmul.f32 %v1879, %v2608
        %v2686 = vmul.f32 %v1884, %v2608
        %v2687 = vmul.f32 %v1887, %v2608
        %v2688 = vmul.f32 %v1892, %v2608
        %v2689 = vmul.f32 %v1895, %v2608
        %v2690 = vmul.f32 %v1900, %v2608
        %v2691 = vmul.f32 %v1903, %v2608
        %v2692 = vmul.f32 %v1908, %v2608
        %v2693 = vmul.f32 %v1911, %v2608
        %v2694 = vmul.f32 %v1916, %v2608
        %v2695 = vmul.f32 %v1919, %v2608
        %v2696 = vmul.f32 %v1924, %v2608
        %v2697 = vmul.f32 %v1927, %v2608
        %v2698 = vmul.f32 %v1932, %v2608
        %v2699 = vmul.f32 %v1935, %v2608
        %v2700 = vmul.f32 %v1940, %v2608
        %v2701 = vmul.f32 %v1943, %v2608
        %v2702 = vmul.f32 %v1948, %v2608
        %v2703 = vmul.f32 %v1951, %v2608
        %v2704 = vmul.f32 %v1956, %v2608
        %v2705 = vmul.f32 %v1959, %v2608
        %v2706 = vmul.f32 %v1964, %v2608
        %v2707 = vmul.f32 %v1967, %v2608
        %v2708 = vmul.f32 %v1972, %v2608
        %v2709 = vmul.f32 %v1975, %v2608
        %v2710 = vmul.f32 %v1980, %v2608
        %v2711 = vmul.f32 %v1983, %v2608
        %v2712 = vmul.f32 %v1988, %v2608
        %v2713 = vmul.f32 %v1991, %v2608
        %v2714 = vmul.f32 %v1996, %v2608
        %v2715 = vmul.f32 %v1999, %v2608
        %v2716 = vmul.f32 %v2004, %v2608
        %v2717 = vmul.f32 %v2007, %v2608
        %v2718 = vmul.f32 %v2012, %v2608
        %v2719 = vmul.f32 %v2015, %v2608
        %v2720 = vmul.f32 %v2020, %v2608
        %v2721 = vmul.f32 %v2023, %v2608
        %v2722 = vmul.f32 %v2028, %v2608
        %v2723 = vmul.f32 %v2031, %v2608
        %v2724 = vmul.f32 %v2036, %v2608
        %v2725 = vmul.f32 %v2039, %v2608
        %v2726 = vmul.f32 %v2044, %v2608
        %v2727 = vmul.f32 %v2047, %v2608
        %v2728 = vmul.f32 %v2052, %v2608
        %v2729 = vmul.f32 %v2055, %v2608
        %v2730 = vmul.f32 %v2060, %v2608
        %v2731 = vmul.f32 %v2063, %v2608
        %v2732 = vmul.f32 %v2068, %v2608
        %v2733 = vmul.f32 %v2071, %v2608
        %v2734 = vmul.f32 %v2076, %v2608
        %v2735 = vmul.f32 %v2079, %v2608
        %v2736 = vmul.f32 %v2084, %v2608
        %v2737 = vmul.f32 %v2087, %v2608
        %v2738 = vmul.f32 %v2092, %v2608
        %v2739 = vmul.f32 %v2095, %v2608
        %v2740 = vmul.f32 %v2100, %v2608
        %v2741 = vmul.f32 %v2103, %v2608
        %v2742 = vmul.f32 %v2108, %v2608
        %v2743 = vmul.f32 %v2111, %v2608
        %v2744 = vmul.f32 %v2116, %v2608
        %v2745 = vmul.f32 %v2119, %v2608
        %v2746 = vmul.f32 %v2124, %v2608
        %v2747 = vmul.f32 %v2127, %v2608
        %v2748 = vmul.f32 %v2132, %v2608
        %v2749 = vmul.f32 %v2135, %v2608
        %v2750 = vmul.f32 %v2140, %v2608
        %v2751 = vmul.f32 %v2143, %v2608
        %v2752 = vmul.f32 %v2148, %v2608
        %v2753 = vmul.f32 %v2151, %v2608
        %v2754 = vmul.f32 %v2156, %v2608
        %v2755 = vmul.f32 %v2159, %v2608
        %v2756 = vmul.f32 %v2164, %v2608
        %v2757 = vmul.f32 %v2167, %v2608
        %v2758 = vmul.f32 %v2172, %v2608
        %v2759 = vmul.f32 %v2175, %v2608
        %v2760 = vmul.f32 %v2180, %v2608
        %v2761 = vmul.f32 %v2183, %v2608
        %v2762 = vmul.f32 %v2188, %v2608
        %v2763 = vmul.f32 %v2191, %v2608
        %v2764 = vmul.f32 %v2196, %v2608
        %v2765 = vmul.f32 %v2199, %v2608
        %v2766 = vmul.f32 %v2204, %v2608
        %v2767 = vmul.f32 %v2207, %v2608
        %v2768 = vmul.f32 %v2212, %v2608
        %v2769 = vmul.f32 %v2215, %v2608
        %v2770 = vmul.f32 %v2220, %v2608
        %v2771 = vmul.f32 %v2223, %v2608
        %v2772 = vmul.f32 %v2228, %v2608
        %v2773 = vmul.f32 %v2231, %v2608
        %v2774 = vmul.f32 %v2236, %v2608
        %v2775 = vmul.f32 %v2239, %v2608
        %v2776 = vmul.f32 %v2244, %v2608
        %v2777 = vmul.f32 %v2247, %v2608
        %v2778 = vmul.f32 %v2252, %v2608
        %v2779 = vmul.f32 %v2255, %v2608
        %v2780 = vmul.f32 %v2260, %v2608
        %v2781 = vmul.f32 %v2263, %v2608
        %v2782 = vmul.f32 %v2268, %v2608
        %v2783 = vmul.f32 %v2271, %v2608
        %v2784 = vmul.f32 %v2276, %v2608
        %v2785 = vmul.f32 %v2279, %v2608
        %v2786 = vmul.f32 %v2284, %v2608
        %v2787 = vmul.f32 %v2287, %v2608
        %v2788 = vmul.f32 %v2292, %v2608
        %v2789 = vmul.f32 %v2295, %v2608
        %v2790 = vmul.f32 %v2300, %v2608
        %v2791 = vmul.f32 %v2303, %v2608
        %v2792 = vmul.f32 %v2308, %v2608
        %v2793 = vmul.f32 %v2311, %v2608
        %v2794 = vmul.f32 %v2316, %v2608
        %v2795 = vmul.f32 %v2319, %v2608
        %v2796 = vmul.f32 %v2324, %v2608
        %v2797 = vmul.f32 %v2327, %v2608
        %v2798 = vmul.f32 %v2332, %v2608
        %v2799 = vmul.f32 %v2335, %v2608
        %v2800 = vmul.f32 %v2340, %v2608
        %v2801 = vmul.f32 %v2343, %v2608
        %v2802 = vmul.f32 %v2348, %v2608
        %v2803 = vmul.f32 %v2351, %v2608
        %v2804 = vmul.f32 %v2356, %v2608
        %v2805 = vmul.f32 %v2359, %v2608
        %v2806 = vmul.f32 %v2364, %v2608
        %v2807 = vmul.f32 %v2367, %v2608
        %v2808 = vmul.f32 %v2372, %v2608
        %v2809 = vmul.f32 %v2375, %v2608
        %v2810 = vmul.f32 %v2380, %v2608
        %v2811 = vmul.f32 %v2383, %v2608
        %v2812 = vmul.f32 %v2388, %v2608
        %v2813 = vmul.f32 %v2391, %v2608
        %v2814 = vmul.f32 %v2396, %v2608
        %v2815 = vmul.f32 %v2399, %v2608
        %v2816 = vmul.f32 %v2404, %v2608
        %v2817 = vmul.f32 %v2407, %v2608
        %v2818 = vmul.f32 %v2412, %v2608
        %v2819 = vmul.f32 %v2415, %v2608
        %v2820 = vmul.f32 %v2420, %v2608
        %v2821 = vmul.f32 %v2423, %v2608
        %v2822 = vmul.f32 %v2428, %v2608
        %v2823 = vmul.f32 %v2431, %v2608
        %v2824 = vmul.f32 %v2436, %v2608
        %v2825 = vmul.f32 %v2439, %v2608
        %v2826 = vmul.f32 %v2444, %v2608
        %v2827 = vmul.f32 %v2447, %v2608
        %v2828 = vmul.f32 %v2452, %v2608
        %v2829 = vmul.f32 %v2455, %v2608
        %v2830 = vmul.f32 %v2460, %v2608
        %v2831 = vmul.f32 %v2463, %v2608
        %v2832 = vmul.f32 %v2468, %v2608
        %v2833 = vmul.f32 %v2471, %v2608
        %v2834 = vmul.f32 %v2476, %v2608
        %v2835 = vmul.f32 %v2479, %v2608
        %v2836 = vmul.f32 %v2484, %v2608
        %v2837 = vmul.f32 %v2487, %v2608
        %v2838 = vmul.f32 %v2492, %v2608
        %v2839 = vmul.f32 %v2495, %v2608
        %v2840 = vmul.f32 %v2500, %v2608
        %v2841 = vmul.f32 %v2503, %v2608
        %v2842 = vmul.f32 %v2508, %v2608
        %v2843 = vmul.f32 %v2511, %v2608
        %v2844 = vmul.f32 %v2516, %v2608
        %v2845 = vmul.f32 %v2519, %v2608
        %v2846 = vmul.f32 %v2524, %v2608
        %v2847 = vmul.f32 %v2527, %v2608
        %v2848 = vmul.f32 %v2532, %v2608
        %v2849 = vmul.f32 %v2535, %v2608
        %v2850 = vmul.f32 %v2540, %v2608
        %v2851 = vmul.f32 %v2543, %v2608
        %v2852 = vmul.f32 %v2548, %v2608
        %v2853 = vmul.f32 %v2551, %v2608
        %v2854 = vmul.f32 %v2556, %v2608
        %v2855 = vmul.f32 %v2559, %v2608
        %v2856 = vmul.f32 %v2564, %v2608
        %v2857 = vmul.f32 %v2567, %v2608
        %v2858 = vmul.f32 %v2572, %v2608
        %v2859 = vmul.f32 %v2575, %v2608
        %v2860 = vmul.f32 %v2580, %v2608
        %v2861 = vmul.f32 %v2583, %v2608
        %v2862 = vmul.f32 %v2588, %v2608
        %v2863 = vmul.f32 %v2591, %v2608
        %v2864 = vmul.f32 %v2596, %v2608
        %v2865 = vmul.f32 %v2599, %v2608
        %v2867 = vlaneseq
        %v2868 = vshrl.u32 %v2867, 7
        %v2869 = vsub.s32 0, %v2868
        %v2870 = vrot.slane %v2603, %v2869
        %v2872 = vadd.f32 %v2610, %v2870
        %v2873 = vadd.f32 %v2611, %v2870
        %v2874 = vadd.f32 %v2612, %v2870
        %v2875 = vadd.f32 %v2613, %v2870
        %v2876 = vadd.f32 %v2614, %v2870
        %v2877 = vadd.f32 %v2615, %v2870
        %v2878 = vadd.f32 %v2616, %v2870
        %v2879 = vadd.f32 %v2617, %v2870
        %v2880 = vadd.f32 %v2618, %v2870
        %v2881 = vadd.f32 %v2619, %v2870
        %v2882 = vadd.f32 %v2620, %v2870
        %v2883 = vadd.f32 %v2621, %v2870
        %v2884 = vadd.f32 %v2622, %v2870
        %v2885 = vadd.f32 %v2623, %v2870
        %v2886 = vadd.f32 %v2624, %v2870
        %v2887 = vadd.f32 %v2625, %v2870
        %v2888 = vadd.f32 %v2626, %v2870
        %v2889 = vadd.f32 %v2627, %v2870
        %v2890 = vadd.f32 %v2628, %v2870
        %v2891 = vadd.f32 %v2629, %v2870
        %v2892 = vadd.f32 %v2630, %v2870
        %v2893 = vadd.f32 %v2631, %v2870
        %v2894 = vadd.f32 %v2632, %v2870
        %v2895 = vadd.f32 %v2633, %v2870
        %v2896 = vadd.f32 %v2634, %v2870
        %v2897 = vadd.f32 %v2635, %v2870
        %v2898 = vadd.f32 %v2636, %v2870
        %v2899 = vadd.f32 %v2637, %v2870
        %v2900 = vadd.f32 %v2638, %v2870
        %v2901 = vadd.f32 %v2639, %v2870
        %v2902 = vadd.f32 %v2640, %v2870
        %v2903 = vadd.f32 %v2641, %v2870
        %v2904 = vadd.f32 %v2642, %v2870
        %v2905 = vadd.f32 %v2643, %v2870
        %v2906 = vadd.f32 %v2644, %v2870
        %v2907 = vadd.f32 %v2645, %v2870
        %v2908 = vadd.f32 %v2646, %v2870
        %v2909 = vadd.f32 %v2647, %v2870
        %v2910 = vadd.f32 %v2648, %v2870
        %v2911 = vadd.f32 %v2649, %v2870
        %v2912 = vadd.f32 %v2650, %v2870
        %v2913 = vadd.f32 %v2651, %v2870
        %v2914 = vadd.f32 %v2652, %v2870
        %v2915 = vadd.f32 %v2653, %v2870
        %v2916 = vadd.f32 %v2654, %v2870
        %v2917 = vadd.f32 %v2655, %v2870
        %v2918 = vadd.f32 %v2656, %v2870
        %v2919 = vadd.f32 %v2657, %v2870
        %v2920 = vadd.f32 %v2658, %v2870
        %v2921 = vadd.f32 %v2659, %v2870
        %v2922 = vadd.f32 %v2660, %v2870
        %v2923 = vadd.f32 %v2661, %v2870
        %v2924 = vadd.f32 %v2662, %v2870
        %v2925 = vadd.f32 %v2663, %v2870
        %v2926 = vadd.f32 %v2664, %v2870
        %v2927 = vadd.f32 %v2665, %v2870
        %v2928 = vadd.f32 %v2666, %v2870
        %v2929 = vadd.f32 %v2667, %v2870
        %v2930 = vadd.f32 %v2668, %v2870
        %v2931 = vadd.f32 %v2669, %v2870
        %v2932 = vadd.f32 %v2670, %v2870
        %v2933 = vadd.f32 %v2671, %v2870
        %v2934 = vadd.f32 %v2672, %v2870
        %v2935 = vadd.f32 %v2673, %v2870
        %v2936 = vadd.f32 %v2674, %v2870
        %v2937 = vadd.f32 %v2675, %v2870
        %v2938 = vadd.f32 %v2676, %v2870
        %v2939 = vadd.f32 %v2677, %v2870
        %v2940 = vadd.f32 %v2678, %v2870
        %v2941 = vadd.f32 %v2679, %v2870
        %v2942 = vadd.f32 %v2680, %v2870
        %v2943 = vadd.f32 %v2681, %v2870
        %v2944 = vadd.f32 %v2682, %v2870
        %v2945 = vadd.f32 %v2683, %v2870
        %v2946 = vadd.f32 %v2684, %v2870
        %v2947 = vadd.f32 %v2685, %v2870
        %v2948 = vadd.f32 %v2686, %v2870
        %v2949 = vadd.f32 %v2687, %v2870
        %v2950 = vadd.f32 %v2688, %v2870
        %v2951 = vadd.f32 %v2689, %v2870
        %v2952 = vadd.f32 %v2690, %v2870
        %v2953 = vadd.f32 %v2691, %v2870
        %v2954 = vadd.f32 %v2692, %v2870
        %v2955 = vadd.f32 %v2693, %v2870
        %v2956 = vadd.f32 %v2694, %v2870
        %v2957 = vadd.f32 %v2695, %v2870
        %v2958 = vadd.f32 %v2696, %v2870
        %v2959 = vadd.f32 %v2697, %v2870
        %v2960 = vadd.f32 %v2698, %v2870
        %v2961 = vadd.f32 %v2699, %v2870
        %v2962 = vadd.f32 %v2700, %v2870
        %v2963 = vadd.f32 %v2701, %v2870
        %v2964 = vadd.f32 %v2702, %v2870
        %v2965 = vadd.f32 %v2703, %v2870
        %v2966 = vadd.f32 %v2704, %v2870
        %v2967 = vadd.f32 %v2705, %v2870
        %v2968 = vadd.f32 %v2706, %v2870
        %v2969 = vadd.f32 %v2707, %v2870
        %v2970 = vadd.f32 %v2708, %v2870
        %v2971 = vadd.f32 %v2709, %v2870
        %v2972 = vadd.f32 %v2710, %v2870
        %v2973 = vadd.f32 %v2711, %v2870
        %v2974 = vadd.f32 %v2712, %v2870
        %v2975 = vadd.f32 %v2713, %v2870
        %v2976 = vadd.f32 %v2714, %v2870
        %v2977 = vadd.f32 %v2715, %v2870
        %v2978 = vadd.f32 %v2716, %v2870
        %v2979 = vadd.f32 %v2717, %v2870
        %v2980 = vadd.f32 %v2718, %v2870
        %v2981 = vadd.f32 %v2719, %v2870
        %v2982 = vadd.f32 %v2720, %v2870
        %v2983 = vadd.f32 %v2721, %v2870
        %v2984 = vadd.f32 %v2722, %v2870
        %v2985 = vadd.f32 %v2723, %v2870
        %v2986 = vadd.f32 %v2724, %v2870
        %v2987 = vadd.f32 %v2725, %v2870
        %v2988 = vadd.f32 %v2726, %v2870
        %v2989 = vadd.f32 %v2727, %v2870
        %v2990 = vadd.f32 %v2728, %v2870
        %v2991 = vadd.f32 %v2729, %v2870
        %v2992 = vadd.f32 %v2730, %v2870
        %v2993 = vadd.f32 %v2731, %v2870
        %v2994 = vadd.f32 %v2732, %v2870
        %v2995 = vadd.f32 %v2733, %v2870
        %v2996 = vadd.f32 %v2734, %v2870
        %v2997 = vadd.f32 %v2735, %v2870
        %v2998 = vadd.f32 %v2736, %v2870
        %v2999 = vadd.f32 %v2737, %v2870
        %v3000 = vadd.f32 %v2738, %v2870
        %v3001 = vadd.f32 %v2739, %v2870
        %v3002 = vadd.f32 %v2740, %v2870
        %v3003 = vadd.f32 %v2741, %v2870
        %v3004 = vadd.f32 %v2742, %v2870
        %v3005 = vadd.f32 %v2743, %v2870
        %v3006 = vadd.f32 %v2744, %v2870
        %v3007 = vadd.f32 %v2745, %v2870
        %v3008 = vadd.f32 %v2746, %v2870
        %v3009 = vadd.f32 %v2747, %v2870
        %v3010 = vadd.f32 %v2748, %v2870
        %v3011 = vadd.f32 %v2749, %v2870
        %v3012 = vadd.f32 %v2750, %v2870
        %v3013 = vadd.f32 %v2751, %v2870
        %v3014 = vadd.f32 %v2752, %v2870
        %v3015 = vadd.f32 %v2753, %v2870
        %v3016 = vadd.f32 %v2754, %v2870
        %v3017 = vadd.f32 %v2755, %v2870
        %v3018 = vadd.f32 %v2756, %v2870
        %v3019 = vadd.f32 %v2757, %v2870
        %v3020 = vadd.f32 %v2758, %v2870
        %v3021 = vadd.f32 %v2759, %v2870
        %v3022 = vadd.f32 %v2760, %v2870
        %v3023 = vadd.f32 %v2761, %v2870
        %v3024 = vadd.f32 %v2762, %v2870
        %v3025 = vadd.f32 %v2763, %v2870
        %v3026 = vadd.f32 %v2764, %v2870
        %v3027 = vadd.f32 %v2765, %v2870
        %v3028 = vadd.f32 %v2766, %v2870
        %v3029 = vadd.f32 %v2767, %v2870
        %v3030 = vadd.f32 %v2768, %v2870
        %v3031 = vadd.f32 %v2769, %v2870
        %v3032 = vadd.f32 %v2770, %v2870
        %v3033 = vadd.f32 %v2771, %v2870
        %v3034 = vadd.f32 %v2772, %v2870
        %v3035 = vadd.f32 %v2773, %v2870
        %v3036 = vadd.f32 %v2774, %v2870
        %v3037 = vadd.f32 %v2775, %v2870
        %v3038 = vadd.f32 %v2776, %v2870
        %v3039 = vadd.f32 %v2777, %v2870
        %v3040 = vadd.f32 %v2778, %v2870
        %v3041 = vadd.f32 %v2779, %v2870
        %v3042 = vadd.f32 %v2780, %v2870
        %v3043 = vadd.f32 %v2781, %v2870
        %v3044 = vadd.f32 %v2782, %v2870
        %v3045 = vadd.f32 %v2783, %v2870
        %v3046 = vadd.f32 %v2784, %v2870
        %v3047 = vadd.f32 %v2785, %v2870
        %v3048 = vadd.f32 %v2786, %v2870
        %v3049 = vadd.f32 %v2787, %v2870
        %v3050 = vadd.f32 %v2788, %v2870
        %v3051 = vadd.f32 %v2789, %v2870
        %v3052 = vadd.f32 %v2790, %v2870
        %v3053 = vadd.f32 %v2791, %v2870
        %v3054 = vadd.f32 %v2792, %v2870
        %v3055 = vadd.f32 %v2793, %v2870
        %v3056 = vadd.f32 %v2794, %v2870
        %v3057 = vadd.f32 %v2795, %v2870
        %v3058 = vadd.f32 %v2796, %v2870
        %v3059 = vadd.f32 %v2797, %v2870
        %v3060 = vadd.f32 %v2798, %v2870
        %v3061 = vadd.f32 %v2799, %v2870
        %v3062 = vadd.f32 %v2800, %v2870
        %v3063 = vadd.f32 %v2801, %v2870
        %v3064 = vadd.f32 %v2802, %v2870
        %v3065 = vadd.f32 %v2803, %v2870
        %v3066 = vadd.f32 %v2804, %v2870
        %v3067 = vadd.f32 %v2805, %v2870
        %v3068 = vadd.f32 %v2806, %v2870
        %v3069 = vadd.f32 %v2807, %v2870
        %v3070 = vadd.f32 %v2808, %v2870
        %v3071 = vadd.f32 %v2809, %v2870
        %v3072 = vadd.f32 %v2810, %v2870
        %v3073 = vadd.f32 %v2811, %v2870
        %v3074 = vadd.f32 %v2812, %v2870
        %v3075 = vadd.f32 %v2813, %v2870
        %v3076 = vadd.f32 %v2814, %v2870
        %v3077 = vadd.f32 %v2815, %v2870
        %v3078 = vadd.f32 %v2816, %v2870
        %v3079 = vadd.f32 %v2817, %v2870
        %v3080 = vadd.f32 %v2818, %v2870
        %v3081 = vadd.f32 %v2819, %v2870
        %v3082 = vadd.f32 %v2820, %v2870
        %v3083 = vadd.f32 %v2821, %v2870
        %v3084 = vadd.f32 %v2822, %v2870
        %v3085 = vadd.f32 %v2823, %v2870
        %v3086 = vadd.f32 %v2824, %v2870
        %v3087 = vadd.f32 %v2825, %v2870
        %v3088 = vadd.f32 %v2826, %v2870
        %v3089 = vadd.f32 %v2827, %v2870
        %v3090 = vadd.f32 %v2828, %v2870
        %v3091 = vadd.f32 %v2829, %v2870
        %v3092 = vadd.f32 %v2830, %v2870
        %v3093 = vadd.f32 %v2831, %v2870
        %v3094 = vadd.f32 %v2832, %v2870
        %v3095 = vadd.f32 %v2833, %v2870
        %v3096 = vadd.f32 %v2834, %v2870
        %v3097 = vadd.f32 %v2835, %v2870
        %v3098 = vadd.f32 %v2836, %v2870
        %v3099 = vadd.f32 %v2837, %v2870
        %v3100 = vadd.f32 %v2838, %v2870
        %v3101 = vadd.f32 %v2839, %v2870
        %v3102 = vadd.f32 %v2840, %v2870
        %v3103 = vadd.f32 %v2841, %v2870
        %v3104 = vadd.f32 %v2842, %v2870
        %v3105 = vadd.f32 %v2843, %v2870
        %v3106 = vadd.f32 %v2844, %v2870
        %v3107 = vadd.f32 %v2845, %v2870
        %v3108 = vadd.f32 %v2846, %v2870
        %v3109 = vadd.f32 %v2847, %v2870
        %v3110 = vadd.f32 %v2848, %v2870
        %v3111 = vadd.f32 %v2849, %v2870
        %v3112 = vadd.f32 %v2850, %v2870
        %v3113 = vadd.f32 %v2851, %v2870
        %v3114 = vadd.f32 %v2852, %v2870
        %v3115 = vadd.f32 %v2853, %v2870
        %v3116 = vadd.f32 %v2854, %v2870
        %v3117 = vadd.f32 %v2855, %v2870
        %v3118 = vadd.f32 %v2856, %v2870
        %v3119 = vadd.f32 %v2857, %v2870
        %v3120 = vadd.f32 %v2858, %v2870
        %v3121 = vadd.f32 %v2859, %v2870
        %v3122 = vadd.f32 %v2860, %v2870
        %v3123 = vadd.f32 %v2861, %v2870
        %v3124 = vadd.f32 %v2862, %v2870
        %v3125 = vadd.f32 %v2863, %v2870
        %v3126 = vadd.f32 %v2864, %v2870
        %v3127 = vadd.f32 %v2865, %v2870
        %v3128 = vpack.c.bf16 %v2873, %v2872
        %v3129 = vpack.c.bf16 %v2875, %v2874
        %v3130 = vpack.c.bf16 %v2877, %v2876
        %v3131 = vpack.c.bf16 %v2879, %v2878
        %v3132 = vpack.c.bf16 %v2881, %v2880
        %v3133 = vpack.c.bf16 %v2883, %v2882
        %v3134 = vpack.c.bf16 %v2885, %v2884
        %v3135 = vpack.c.bf16 %v2887, %v2886
        %v3136 = vpack.c.bf16 %v2889, %v2888
        %v3137 = vpack.c.bf16 %v2891, %v2890
        %v3138 = vpack.c.bf16 %v2893, %v2892
        %v3139 = vpack.c.bf16 %v2895, %v2894
        %v3140 = vpack.c.bf16 %v2897, %v2896
        %v3141 = vpack.c.bf16 %v2899, %v2898
        %v3142 = vpack.c.bf16 %v2901, %v2900
        %v3143 = vpack.c.bf16 %v2903, %v2902
        %v3144 = vpack.c.bf16 %v2905, %v2904
        %v3145 = vpack.c.bf16 %v2907, %v2906
        %v3146 = vpack.c.bf16 %v2909, %v2908
        %v3147 = vpack.c.bf16 %v2911, %v2910
        %v3148 = vpack.c.bf16 %v2913, %v2912
        %v3149 = vpack.c.bf16 %v2915, %v2914
        %v3150 = vpack.c.bf16 %v2917, %v2916
        %v3151 = vpack.c.bf16 %v2919, %v2918
        %v3152 = vpack.c.bf16 %v2921, %v2920
        %v3153 = vpack.c.bf16 %v2923, %v2922
        %v3154 = vpack.c.bf16 %v2925, %v2924
        %v3155 = vpack.c.bf16 %v2927, %v2926
        %v3156 = vpack.c.bf16 %v2929, %v2928
        %v3157 = vpack.c.bf16 %v2931, %v2930
        %v3158 = vpack.c.bf16 %v2933, %v2932
        %v3159 = vpack.c.bf16 %v2935, %v2934
        %v3160 = vpack.c.bf16 %v2937, %v2936
        %v3161 = vpack.c.bf16 %v2939, %v2938
        %v3162 = vpack.c.bf16 %v2941, %v2940
        %v3163 = vpack.c.bf16 %v2943, %v2942
        %v3164 = vpack.c.bf16 %v2945, %v2944
        %v3165 = vpack.c.bf16 %v2947, %v2946
        %v3166 = vpack.c.bf16 %v2949, %v2948
        %v3167 = vpack.c.bf16 %v2951, %v2950
        %v3168 = vpack.c.bf16 %v2953, %v2952
        %v3169 = vpack.c.bf16 %v2955, %v2954
        %v3170 = vpack.c.bf16 %v2957, %v2956
        %v3171 = vpack.c.bf16 %v2959, %v2958
        %v3172 = vpack.c.bf16 %v2961, %v2960
        %v3173 = vpack.c.bf16 %v2963, %v2962
        %v3174 = vpack.c.bf16 %v2965, %v2964
        %v3175 = vpack.c.bf16 %v2967, %v2966
        %v3176 = vpack.c.bf16 %v2969, %v2968
        %v3177 = vpack.c.bf16 %v2971, %v2970
        %v3178 = vpack.c.bf16 %v2973, %v2972
        %v3179 = vpack.c.bf16 %v2975, %v2974
        %v3180 = vpack.c.bf16 %v2977, %v2976
        %v3181 = vpack.c.bf16 %v2979, %v2978
        %v3182 = vpack.c.bf16 %v2981, %v2980
        %v3183 = vpack.c.bf16 %v2983, %v2982
        %v3184 = vpack.c.bf16 %v2985, %v2984
        %v3185 = vpack.c.bf16 %v2987, %v2986
        %v3186 = vpack.c.bf16 %v2989, %v2988
        %v3187 = vpack.c.bf16 %v2991, %v2990
        %v3188 = vpack.c.bf16 %v2993, %v2992
        %v3189 = vpack.c.bf16 %v2995, %v2994
        %v3190 = vpack.c.bf16 %v2997, %v2996
        %v3191 = vpack.c.bf16 %v2999, %v2998
        %v3192 = vpack.c.bf16 %v3001, %v3000
        %v3193 = vpack.c.bf16 %v3003, %v3002
        %v3194 = vpack.c.bf16 %v3005, %v3004
        %v3195 = vpack.c.bf16 %v3007, %v3006
        %v3196 = vpack.c.bf16 %v3009, %v3008
        %v3197 = vpack.c.bf16 %v3011, %v3010
        %v3198 = vpack.c.bf16 %v3013, %v3012
        %v3199 = vpack.c.bf16 %v3015, %v3014
        %v3200 = vpack.c.bf16 %v3017, %v3016
        %v3201 = vpack.c.bf16 %v3019, %v3018
        %v3202 = vpack.c.bf16 %v3021, %v3020
        %v3203 = vpack.c.bf16 %v3023, %v3022
        %v3204 = vpack.c.bf16 %v3025, %v3024
        %v3205 = vpack.c.bf16 %v3027, %v3026
        %v3206 = vpack.c.bf16 %v3029, %v3028
        %v3207 = vpack.c.bf16 %v3031, %v3030
        %v3208 = vpack.c.bf16 %v3033, %v3032
        %v3209 = vpack.c.bf16 %v3035, %v3034
        %v3210 = vpack.c.bf16 %v3037, %v3036
        %v3211 = vpack.c.bf16 %v3039, %v3038
        %v3212 = vpack.c.bf16 %v3041, %v3040
        %v3213 = vpack.c.bf16 %v3043, %v3042
        %v3214 = vpack.c.bf16 %v3045, %v3044
        %v3215 = vpack.c.bf16 %v3047, %v3046
        %v3216 = vpack.c.bf16 %v3049, %v3048
        %v3217 = vpack.c.bf16 %v3051, %v3050
        %v3218 = vpack.c.bf16 %v3053, %v3052
        %v3219 = vpack.c.bf16 %v3055, %v3054
        %v3220 = vpack.c.bf16 %v3057, %v3056
        %v3221 = vpack.c.bf16 %v3059, %v3058
        %v3222 = vpack.c.bf16 %v3061, %v3060
        %v3223 = vpack.c.bf16 %v3063, %v3062
        %v3224 = vpack.c.bf16 %v3065, %v3064
        %v3225 = vpack.c.bf16 %v3067, %v3066
        %v3226 = vpack.c.bf16 %v3069, %v3068
        %v3227 = vpack.c.bf16 %v3071, %v3070
        %v3228 = vpack.c.bf16 %v3073, %v3072
        %v3229 = vpack.c.bf16 %v3075, %v3074
        %v3230 = vpack.c.bf16 %v3077, %v3076
        %v3231 = vpack.c.bf16 %v3079, %v3078
        %v3232 = vpack.c.bf16 %v3081, %v3080
        %v3233 = vpack.c.bf16 %v3083, %v3082
        %v3234 = vpack.c.bf16 %v3085, %v3084
        %v3235 = vpack.c.bf16 %v3087, %v3086
        %v3236 = vpack.c.bf16 %v3089, %v3088
        %v3237 = vpack.c.bf16 %v3091, %v3090
        %v3238 = vpack.c.bf16 %v3093, %v3092
        %v3239 = vpack.c.bf16 %v3095, %v3094
        %v3240 = vpack.c.bf16 %v3097, %v3096
        %v3241 = vpack.c.bf16 %v3099, %v3098
        %v3242 = vpack.c.bf16 %v3101, %v3100
        %v3243 = vpack.c.bf16 %v3103, %v3102
        %v3244 = vpack.c.bf16 %v3105, %v3104
        %v3245 = vpack.c.bf16 %v3107, %v3106
        %v3246 = vpack.c.bf16 %v3109, %v3108
        %v3247 = vpack.c.bf16 %v3111, %v3110
        %v3248 = vpack.c.bf16 %v3113, %v3112
        %v3249 = vpack.c.bf16 %v3115, %v3114
        %v3250 = vpack.c.bf16 %v3117, %v3116
        %v3251 = vpack.c.bf16 %v3119, %v3118
        %v3252 = vpack.c.bf16 %v3121, %v3120
        %v3253 = vpack.c.bf16 %v3123, %v3122
        %v3254 = vpack.c.bf16 %v3125, %v3124
        %v3255 = vpack.c.bf16 %v3127, %v3126
        %v3384 = vunpack.c.l.b16 %v3128
        %v3385 = vunpack.c.h.b16 %v3128
        %v3386 = vunpack.c.l.b16 %v3129
        %v3387 = vunpack.c.h.b16 %v3129
        %v3388 = vunpack.c.l.b16 %v3130
        %v3389 = vunpack.c.h.b16 %v3130
        %v3390 = vunpack.c.l.b16 %v3131
        %v3391 = vunpack.c.h.b16 %v3131
        %v3392 = vunpack.c.l.b16 %v3132
        %v3393 = vunpack.c.h.b16 %v3132
        %v3394 = vunpack.c.l.b16 %v3133
        %v3395 = vunpack.c.h.b16 %v3133
        %v3396 = vunpack.c.l.b16 %v3134
        %v3397 = vunpack.c.h.b16 %v3134
        %v3398 = vunpack.c.l.b16 %v3135
        %v3399 = vunpack.c.h.b16 %v3135
        %v3400 = vunpack.c.l.b16 %v3136
        %v3401 = vunpack.c.h.b16 %v3136
        %v3402 = vunpack.c.l.b16 %v3137
        %v3403 = vunpack.c.h.b16 %v3137
        %v3404 = vunpack.c.l.b16 %v3138
        %v3405 = vunpack.c.h.b16 %v3138
        %v3406 = vunpack.c.l.b16 %v3139
        %v3407 = vunpack.c.h.b16 %v3139
        %v3408 = vunpack.c.l.b16 %v3140
        %v3409 = vunpack.c.h.b16 %v3140
        %v3410 = vunpack.c.l.b16 %v3141
        %v3411 = vunpack.c.h.b16 %v3141
        %v3412 = vunpack.c.l.b16 %v3142
        %v3413 = vunpack.c.h.b16 %v3142
        %v3414 = vunpack.c.l.b16 %v3143
        %v3415 = vunpack.c.h.b16 %v3143
        %v3416 = vunpack.c.l.b16 %v3144
        %v3417 = vunpack.c.h.b16 %v3144
        %v3418 = vunpack.c.l.b16 %v3145
        %v3419 = vunpack.c.h.b16 %v3145
        %v3420 = vunpack.c.l.b16 %v3146
        %v3421 = vunpack.c.h.b16 %v3146
        %v3422 = vunpack.c.l.b16 %v3147
        %v3423 = vunpack.c.h.b16 %v3147
        %v3424 = vunpack.c.l.b16 %v3148
        %v3425 = vunpack.c.h.b16 %v3148
        %v3426 = vunpack.c.l.b16 %v3149
        %v3427 = vunpack.c.h.b16 %v3149
        %v3428 = vunpack.c.l.b16 %v3150
        %v3429 = vunpack.c.h.b16 %v3150
        %v3430 = vunpack.c.l.b16 %v3151
        %v3431 = vunpack.c.h.b16 %v3151
        %v3432 = vunpack.c.l.b16 %v3152
        %v3433 = vunpack.c.h.b16 %v3152
        %v3434 = vunpack.c.l.b16 %v3153
        %v3435 = vunpack.c.h.b16 %v3153
        %v3436 = vunpack.c.l.b16 %v3154
        %v3437 = vunpack.c.h.b16 %v3154
        %v3438 = vunpack.c.l.b16 %v3155
        %v3439 = vunpack.c.h.b16 %v3155
        %v3440 = vunpack.c.l.b16 %v3156
        %v3441 = vunpack.c.h.b16 %v3156
        %v3442 = vunpack.c.l.b16 %v3157
        %v3443 = vunpack.c.h.b16 %v3157
        %v3444 = vunpack.c.l.b16 %v3158
        %v3445 = vunpack.c.h.b16 %v3158
        %v3446 = vunpack.c.l.b16 %v3159
        %v3447 = vunpack.c.h.b16 %v3159
        %v3448 = vunpack.c.l.b16 %v3160
        %v3449 = vunpack.c.h.b16 %v3160
        %v3450 = vunpack.c.l.b16 %v3161
        %v3451 = vunpack.c.h.b16 %v3161
        %v3452 = vunpack.c.l.b16 %v3162
        %v3453 = vunpack.c.h.b16 %v3162
        %v3454 = vunpack.c.l.b16 %v3163
        %v3455 = vunpack.c.h.b16 %v3163
        %v3456 = vunpack.c.l.b16 %v3164
        %v3457 = vunpack.c.h.b16 %v3164
        %v3458 = vunpack.c.l.b16 %v3165
        %v3459 = vunpack.c.h.b16 %v3165
        %v3460 = vunpack.c.l.b16 %v3166
        %v3461 = vunpack.c.h.b16 %v3166
        %v3462 = vunpack.c.l.b16 %v3167
        %v3463 = vunpack.c.h.b16 %v3167
        %v3464 = vunpack.c.l.b16 %v3168
        %v3465 = vunpack.c.h.b16 %v3168
        %v3466 = vunpack.c.l.b16 %v3169
        %v3467 = vunpack.c.h.b16 %v3169
        %v3468 = vunpack.c.l.b16 %v3170
        %v3469 = vunpack.c.h.b16 %v3170
        %v3470 = vunpack.c.l.b16 %v3171
        %v3471 = vunpack.c.h.b16 %v3171
        %v3472 = vunpack.c.l.b16 %v3172
        %v3473 = vunpack.c.h.b16 %v3172
        %v3474 = vunpack.c.l.b16 %v3173
        %v3475 = vunpack.c.h.b16 %v3173
        %v3476 = vunpack.c.l.b16 %v3174
        %v3477 = vunpack.c.h.b16 %v3174
        %v3478 = vunpack.c.l.b16 %v3175
        %v3479 = vunpack.c.h.b16 %v3175
        %v3480 = vunpack.c.l.b16 %v3176
        %v3481 = vunpack.c.h.b16 %v3176
        %v3482 = vunpack.c.l.b16 %v3177
        %v3483 = vunpack.c.h.b16 %v3177
        %v3484 = vunpack.c.l.b16 %v3178
        %v3485 = vunpack.c.h.b16 %v3178
        %v3486 = vunpack.c.l.b16 %v3179
        %v3487 = vunpack.c.h.b16 %v3179
        %v3488 = vunpack.c.l.b16 %v3180
        %v3489 = vunpack.c.h.b16 %v3180
        %v3490 = vunpack.c.l.b16 %v3181
        %v3491 = vunpack.c.h.b16 %v3181
        %v3492 = vunpack.c.l.b16 %v3182
        %v3493 = vunpack.c.h.b16 %v3182
        %v3494 = vunpack.c.l.b16 %v3183
        %v3495 = vunpack.c.h.b16 %v3183
        %v3496 = vunpack.c.l.b16 %v3184
        %v3497 = vunpack.c.h.b16 %v3184
        %v3498 = vunpack.c.l.b16 %v3185
        %v3499 = vunpack.c.h.b16 %v3185
        %v3500 = vunpack.c.l.b16 %v3186
        %v3501 = vunpack.c.h.b16 %v3186
        %v3502 = vunpack.c.l.b16 %v3187
        %v3503 = vunpack.c.h.b16 %v3187
        %v3504 = vunpack.c.l.b16 %v3188
        %v3505 = vunpack.c.h.b16 %v3188
        %v3506 = vunpack.c.l.b16 %v3189
        %v3507 = vunpack.c.h.b16 %v3189
        %v3508 = vunpack.c.l.b16 %v3190
        %v3509 = vunpack.c.h.b16 %v3190
        %v3510 = vunpack.c.l.b16 %v3191
        %v3511 = vunpack.c.h.b16 %v3191
        %v3512 = vunpack.c.l.b16 %v3192
        %v3513 = vunpack.c.h.b16 %v3192
        %v3514 = vunpack.c.l.b16 %v3193
        %v3515 = vunpack.c.h.b16 %v3193
        %v3516 = vunpack.c.l.b16 %v3194
        %v3517 = vunpack.c.h.b16 %v3194
        %v3518 = vunpack.c.l.b16 %v3195
        %v3519 = vunpack.c.h.b16 %v3195
        %v3520 = vunpack.c.l.b16 %v3196
        %v3521 = vunpack.c.h.b16 %v3196
        %v3522 = vunpack.c.l.b16 %v3197
        %v3523 = vunpack.c.h.b16 %v3197
        %v3524 = vunpack.c.l.b16 %v3198
        %v3525 = vunpack.c.h.b16 %v3198
        %v3526 = vunpack.c.l.b16 %v3199
        %v3527 = vunpack.c.h.b16 %v3199
        %v3528 = vunpack.c.l.b16 %v3200
        %v3529 = vunpack.c.h.b16 %v3200
        %v3530 = vunpack.c.l.b16 %v3201
        %v3531 = vunpack.c.h.b16 %v3201
        %v3532 = vunpack.c.l.b16 %v3202
        %v3533 = vunpack.c.h.b16 %v3202
        %v3534 = vunpack.c.l.b16 %v3203
        %v3535 = vunpack.c.h.b16 %v3203
        %v3536 = vunpack.c.l.b16 %v3204
        %v3537 = vunpack.c.h.b16 %v3204
        %v3538 = vunpack.c.l.b16 %v3205
        %v3539 = vunpack.c.h.b16 %v3205
        %v3540 = vunpack.c.l.b16 %v3206
        %v3541 = vunpack.c.h.b16 %v3206
        %v3542 = vunpack.c.l.b16 %v3207
        %v3543 = vunpack.c.h.b16 %v3207
        %v3544 = vunpack.c.l.b16 %v3208
        %v3545 = vunpack.c.h.b16 %v3208
        %v3546 = vunpack.c.l.b16 %v3209
        %v3547 = vunpack.c.h.b16 %v3209
        %v3548 = vunpack.c.l.b16 %v3210
        %v3549 = vunpack.c.h.b16 %v3210
        %v3550 = vunpack.c.l.b16 %v3211
        %v3551 = vunpack.c.h.b16 %v3211
        %v3552 = vunpack.c.l.b16 %v3212
        %v3553 = vunpack.c.h.b16 %v3212
        %v3554 = vunpack.c.l.b16 %v3213
        %v3555 = vunpack.c.h.b16 %v3213
        %v3556 = vunpack.c.l.b16 %v3214
        %v3557 = vunpack.c.h.b16 %v3214
        %v3558 = vunpack.c.l.b16 %v3215
        %v3559 = vunpack.c.h.b16 %v3215
        %v3560 = vunpack.c.l.b16 %v3216
        %v3561 = vunpack.c.h.b16 %v3216
        %v3562 = vunpack.c.l.b16 %v3217
        %v3563 = vunpack.c.h.b16 %v3217
        %v3564 = vunpack.c.l.b16 %v3218
        %v3565 = vunpack.c.h.b16 %v3218
        %v3566 = vunpack.c.l.b16 %v3219
        %v3567 = vunpack.c.h.b16 %v3219
        %v3568 = vunpack.c.l.b16 %v3220
        %v3569 = vunpack.c.h.b16 %v3220
        %v3570 = vunpack.c.l.b16 %v3221
        %v3571 = vunpack.c.h.b16 %v3221
        %v3572 = vunpack.c.l.b16 %v3222
        %v3573 = vunpack.c.h.b16 %v3222
        %v3574 = vunpack.c.l.b16 %v3223
        %v3575 = vunpack.c.h.b16 %v3223
        %v3576 = vunpack.c.l.b16 %v3224
        %v3577 = vunpack.c.h.b16 %v3224
        %v3578 = vunpack.c.l.b16 %v3225
        %v3579 = vunpack.c.h.b16 %v3225
        %v3580 = vunpack.c.l.b16 %v3226
        %v3581 = vunpack.c.h.b16 %v3226
        %v3582 = vunpack.c.l.b16 %v3227
        %v3583 = vunpack.c.h.b16 %v3227
        %v3584 = vunpack.c.l.b16 %v3228
        %v3585 = vunpack.c.h.b16 %v3228
        %v3586 = vunpack.c.l.b16 %v3229
        %v3587 = vunpack.c.h.b16 %v3229
        %v3588 = vunpack.c.l.b16 %v3230
        %v3589 = vunpack.c.h.b16 %v3230
        %v3590 = vunpack.c.l.b16 %v3231
        %v3591 = vunpack.c.h.b16 %v3231
        %v3592 = vunpack.c.l.b16 %v3232
        %v3593 = vunpack.c.h.b16 %v3232
        %v3594 = vunpack.c.l.b16 %v3233
        %v3595 = vunpack.c.h.b16 %v3233
        %v3596 = vunpack.c.l.b16 %v3234
        %v3597 = vunpack.c.h.b16 %v3234
        %v3598 = vunpack.c.l.b16 %v3235
        %v3599 = vunpack.c.h.b16 %v3235
        %v3600 = vunpack.c.l.b16 %v3236
        %v3601 = vunpack.c.h.b16 %v3236
        %v3602 = vunpack.c.l.b16 %v3237
        %v3603 = vunpack.c.h.b16 %v3237
        %v3604 = vunpack.c.l.b16 %v3238
        %v3605 = vunpack.c.h.b16 %v3238
        %v3606 = vunpack.c.l.b16 %v3239
        %v3607 = vunpack.c.h.b16 %v3239
        %v3608 = vunpack.c.l.b16 %v3240
        %v3609 = vunpack.c.h.b16 %v3240
        %v3610 = vunpack.c.l.b16 %v3241
        %v3611 = vunpack.c.h.b16 %v3241
        %v3612 = vunpack.c.l.b16 %v3242
        %v3613 = vunpack.c.h.b16 %v3242
        %v3614 = vunpack.c.l.b16 %v3243
        %v3615 = vunpack.c.h.b16 %v3243
        %v3616 = vunpack.c.l.b16 %v3244
        %v3617 = vunpack.c.h.b16 %v3244
        %v3618 = vunpack.c.l.b16 %v3245
        %v3619 = vunpack.c.h.b16 %v3245
        %v3620 = vunpack.c.l.b16 %v3246
        %v3621 = vunpack.c.h.b16 %v3246
        %v3622 = vunpack.c.l.b16 %v3247
        %v3623 = vunpack.c.h.b16 %v3247
        %v3624 = vunpack.c.l.b16 %v3248
        %v3625 = vunpack.c.h.b16 %v3248
        %v3626 = vunpack.c.l.b16 %v3249
        %v3627 = vunpack.c.h.b16 %v3249
        %v3628 = vunpack.c.l.b16 %v3250
        %v3629 = vunpack.c.h.b16 %v3250
        %v3630 = vunpack.c.l.b16 %v3251
        %v3631 = vunpack.c.h.b16 %v3251
        %v3632 = vunpack.c.l.b16 %v3252
        %v3633 = vunpack.c.h.b16 %v3252
        %v3634 = vunpack.c.l.b16 %v3253
        %v3635 = vunpack.c.h.b16 %v3253
        %v3636 = vunpack.c.l.b16 %v3254
        %v3637 = vunpack.c.h.b16 %v3254
        %v3638 = vunpack.c.l.b16 %v3255
        %v3639 = vunpack.c.h.b16 %v3255
        %v3640 = vpack.c.b16 %v3384, %v3384
        %v3641 = vpack.c.b16 %v3385, %v3385
        %v3642 = vpack.c.b16 %v3386, %v3386
        %v3643 = vpack.c.b16 %v3387, %v3387
        %v3644 = vpack.c.b16 %v3388, %v3388
        %v3645 = vpack.c.b16 %v3389, %v3389
        %v3646 = vpack.c.b16 %v3390, %v3390
        %v3647 = vpack.c.b16 %v3391, %v3391
        %v3648 = vpack.c.b16 %v3392, %v3392
        %v3649 = vpack.c.b16 %v3393, %v3393
        %v3650 = vpack.c.b16 %v3394, %v3394
        %v3651 = vpack.c.b16 %v3395, %v3395
        %v3652 = vpack.c.b16 %v3396, %v3396
        %v3653 = vpack.c.b16 %v3397, %v3397
        %v3654 = vpack.c.b16 %v3398, %v3398
        %v3655 = vpack.c.b16 %v3399, %v3399
        %v3656 = vpack.c.b16 %v3400, %v3400
        %v3657 = vpack.c.b16 %v3401, %v3401
        %v3658 = vpack.c.b16 %v3402, %v3402
        %v3659 = vpack.c.b16 %v3403, %v3403
        %v3660 = vpack.c.b16 %v3404, %v3404
        %v3661 = vpack.c.b16 %v3405, %v3405
        %v3662 = vpack.c.b16 %v3406, %v3406
        %v3663 = vpack.c.b16 %v3407, %v3407
        %v3664 = vpack.c.b16 %v3408, %v3408
        %v3665 = vpack.c.b16 %v3409, %v3409
        %v3666 = vpack.c.b16 %v3410, %v3410
        %v3667 = vpack.c.b16 %v3411, %v3411
        %v3668 = vpack.c.b16 %v3412, %v3412
        %v3669 = vpack.c.b16 %v3413, %v3413
        %v3670 = vpack.c.b16 %v3414, %v3414
        %v3671 = vpack.c.b16 %v3415, %v3415
        %v3672 = vpack.c.b16 %v3416, %v3416
        %v3673 = vpack.c.b16 %v3417, %v3417
        %v3674 = vpack.c.b16 %v3418, %v3418
        %v3675 = vpack.c.b16 %v3419, %v3419
        %v3676 = vpack.c.b16 %v3420, %v3420
        %v3677 = vpack.c.b16 %v3421, %v3421
        %v3678 = vpack.c.b16 %v3422, %v3422
        %v3679 = vpack.c.b16 %v3423, %v3423
        %v3680 = vpack.c.b16 %v3424, %v3424
        %v3681 = vpack.c.b16 %v3425, %v3425
        %v3682 = vpack.c.b16 %v3426, %v3426
        %v3683 = vpack.c.b16 %v3427, %v3427
        %v3684 = vpack.c.b16 %v3428, %v3428
        %v3685 = vpack.c.b16 %v3429, %v3429
        %v3686 = vpack.c.b16 %v3430, %v3430
        %v3687 = vpack.c.b16 %v3431, %v3431
        %v3688 = vpack.c.b16 %v3432, %v3432
        %v3689 = vpack.c.b16 %v3433, %v3433
        %v3690 = vpack.c.b16 %v3434, %v3434
        %v3691 = vpack.c.b16 %v3435, %v3435
        %v3692 = vpack.c.b16 %v3436, %v3436
        %v3693 = vpack.c.b16 %v3437, %v3437
        %v3694 = vpack.c.b16 %v3438, %v3438
        %v3695 = vpack.c.b16 %v3439, %v3439
        %v3696 = vpack.c.b16 %v3440, %v3440
        %v3697 = vpack.c.b16 %v3441, %v3441
        %v3698 = vpack.c.b16 %v3442, %v3442
        %v3699 = vpack.c.b16 %v3443, %v3443
        %v3700 = vpack.c.b16 %v3444, %v3444
        %v3701 = vpack.c.b16 %v3445, %v3445
        %v3702 = vpack.c.b16 %v3446, %v3446
        %v3703 = vpack.c.b16 %v3447, %v3447
        %v3704 = vpack.c.b16 %v3448, %v3448
        %v3705 = vpack.c.b16 %v3449, %v3449
        %v3706 = vpack.c.b16 %v3450, %v3450
        %v3707 = vpack.c.b16 %v3451, %v3451
        %v3708 = vpack.c.b16 %v3452, %v3452
        %v3709 = vpack.c.b16 %v3453, %v3453
        %v3710 = vpack.c.b16 %v3454, %v3454
        %v3711 = vpack.c.b16 %v3455, %v3455
        %v3712 = vpack.c.b16 %v3456, %v3456
        %v3713 = vpack.c.b16 %v3457, %v3457
        %v3714 = vpack.c.b16 %v3458, %v3458
        %v3715 = vpack.c.b16 %v3459, %v3459
        %v3716 = vpack.c.b16 %v3460, %v3460
        %v3717 = vpack.c.b16 %v3461, %v3461
        %v3718 = vpack.c.b16 %v3462, %v3462
        %v3719 = vpack.c.b16 %v3463, %v3463
        %v3720 = vpack.c.b16 %v3464, %v3464
        %v3721 = vpack.c.b16 %v3465, %v3465
        %v3722 = vpack.c.b16 %v3466, %v3466
        %v3723 = vpack.c.b16 %v3467, %v3467
        %v3724 = vpack.c.b16 %v3468, %v3468
        %v3725 = vpack.c.b16 %v3469, %v3469
        %v3726 = vpack.c.b16 %v3470, %v3470
        %v3727 = vpack.c.b16 %v3471, %v3471
        %v3728 = vpack.c.b16 %v3472, %v3472
        %v3729 = vpack.c.b16 %v3473, %v3473
        %v3730 = vpack.c.b16 %v3474, %v3474
        %v3731 = vpack.c.b16 %v3475, %v3475
        %v3732 = vpack.c.b16 %v3476, %v3476
        %v3733 = vpack.c.b16 %v3477, %v3477
        %v3734 = vpack.c.b16 %v3478, %v3478
        %v3735 = vpack.c.b16 %v3479, %v3479
        %v3736 = vpack.c.b16 %v3480, %v3480
        %v3737 = vpack.c.b16 %v3481, %v3481
        %v3738 = vpack.c.b16 %v3482, %v3482
        %v3739 = vpack.c.b16 %v3483, %v3483
        %v3740 = vpack.c.b16 %v3484, %v3484
        %v3741 = vpack.c.b16 %v3485, %v3485
        %v3742 = vpack.c.b16 %v3486, %v3486
        %v3743 = vpack.c.b16 %v3487, %v3487
        %v3744 = vpack.c.b16 %v3488, %v3488
        %v3745 = vpack.c.b16 %v3489, %v3489
        %v3746 = vpack.c.b16 %v3490, %v3490
        %v3747 = vpack.c.b16 %v3491, %v3491
        %v3748 = vpack.c.b16 %v3492, %v3492
        %v3749 = vpack.c.b16 %v3493, %v3493
        %v3750 = vpack.c.b16 %v3494, %v3494
        %v3751 = vpack.c.b16 %v3495, %v3495
        %v3752 = vpack.c.b16 %v3496, %v3496
        %v3753 = vpack.c.b16 %v3497, %v3497
        %v3754 = vpack.c.b16 %v3498, %v3498
        %v3755 = vpack.c.b16 %v3499, %v3499
        %v3756 = vpack.c.b16 %v3500, %v3500
        %v3757 = vpack.c.b16 %v3501, %v3501
        %v3758 = vpack.c.b16 %v3502, %v3502
        %v3759 = vpack.c.b16 %v3503, %v3503
        %v3760 = vpack.c.b16 %v3504, %v3504
        %v3761 = vpack.c.b16 %v3505, %v3505
        %v3762 = vpack.c.b16 %v3506, %v3506
        %v3763 = vpack.c.b16 %v3507, %v3507
        %v3764 = vpack.c.b16 %v3508, %v3508
        %v3765 = vpack.c.b16 %v3509, %v3509
        %v3766 = vpack.c.b16 %v3510, %v3510
        %v3767 = vpack.c.b16 %v3511, %v3511
        %v3768 = vpack.c.b16 %v3512, %v3512
        %v3769 = vpack.c.b16 %v3513, %v3513
        %v3770 = vpack.c.b16 %v3514, %v3514
        %v3771 = vpack.c.b16 %v3515, %v3515
        %v3772 = vpack.c.b16 %v3516, %v3516
        %v3773 = vpack.c.b16 %v3517, %v3517
        %v3774 = vpack.c.b16 %v3518, %v3518
        %v3775 = vpack.c.b16 %v3519, %v3519
        %v3776 = vpack.c.b16 %v3520, %v3520
        %v3777 = vpack.c.b16 %v3521, %v3521
        %v3778 = vpack.c.b16 %v3522, %v3522
        %v3779 = vpack.c.b16 %v3523, %v3523
        %v3780 = vpack.c.b16 %v3524, %v3524
        %v3781 = vpack.c.b16 %v3525, %v3525
        %v3782 = vpack.c.b16 %v3526, %v3526
        %v3783 = vpack.c.b16 %v3527, %v3527
        %v3784 = vpack.c.b16 %v3528, %v3528
        %v3785 = vpack.c.b16 %v3529, %v3529
        %v3786 = vpack.c.b16 %v3530, %v3530
        %v3787 = vpack.c.b16 %v3531, %v3531
        %v3788 = vpack.c.b16 %v3532, %v3532
        %v3789 = vpack.c.b16 %v3533, %v3533
        %v3790 = vpack.c.b16 %v3534, %v3534
        %v3791 = vpack.c.b16 %v3535, %v3535
        %v3792 = vpack.c.b16 %v3536, %v3536
        %v3793 = vpack.c.b16 %v3537, %v3537
        %v3794 = vpack.c.b16 %v3538, %v3538
        %v3795 = vpack.c.b16 %v3539, %v3539
        %v3796 = vpack.c.b16 %v3540, %v3540
        %v3797 = vpack.c.b16 %v3541, %v3541
        %v3798 = vpack.c.b16 %v3542, %v3542
        %v3799 = vpack.c.b16 %v3543, %v3543
        %v3800 = vpack.c.b16 %v3544, %v3544
        %v3801 = vpack.c.b16 %v3545, %v3545
        %v3802 = vpack.c.b16 %v3546, %v3546
        %v3803 = vpack.c.b16 %v3547, %v3547
        %v3804 = vpack.c.b16 %v3548, %v3548
        %v3805 = vpack.c.b16 %v3549, %v3549
        %v3806 = vpack.c.b16 %v3550, %v3550
        %v3807 = vpack.c.b16 %v3551, %v3551
        %v3808 = vpack.c.b16 %v3552, %v3552
        %v3809 = vpack.c.b16 %v3553, %v3553
        %v3810 = vpack.c.b16 %v3554, %v3554
        %v3811 = vpack.c.b16 %v3555, %v3555
        %v3812 = vpack.c.b16 %v3556, %v3556
        %v3813 = vpack.c.b16 %v3557, %v3557
        %v3814 = vpack.c.b16 %v3558, %v3558
        %v3815 = vpack.c.b16 %v3559, %v3559
        %v3816 = vpack.c.b16 %v3560, %v3560
        %v3817 = vpack.c.b16 %v3561, %v3561
        %v3818 = vpack.c.b16 %v3562, %v3562
        %v3819 = vpack.c.b16 %v3563, %v3563
        %v3820 = vpack.c.b16 %v3564, %v3564
        %v3821 = vpack.c.b16 %v3565, %v3565
        %v3822 = vpack.c.b16 %v3566, %v3566
        %v3823 = vpack.c.b16 %v3567, %v3567
        %v3824 = vpack.c.b16 %v3568, %v3568
        %v3825 = vpack.c.b16 %v3569, %v3569
        %v3826 = vpack.c.b16 %v3570, %v3570
        %v3827 = vpack.c.b16 %v3571, %v3571
        %v3828 = vpack.c.b16 %v3572, %v3572
        %v3829 = vpack.c.b16 %v3573, %v3573
        %v3830 = vpack.c.b16 %v3574, %v3574
        %v3831 = vpack.c.b16 %v3575, %v3575
        %v3832 = vpack.c.b16 %v3576, %v3576
        %v3833 = vpack.c.b16 %v3577, %v3577
        %v3834 = vpack.c.b16 %v3578, %v3578
        %v3835 = vpack.c.b16 %v3579, %v3579
        %v3836 = vpack.c.b16 %v3580, %v3580
        %v3837 = vpack.c.b16 %v3581, %v3581
        %v3838 = vpack.c.b16 %v3582, %v3582
        %v3839 = vpack.c.b16 %v3583, %v3583
        %v3840 = vpack.c.b16 %v3584, %v3584
        %v3841 = vpack.c.b16 %v3585, %v3585
        %v3842 = vpack.c.b16 %v3586, %v3586
        %v3843 = vpack.c.b16 %v3587, %v3587
        %v3844 = vpack.c.b16 %v3588, %v3588
        %v3845 = vpack.c.b16 %v3589, %v3589
        %v3846 = vpack.c.b16 %v3590, %v3590
        %v3847 = vpack.c.b16 %v3591, %v3591
        %v3848 = vpack.c.b16 %v3592, %v3592
        %v3849 = vpack.c.b16 %v3593, %v3593
        %v3850 = vpack.c.b16 %v3594, %v3594
        %v3851 = vpack.c.b16 %v3595, %v3595
        %v3852 = vpack.c.b16 %v3596, %v3596
        %v3853 = vpack.c.b16 %v3597, %v3597
        %v3854 = vpack.c.b16 %v3598, %v3598
        %v3855 = vpack.c.b16 %v3599, %v3599
        %v3856 = vpack.c.b16 %v3600, %v3600
        %v3857 = vpack.c.b16 %v3601, %v3601
        %v3858 = vpack.c.b16 %v3602, %v3602
        %v3859 = vpack.c.b16 %v3603, %v3603
        %v3860 = vpack.c.b16 %v3604, %v3604
        %v3861 = vpack.c.b16 %v3605, %v3605
        %v3862 = vpack.c.b16 %v3606, %v3606
        %v3863 = vpack.c.b16 %v3607, %v3607
        %v3864 = vpack.c.b16 %v3608, %v3608
        %v3865 = vpack.c.b16 %v3609, %v3609
        %v3866 = vpack.c.b16 %v3610, %v3610
        %v3867 = vpack.c.b16 %v3611, %v3611
        %v3868 = vpack.c.b16 %v3612, %v3612
        %v3869 = vpack.c.b16 %v3613, %v3613
        %v3870 = vpack.c.b16 %v3614, %v3614
        %v3871 = vpack.c.b16 %v3615, %v3615
        %v3872 = vpack.c.b16 %v3616, %v3616
        %v3873 = vpack.c.b16 %v3617, %v3617
        %v3874 = vpack.c.b16 %v3618, %v3618
        %v3875 = vpack.c.b16 %v3619, %v3619
        %v3876 = vpack.c.b16 %v3620, %v3620
        %v3877 = vpack.c.b16 %v3621, %v3621
        %v3878 = vpack.c.b16 %v3622, %v3622
        %v3879 = vpack.c.b16 %v3623, %v3623
        %v3880 = vpack.c.b16 %v3624, %v3624
        %v3881 = vpack.c.b16 %v3625, %v3625
        %v3882 = vpack.c.b16 %v3626, %v3626
        %v3883 = vpack.c.b16 %v3627, %v3627
        %v3884 = vpack.c.b16 %v3628, %v3628
        %v3885 = vpack.c.b16 %v3629, %v3629
        %v3886 = vpack.c.b16 %v3630, %v3630
        %v3887 = vpack.c.b16 %v3631, %v3631
        %v3888 = vpack.c.b16 %v3632, %v3632
        %v3889 = vpack.c.b16 %v3633, %v3633
        %v3890 = vpack.c.b16 %v3634, %v3634
        %v3891 = vpack.c.b16 %v3635, %v3635
        %v3892 = vpack.c.b16 %v3636, %v3636
        %v3893 = vpack.c.b16 %v3637, %v3637
        %v3894 = vpack.c.b16 %v3638, %v3638
        %v3895 = vpack.c.b16 %v3639, %v3639
        %vm4152 = vcmask 257024
        %4153 = vst.msk [vmem:[%s240] sm:$0xf] %vm4152, %v3640
        %4154 = vst.msk [vmem:[%s240 + $0x4] sm:$0xf] %vm4152, %v3641
        %4155 = vst.msk [vmem:[%s240 + $0x8] sm:$0xf] %vm4152, %v3642
        %4156 = vst.msk [vmem:[%s240 + $0xc] sm:$0xf] %vm4152, %v3643
        %4157 = vst.msk [vmem:[%s240 + $0x10] sm:$0xf] %vm4152, %v3644
        %4158 = vst.msk [vmem:[%s240 + $0x14] sm:$0xf] %vm4152, %v3645
        %4159 = vst.msk [vmem:[%s240 + $0x18] sm:$0xf] %vm4152, %v3646
        %4160 = vst.msk [vmem:[%s240 + $0x1c] sm:$0xf] %vm4152, %v3647
        %4161 = vst.msk [vmem:[%s240 + $0x20] sm:$0xf] %vm4152, %v3648
        %4162 = vst.msk [vmem:[%s240 + $0x24] sm:$0xf] %vm4152, %v3649
        %4163 = vst.msk [vmem:[%s240 + $0x28] sm:$0xf] %vm4152, %v3650
        %4164 = vst.msk [vmem:[%s240 + $0x2c] sm:$0xf] %vm4152, %v3651
        %4165 = vst.msk [vmem:[%s240 + $0x30] sm:$0xf] %vm4152, %v3652
        %4166 = vst.msk [vmem:[%s240 + $0x34] sm:$0xf] %vm4152, %v3653
        %4167 = vst.msk [vmem:[%s240 + $0x38] sm:$0xf] %vm4152, %v3654
        %4168 = vst.msk [vmem:[%s240 + $0x3c] sm:$0xf] %vm4152, %v3655
        %4169 = vst.msk [vmem:[%s240 + $0x40] sm:$0xf] %vm4152, %v3656
        %4170 = vst.msk [vmem:[%s240 + $0x44] sm:$0xf] %vm4152, %v3657
        %4171 = vst.msk [vmem:[%s240 + $0x48] sm:$0xf] %vm4152, %v3658
        %4172 = vst.msk [vmem:[%s240 + $0x4c] sm:$0xf] %vm4152, %v3659
        %4173 = vst.msk [vmem:[%s240 + $0x50] sm:$0xf] %vm4152, %v3660
        %4174 = vst.msk [vmem:[%s240 + $0x54] sm:$0xf] %vm4152, %v3661
        %4175 = vst.msk [vmem:[%s240 + $0x58] sm:$0xf] %vm4152, %v3662
        %4176 = vst.msk [vmem:[%s240 + $0x5c] sm:$0xf] %vm4152, %v3663
        %4177 = vst.msk [vmem:[%s240 + $0x60] sm:$0xf] %vm4152, %v3664
        %4178 = vst.msk [vmem:[%s240 + $0x64] sm:$0xf] %vm4152, %v3665
        %4179 = vst.msk [vmem:[%s240 + $0x68] sm:$0xf] %vm4152, %v3666
        %4180 = vst.msk [vmem:[%s240 + $0x6c] sm:$0xf] %vm4152, %v3667
        %4181 = vst.msk [vmem:[%s240 + $0x70] sm:$0xf] %vm4152, %v3668
        %4182 = vst.msk [vmem:[%s240 + $0x74] sm:$0xf] %vm4152, %v3669
        %4183 = vst.msk [vmem:[%s240 + $0x78] sm:$0xf] %vm4152, %v3670
        %4184 = vst.msk [vmem:[%s240 + $0x7c] sm:$0xf] %vm4152, %v3671
        %4185 = vst.msk [vmem:[%s240 + $0x80] sm:$0xf] %vm4152, %v3672
        %4186 = vst.msk [vmem:[%s240 + $0x84] sm:$0xf] %vm4152, %v3673
        %4187 = vst.msk [vmem:[%s240 + $0x88] sm:$0xf] %vm4152, %v3674
        %4188 = vst.msk [vmem:[%s240 + $0x8c] sm:$0xf] %vm4152, %v3675
        %4189 = vst.msk [vmem:[%s240 + $0x90] sm:$0xf] %vm4152, %v3676
        %4190 = vst.msk [vmem:[%s240 + $0x94] sm:$0xf] %vm4152, %v3677
        %4191 = vst.msk [vmem:[%s240 + $0x98] sm:$0xf] %vm4152, %v3678
        %4192 = vst.msk [vmem:[%s240 + $0x9c] sm:$0xf] %vm4152, %v3679
        %4193 = vst.msk [vmem:[%s240 + $0xa0] sm:$0xf] %vm4152, %v3680
        %4194 = vst.msk [vmem:[%s240 + $0xa4] sm:$0xf] %vm4152, %v3681
        %4195 = vst.msk [vmem:[%s240 + $0xa8] sm:$0xf] %vm4152, %v3682
        %4196 = vst.msk [vmem:[%s240 + $0xac] sm:$0xf] %vm4152, %v3683
        %4197 = vst.msk [vmem:[%s240 + $0xb0] sm:$0xf] %vm4152, %v3684
        %4198 = vst.msk [vmem:[%s240 + $0xb4] sm:$0xf] %vm4152, %v3685
        %4199 = vst.msk [vmem:[%s240 + $0xb8] sm:$0xf] %vm4152, %v3686
        %4200 = vst.msk [vmem:[%s240 + $0xbc] sm:$0xf] %vm4152, %v3687
        %4201 = vst.msk [vmem:[%s240 + $0xc0] sm:$0xf] %vm4152, %v3688
        %4202 = vst.msk [vmem:[%s240 + $0xc4] sm:$0xf] %vm4152, %v3689
        %4203 = vst.msk [vmem:[%s240 + $0xc8] sm:$0xf] %vm4152, %v3690
        %4204 = vst.msk [vmem:[%s240 + $0xcc] sm:$0xf] %vm4152, %v3691
        %4205 = vst.msk [vmem:[%s240 + $0xd0] sm:$0xf] %vm4152, %v3692
        %4206 = vst.msk [vmem:[%s240 + $0xd4] sm:$0xf] %vm4152, %v3693
        %4207 = vst.msk [vmem:[%s240 + $0xd8] sm:$0xf] %vm4152, %v3694
        %4208 = vst.msk [vmem:[%s240 + $0xdc] sm:$0xf] %vm4152, %v3695
        %4209 = vst.msk [vmem:[%s240 + $0xe0] sm:$0xf] %vm4152, %v3696
        %4210 = vst.msk [vmem:[%s240 + $0xe4] sm:$0xf] %vm4152, %v3697
        %4211 = vst.msk [vmem:[%s240 + $0xe8] sm:$0xf] %vm4152, %v3698
        %4212 = vst.msk [vmem:[%s240 + $0xec] sm:$0xf] %vm4152, %v3699
        %4213 = vst.msk [vmem:[%s240 + $0xf0] sm:$0xf] %vm4152, %v3700
        %4214 = vst.msk [vmem:[%s240 + $0xf4] sm:$0xf] %vm4152, %v3701
        %4215 = vst.msk [vmem:[%s240 + $0xf8] sm:$0xf] %vm4152, %v3702
        %4216 = vst.msk [vmem:[%s240 + $0xfc] sm:$0xf] %vm4152, %v3703
        %4217 = vst.msk [vmem:[%s240 + $0x100] sm:$0xf] %vm4152, %v3704
        %4218 = vst.msk [vmem:[%s240 + $0x104] sm:$0xf] %vm4152, %v3705
        %4219 = vst.msk [vmem:[%s240 + $0x108] sm:$0xf] %vm4152, %v3706
        %4220 = vst.msk [vmem:[%s240 + $0x10c] sm:$0xf] %vm4152, %v3707
        %4221 = vst.msk [vmem:[%s240 + $0x110] sm:$0xf] %vm4152, %v3708
        %4222 = vst.msk [vmem:[%s240 + $0x114] sm:$0xf] %vm4152, %v3709
        %4223 = vst.msk [vmem:[%s240 + $0x118] sm:$0xf] %vm4152, %v3710
        %4224 = vst.msk [vmem:[%s240 + $0x11c] sm:$0xf] %vm4152, %v3711
        %4225 = vst.msk [vmem:[%s240 + $0x120] sm:$0xf] %vm4152, %v3712
        %4226 = vst.msk [vmem:[%s240 + $0x124] sm:$0xf] %vm4152, %v3713
        %4227 = vst.msk [vmem:[%s240 + $0x128] sm:$0xf] %vm4152, %v3714
        %4228 = vst.msk [vmem:[%s240 + $0x12c] sm:$0xf] %vm4152, %v3715
        %4229 = vst.msk [vmem:[%s240 + $0x130] sm:$0xf] %vm4152, %v3716
        %4230 = vst.msk [vmem:[%s240 + $0x134] sm:$0xf] %vm4152, %v3717
        %4231 = vst.msk [vmem:[%s240 + $0x138] sm:$0xf] %vm4152, %v3718
        %4232 = vst.msk [vmem:[%s240 + $0x13c] sm:$0xf] %vm4152, %v3719
        %4233 = vst.msk [vmem:[%s240 + $0x140] sm:$0xf] %vm4152, %v3720
        %4234 = vst.msk [vmem:[%s240 + $0x144] sm:$0xf] %vm4152, %v3721
        %4235 = vst.msk [vmem:[%s240 + $0x148] sm:$0xf] %vm4152, %v3722
        %4236 = vst.msk [vmem:[%s240 + $0x14c] sm:$0xf] %vm4152, %v3723
        %4237 = vst.msk [vmem:[%s240 + $0x150] sm:$0xf] %vm4152, %v3724
        %4238 = vst.msk [vmem:[%s240 + $0x154] sm:$0xf] %vm4152, %v3725
        %4239 = vst.msk [vmem:[%s240 + $0x158] sm:$0xf] %vm4152, %v3726
        %4240 = vst.msk [vmem:[%s240 + $0x15c] sm:$0xf] %vm4152, %v3727
        %4241 = vst.msk [vmem:[%s240 + $0x160] sm:$0xf] %vm4152, %v3728
        %4242 = vst.msk [vmem:[%s240 + $0x164] sm:$0xf] %vm4152, %v3729
        %4243 = vst.msk [vmem:[%s240 + $0x168] sm:$0xf] %vm4152, %v3730
        %4244 = vst.msk [vmem:[%s240 + $0x16c] sm:$0xf] %vm4152, %v3731
        %4245 = vst.msk [vmem:[%s240 + $0x170] sm:$0xf] %vm4152, %v3732
        %4246 = vst.msk [vmem:[%s240 + $0x174] sm:$0xf] %vm4152, %v3733
        %4247 = vst.msk [vmem:[%s240 + $0x178] sm:$0xf] %vm4152, %v3734
        %4248 = vst.msk [vmem:[%s240 + $0x17c] sm:$0xf] %vm4152, %v3735
        %4249 = vst.msk [vmem:[%s240 + $0x180] sm:$0xf] %vm4152, %v3736
        %4250 = vst.msk [vmem:[%s240 + $0x184] sm:$0xf] %vm4152, %v3737
        %4251 = vst.msk [vmem:[%s240 + $0x188] sm:$0xf] %vm4152, %v3738
        %4252 = vst.msk [vmem:[%s240 + $0x18c] sm:$0xf] %vm4152, %v3739
        %4253 = vst.msk [vmem:[%s240 + $0x190] sm:$0xf] %vm4152, %v3740
        %4254 = vst.msk [vmem:[%s240 + $0x194] sm:$0xf] %vm4152, %v3741
        %4255 = vst.msk [vmem:[%s240 + $0x198] sm:$0xf] %vm4152, %v3742
        %4256 = vst.msk [vmem:[%s240 + $0x19c] sm:$0xf] %vm4152, %v3743
        %4257 = vst.msk [vmem:[%s240 + $0x1a0] sm:$0xf] %vm4152, %v3744
        %4258 = vst.msk [vmem:[%s240 + $0x1a4] sm:$0xf] %vm4152, %v3745
        %4259 = vst.msk [vmem:[%s240 + $0x1a8] sm:$0xf] %vm4152, %v3746
        %4260 = vst.msk [vmem:[%s240 + $0x1ac] sm:$0xf] %vm4152, %v3747
        %4261 = vst.msk [vmem:[%s240 + $0x1b0] sm:$0xf] %vm4152, %v3748
        %4262 = vst.msk [vmem:[%s240 + $0x1b4] sm:$0xf] %vm4152, %v3749
        %4263 = vst.msk [vmem:[%s240 + $0x1b8] sm:$0xf] %vm4152, %v3750
        %4264 = vst.msk [vmem:[%s240 + $0x1bc] sm:$0xf] %vm4152, %v3751
        %4265 = vst.msk [vmem:[%s240 + $0x1c0] sm:$0xf] %vm4152, %v3752
        %4266 = vst.msk [vmem:[%s240 + $0x1c4] sm:$0xf] %vm4152, %v3753
        %4267 = vst.msk [vmem:[%s240 + $0x1c8] sm:$0xf] %vm4152, %v3754
        %4268 = vst.msk [vmem:[%s240 + $0x1cc] sm:$0xf] %vm4152, %v3755
        %4269 = vst.msk [vmem:[%s240 + $0x1d0] sm:$0xf] %vm4152, %v3756
        %4270 = vst.msk [vmem:[%s240 + $0x1d4] sm:$0xf] %vm4152, %v3757
        %4271 = vst.msk [vmem:[%s240 + $0x1d8] sm:$0xf] %vm4152, %v3758
        %4272 = vst.msk [vmem:[%s240 + $0x1dc] sm:$0xf] %vm4152, %v3759
        %4273 = vst.msk [vmem:[%s240 + $0x1e0] sm:$0xf] %vm4152, %v3760
        %4274 = vst.msk [vmem:[%s240 + $0x1e4] sm:$0xf] %vm4152, %v3761
        %4275 = vst.msk [vmem:[%s240 + $0x1e8] sm:$0xf] %vm4152, %v3762
        %4276 = vst.msk [vmem:[%s240 + $0x1ec] sm:$0xf] %vm4152, %v3763
        %4277 = vst.msk [vmem:[%s240 + $0x1f0] sm:$0xf] %vm4152, %v3764
        %4278 = vst.msk [vmem:[%s240 + $0x1f4] sm:$0xf] %vm4152, %v3765
        %4279 = vst.msk [vmem:[%s240 + $0x1f8] sm:$0xf] %vm4152, %v3766
        %4280 = vst.msk [vmem:[%s240 + $0x1fc] sm:$0xf] %vm4152, %v3767
        %4281 = vst.msk [vmem:[%s240 + $0x200] sm:$0xf] %vm4152, %v3768
        %4282 = vst.msk [vmem:[%s240 + $0x204] sm:$0xf] %vm4152, %v3769
        %4283 = vst.msk [vmem:[%s240 + $0x208] sm:$0xf] %vm4152, %v3770
        %4284 = vst.msk [vmem:[%s240 + $0x20c] sm:$0xf] %vm4152, %v3771
        %4285 = vst.msk [vmem:[%s240 + $0x210] sm:$0xf] %vm4152, %v3772
        %4286 = vst.msk [vmem:[%s240 + $0x214] sm:$0xf] %vm4152, %v3773
        %4287 = vst.msk [vmem:[%s240 + $0x218] sm:$0xf] %vm4152, %v3774
        %4288 = vst.msk [vmem:[%s240 + $0x21c] sm:$0xf] %vm4152, %v3775
        %4289 = vst.msk [vmem:[%s240 + $0x220] sm:$0xf] %vm4152, %v3776
        %4290 = vst.msk [vmem:[%s240 + $0x224] sm:$0xf] %vm4152, %v3777
        %4291 = vst.msk [vmem:[%s240 + $0x228] sm:$0xf] %vm4152, %v3778
        %4292 = vst.msk [vmem:[%s240 + $0x22c] sm:$0xf] %vm4152, %v3779
        %4293 = vst.msk [vmem:[%s240 + $0x230] sm:$0xf] %vm4152, %v3780
        %4294 = vst.msk [vmem:[%s240 + $0x234] sm:$0xf] %vm4152, %v3781
        %4295 = vst.msk [vmem:[%s240 + $0x238] sm:$0xf] %vm4152, %v3782
        %4296 = vst.msk [vmem:[%s240 + $0x23c] sm:$0xf] %vm4152, %v3783
        %4297 = vst.msk [vmem:[%s240 + $0x240] sm:$0xf] %vm4152, %v3784
        %4298 = vst.msk [vmem:[%s240 + $0x244] sm:$0xf] %vm4152, %v3785
        %4299 = vst.msk [vmem:[%s240 + $0x248] sm:$0xf] %vm4152, %v3786
        %4300 = vst.msk [vmem:[%s240 + $0x24c] sm:$0xf] %vm4152, %v3787
        %4301 = vst.msk [vmem:[%s240 + $0x250] sm:$0xf] %vm4152, %v3788
        %4302 = vst.msk [vmem:[%s240 + $0x254] sm:$0xf] %vm4152, %v3789
        %4303 = vst.msk [vmem:[%s240 + $0x258] sm:$0xf] %vm4152, %v3790
        %4304 = vst.msk [vmem:[%s240 + $0x25c] sm:$0xf] %vm4152, %v3791
        %4305 = vst.msk [vmem:[%s240 + $0x260] sm:$0xf] %vm4152, %v3792
        %4306 = vst.msk [vmem:[%s240 + $0x264] sm:$0xf] %vm4152, %v3793
        %4307 = vst.msk [vmem:[%s240 + $0x268] sm:$0xf] %vm4152, %v3794
        %4308 = vst.msk [vmem:[%s240 + $0x26c] sm:$0xf] %vm4152, %v3795
        %4309 = vst.msk [vmem:[%s240 + $0x270] sm:$0xf] %vm4152, %v3796
        %4310 = vst.msk [vmem:[%s240 + $0x274] sm:$0xf] %vm4152, %v3797
        %4311 = vst.msk [vmem:[%s240 + $0x278] sm:$0xf] %vm4152, %v3798
        %4312 = vst.msk [vmem:[%s240 + $0x27c] sm:$0xf] %vm4152, %v3799
        %4313 = vst.msk [vmem:[%s240 + $0x280] sm:$0xf] %vm4152, %v3800
        %4314 = vst.msk [vmem:[%s240 + $0x284] sm:$0xf] %vm4152, %v3801
        %4315 = vst.msk [vmem:[%s240 + $0x288] sm:$0xf] %vm4152, %v3802
        %4316 = vst.msk [vmem:[%s240 + $0x28c] sm:$0xf] %vm4152, %v3803
        %4317 = vst.msk [vmem:[%s240 + $0x290] sm:$0xf] %vm4152, %v3804
        %4318 = vst.msk [vmem:[%s240 + $0x294] sm:$0xf] %vm4152, %v3805
        %4319 = vst.msk [vmem:[%s240 + $0x298] sm:$0xf] %vm4152, %v3806
        %4320 = vst.msk [vmem:[%s240 + $0x29c] sm:$0xf] %vm4152, %v3807
        %4321 = vst.msk [vmem:[%s240 + $0x2a0] sm:$0xf] %vm4152, %v3808
        %4322 = vst.msk [vmem:[%s240 + $0x2a4] sm:$0xf] %vm4152, %v3809
        %4323 = vst.msk [vmem:[%s240 + $0x2a8] sm:$0xf] %vm4152, %v3810
        %4324 = vst.msk [vmem:[%s240 + $0x2ac] sm:$0xf] %vm4152, %v3811
        %4325 = vst.msk [vmem:[%s240 + $0x2b0] sm:$0xf] %vm4152, %v3812
        %4326 = vst.msk [vmem:[%s240 + $0x2b4] sm:$0xf] %vm4152, %v3813
        %4327 = vst.msk [vmem:[%s240 + $0x2b8] sm:$0xf] %vm4152, %v3814
        %4328 = vst.msk [vmem:[%s240 + $0x2bc] sm:$0xf] %vm4152, %v3815
        %4329 = vst.msk [vmem:[%s240 + $0x2c0] sm:$0xf] %vm4152, %v3816
        %4330 = vst.msk [vmem:[%s240 + $0x2c4] sm:$0xf] %vm4152, %v3817
        %4331 = vst.msk [vmem:[%s240 + $0x2c8] sm:$0xf] %vm4152, %v3818
        %4332 = vst.msk [vmem:[%s240 + $0x2cc] sm:$0xf] %vm4152, %v3819
        %4333 = vst.msk [vmem:[%s240 + $0x2d0] sm:$0xf] %vm4152, %v3820
        %4334 = vst.msk [vmem:[%s240 + $0x2d4] sm:$0xf] %vm4152, %v3821
        %4335 = vst.msk [vmem:[%s240 + $0x2d8] sm:$0xf] %vm4152, %v3822
        %4336 = vst.msk [vmem:[%s240 + $0x2dc] sm:$0xf] %vm4152, %v3823
        %4337 = vst.msk [vmem:[%s240 + $0x2e0] sm:$0xf] %vm4152, %v3824
        %4338 = vst.msk [vmem:[%s240 + $0x2e4] sm:$0xf] %vm4152, %v3825
        %4339 = vst.msk [vmem:[%s240 + $0x2e8] sm:$0xf] %vm4152, %v3826
        %4340 = vst.msk [vmem:[%s240 + $0x2ec] sm:$0xf] %vm4152, %v3827
        %4341 = vst.msk [vmem:[%s240 + $0x2f0] sm:$0xf] %vm4152, %v3828
        %4342 = vst.msk [vmem:[%s240 + $0x2f4] sm:$0xf] %vm4152, %v3829
        %4343 = vst.msk [vmem:[%s240 + $0x2f8] sm:$0xf] %vm4152, %v3830
        %4344 = vst.msk [vmem:[%s240 + $0x2fc] sm:$0xf] %vm4152, %v3831
        %4345 = vst.msk [vmem:[%s240 + $0x300] sm:$0xf] %vm4152, %v3832
        %4346 = vst.msk [vmem:[%s240 + $0x304] sm:$0xf] %vm4152, %v3833
        %4347 = vst.msk [vmem:[%s240 + $0x308] sm:$0xf] %vm4152, %v3834
        %4348 = vst.msk [vmem:[%s240 + $0x30c] sm:$0xf] %vm4152, %v3835
        %4349 = vst.msk [vmem:[%s240 + $0x310] sm:$0xf] %vm4152, %v3836
        %4350 = vst.msk [vmem:[%s240 + $0x314] sm:$0xf] %vm4152, %v3837
        %4351 = vst.msk [vmem:[%s240 + $0x318] sm:$0xf] %vm4152, %v3838
        %4352 = vst.msk [vmem:[%s240 + $0x31c] sm:$0xf] %vm4152, %v3839
        %4353 = vst.msk [vmem:[%s240 + $0x320] sm:$0xf] %vm4152, %v3840
        %4354 = vst.msk [vmem:[%s240 + $0x324] sm:$0xf] %vm4152, %v3841
        %4355 = vst.msk [vmem:[%s240 + $0x328] sm:$0xf] %vm4152, %v3842
        %4356 = vst.msk [vmem:[%s240 + $0x32c] sm:$0xf] %vm4152, %v3843
        %4357 = vst.msk [vmem:[%s240 + $0x330] sm:$0xf] %vm4152, %v3844
        %4358 = vst.msk [vmem:[%s240 + $0x334] sm:$0xf] %vm4152, %v3845
        %4359 = vst.msk [vmem:[%s240 + $0x338] sm:$0xf] %vm4152, %v3846
        %4360 = vst.msk [vmem:[%s240 + $0x33c] sm:$0xf] %vm4152, %v3847
        %4361 = vst.msk [vmem:[%s240 + $0x340] sm:$0xf] %vm4152, %v3848
        %4362 = vst.msk [vmem:[%s240 + $0x344] sm:$0xf] %vm4152, %v3849
        %4363 = vst.msk [vmem:[%s240 + $0x348] sm:$0xf] %vm4152, %v3850
        %4364 = vst.msk [vmem:[%s240 + $0x34c] sm:$0xf] %vm4152, %v3851
        %4365 = vst.msk [vmem:[%s240 + $0x350] sm:$0xf] %vm4152, %v3852
        %4366 = vst.msk [vmem:[%s240 + $0x354] sm:$0xf] %vm4152, %v3853
        %4367 = vst.msk [vmem:[%s240 + $0x358] sm:$0xf] %vm4152, %v3854
        %4368 = vst.msk [vmem:[%s240 + $0x35c] sm:$0xf] %vm4152, %v3855
        %4369 = vst.msk [vmem:[%s240 + $0x360] sm:$0xf] %vm4152, %v3856
        %4370 = vst.msk [vmem:[%s240 + $0x364] sm:$0xf] %vm4152, %v3857
        %4371 = vst.msk [vmem:[%s240 + $0x368] sm:$0xf] %vm4152, %v3858
        %4372 = vst.msk [vmem:[%s240 + $0x36c] sm:$0xf] %vm4152, %v3859
        %4373 = vst.msk [vmem:[%s240 + $0x370] sm:$0xf] %vm4152, %v3860
        %4374 = vst.msk [vmem:[%s240 + $0x374] sm:$0xf] %vm4152, %v3861
        %4375 = vst.msk [vmem:[%s240 + $0x378] sm:$0xf] %vm4152, %v3862
        %4376 = vst.msk [vmem:[%s240 + $0x37c] sm:$0xf] %vm4152, %v3863
        %4377 = vst.msk [vmem:[%s240 + $0x380] sm:$0xf] %vm4152, %v3864
        %4378 = vst.msk [vmem:[%s240 + $0x384] sm:$0xf] %vm4152, %v3865
        %4379 = vst.msk [vmem:[%s240 + $0x388] sm:$0xf] %vm4152, %v3866
        %4380 = vst.msk [vmem:[%s240 + $0x38c] sm:$0xf] %vm4152, %v3867
        %4381 = vst.msk [vmem:[%s240 + $0x390] sm:$0xf] %vm4152, %v3868
        %4382 = vst.msk [vmem:[%s240 + $0x394] sm:$0xf] %vm4152, %v3869
        %4383 = vst.msk [vmem:[%s240 + $0x398] sm:$0xf] %vm4152, %v3870
        %4384 = vst.msk [vmem:[%s240 + $0x39c] sm:$0xf] %vm4152, %v3871
        %4385 = vst.msk [vmem:[%s240 + $0x3a0] sm:$0xf] %vm4152, %v3872
        %4386 = vst.msk [vmem:[%s240 + $0x3a4] sm:$0xf] %vm4152, %v3873
        %4387 = vst.msk [vmem:[%s240 + $0x3a8] sm:$0xf] %vm4152, %v3874
        %4388 = vst.msk [vmem:[%s240 + $0x3ac] sm:$0xf] %vm4152, %v3875
        %4389 = vst.msk [vmem:[%s240 + $0x3b0] sm:$0xf] %vm4152, %v3876
        %4390 = vst.msk [vmem:[%s240 + $0x3b4] sm:$0xf] %vm4152, %v3877
        %4391 = vst.msk [vmem:[%s240 + $0x3b8] sm:$0xf] %vm4152, %v3878
        %4392 = vst.msk [vmem:[%s240 + $0x3bc] sm:$0xf] %vm4152, %v3879
        %4393 = vst.msk [vmem:[%s240 + $0x3c0] sm:$0xf] %vm4152, %v3880
        %4394 = vst.msk [vmem:[%s240 + $0x3c4] sm:$0xf] %vm4152, %v3881
        %4395 = vst.msk [vmem:[%s240 + $0x3c8] sm:$0xf] %vm4152, %v3882
        %4396 = vst.msk [vmem:[%s240 + $0x3cc] sm:$0xf] %vm4152, %v3883
        %4397 = vst.msk [vmem:[%s240 + $0x3d0] sm:$0xf] %vm4152, %v3884
        %4398 = vst.msk [vmem:[%s240 + $0x3d4] sm:$0xf] %vm4152, %v3885
        %4399 = vst.msk [vmem:[%s240 + $0x3d8] sm:$0xf] %vm4152, %v3886
        %4400 = vst.msk [vmem:[%s240 + $0x3dc] sm:$0xf] %vm4152, %v3887
        %4401 = vst.msk [vmem:[%s240 + $0x3e0] sm:$0xf] %vm4152, %v3888
        %4402 = vst.msk [vmem:[%s240 + $0x3e4] sm:$0xf] %vm4152, %v3889
        %4403 = vst.msk [vmem:[%s240 + $0x3e8] sm:$0xf] %vm4152, %v3890
        %4404 = vst.msk [vmem:[%s240 + $0x3ec] sm:$0xf] %vm4152, %v3891
        %4405 = vst.msk [vmem:[%s240 + $0x3f0] sm:$0xf] %vm4152, %v3892
        %4406 = vst.msk [vmem:[%s240 + $0x3f4] sm:$0xf] %vm4152, %v3893
        %4407 = vst.msk [vmem:[%s240 + $0x3f8] sm:$0xf] %vm4152, %v3894
        %4408 = vst.msk [vmem:[%s240 + $0x3fc] sm:$0xf] %vm4152, %v3895
        %s4409 = sand.u32 %s144, 1
        %s4410 = scalar_lea.sflag [#allocation3], %s4409
        %s4411 = sand.u32 %s144, 1
        %s4412 = smul.addr %s4411, 1024
        %s4413 = scalar_lea.vmem [#allocation2], %s4412
        // Predicated region
        $region37: #{_conv3d_jit.1} parent=35 // pred_check
          %p4414 = pneg %p154
        $region38: #{_conv3d_jit.1} parent=35 // pred_check_branch
          %4416 = sbr.rel (%p4414) target = $region40
        $region39: #{_conv3d_jit.1} parent=35 // pred_region
          %s4417 = smul.u32 256, %s22
          %s4419 = ssub.s32 16384, 16384
          %4420 = vsyncadd %s4410, %s4419
          %s4421 = sadd.s32 %s23, %s4417
          %s4422 = smul.addr %s4421, 64
          %s4423 = scalar_lea.hbm %s4, %s4422
          %s4424 = sshll.u32 %s4413, 4
          %s4425 = int_to_ptr.vmem [resolvable:$true] %s4424
          %4430 = dma.vmem_to_hbm [thread:$0]  %s4425, 16384, %s4423, %s4410, 64, 64, 4
        $region40: #{_conv3d_jit.1} parent=35 // pred_fallthru
          _
      $region36: #{_conv3d_jit.1} parent=5 // pred_fallthru
        _
      %p4431 = scmp.le.s32.totalorder 2, %s13
      // Predicated region
      $region41: #{_conv3d_jit.1} parent=5 // pred_check
        %p4432 = pneg %p4431
      $region42: #{_conv3d_jit.1} parent=5 // pred_check_branch
        %4434 = sbr.rel (%p4432) target = $region44
      $region43: #{_conv3d_jit.1} parent=5 // pred_region
        %s4435 = ssub.s32 %s13, 2
        // Predicated region
        $region45: #{_conv3d_jit.1} parent=43 // pred_check
          %p4436 = pneg %p160
        $region46: #{_conv3d_jit.1} parent=43 // pred_check_branch
          %4438 = sbr.rel (%p4436) target = $region48
        $region47: #{_conv3d_jit.1} parent=43 // pred_region
          %s4439 = sand.u32 %s145, 1
          %s4440 = scalar_lea.sflag [#allocation3], %s4439
          %s4441 = sand.u32 %s145, 1
          %s4442 = smul.addr %s4441, 1024
          %s4443 = scalar_lea.vmem [#allocation2], %s4442
          %4444 = dma.done %s4440, 16384
        $region48: #{_conv3d_jit.1} parent=43 // pred_fallthru
          _
      $region44: #{_conv3d_jit.1} parent=5 // pred_fallthru
        _
    $region6: #{_conv3d_jit.1} parent=1 // loop_footer
      %s17 = sadd.s32 1, %s13
    $region7: #{_conv3d_jit.1} parent=1 // loop_footer_branch
      %12 = sbr.rel target = $region3
    $region8: #{_conv3d_jit.1} parent=1 // loop_exit
      _
    %4445 = vsyncpa [#allocation3], 1
    %s4446 = scalar_lea.sflag [#allocation3], 1
    %4447 = vsyncpa %s4446, 1

</llo_original>
